<compile_context>
chip_gen: v7x
topology: tpu7x:2x2x1
jax: 0.10.0
libtpu: 0.0.40
codegen_flags: <defaults>
</compile_context>

<pallas_src>
import functools
import numpy as np

import jax
import jax.numpy as jnp
from jax.experimental import pallas as pl
from jax.experimental.pallas import tpu as pltpu


# ----------------------------- model config (small) -----------------------------
STATE_DIM = 12
ACTION_DIM = 6
HIDDEN_DIM = 32
TIME_EMB_DIM = 32
NUM_BLOCKS = 3
BATCH = 8

PAD = 128  # every feature dim is zero-padded to 128 lanes


def _silu(x):
    return x * jax.nn.sigmoid(x)


# ----------------------------- fused Pallas kernel -----------------------------
def _fused_unet_kernel(act_ref, w_ref, b_ref, o_ref, *, struct):
    """Entire DiffusionUNet forward.

    act_ref: [3, M, 128] f32   (rows: x, sinusoidal(t), states)
    w_ref:   [128, NSLOT*128] bf16  (all Linear weights, column-stacked)
    b_ref:   [1,   NSLOT*128] f32   (all biases, same column layout)
    o_ref:   [M, 128] f32
    Column offsets (static Python ints) come in via `struct`.
    """

    def dot_w(h, c0, width):
        # bf16 x bf16 MXU matmul with f32 accumulation.
        return jnp.dot(h.astype(jnp.bfloat16), w_ref[:, c0:c0 + width],
                       preferred_element_type=jnp.float32)

    def lin(h, c0, width=PAD):
        return dot_w(h, c0, width) + b_ref[:, c0:c0 + width]

    x = act_ref[0]
    t_sin = act_ref[1]
    s = act_ref[2]

    # ---- time_mlp: Linear -> SiLU -> Linear;  SiLU(t_emb) hoisted once ----
    t_emb = lin(_silu(lin(t_sin, struct["c_time1"])), struct["c_time2"])
    t_silu = _silu(t_emb)
    # all 7 per-block timestep projections in ONE wide matmul (off the serial chain)
    n_blocks = struct["n_blocks"]
    t_proj = lin(t_silu, struct["c_wt"], n_blocks * PAD)          # [M, 7*128]

    # ---- state_encoder: Linear -> SiLU -> Linear -> SiLU ----
    s_emb = _silu(lin(_silu(lin(s, struct["c_state1"])), struct["c_state2"]))

    # ---- input_proj ----
    h = lin(x, struct["c_inproj"])

    def finish_block(z, sc, t_i, c_w2):
        hh = _silu(z)                                             # Dropout = identity
        hh = hh + t_proj[:, t_i * PAD:(t_i + 1) * PAD]
        hh = _silu(lin(hh, c_w2))                                 # Dropout = identity
        return hh + sc

    blocks = struct["blocks"]
    n_enc = struct["n_enc"]
    enc_outs = []
    t_i = 0

    # ---- encoder blocks + mid block (plain input) ----
    for bi in range(n_enc + 1):
        meta = blocks[bi]
        if meta["has_sc"]:
            # one [M,128]x[128,256] dot -> columns [0:128]=block1 pre-act, [128:256]=shortcut
            zsc = lin(h, meta["c_in"], 2 * PAD)
            z, sc = zsc[:, :PAD], zsc[:, PAD:]
        else:
            z, sc = lin(h, meta["c_in"]), h                       # identity shortcut
        h = finish_block(z, sc, t_i, meta["c_w2"])
        if bi < n_enc:
            enc_outs.append(h)
        t_i += 1

    # ---- decoder blocks: concat eliminated by row-split, fused to 2 wide dots ----
    for di in range(n_enc):
        meta = blocks[n_enc + 1 + di]
        skip = enc_outs[n_enc - 1 - di]
        zsc = (dot_w(h, meta["c_in_a"], 2 * PAD)
               + dot_w(skip, meta["c_in_b"], 2 * PAD)
               + b_ref[:, meta["c_in_a"]:meta["c_in_a"] + 2 * PAD])
        z, sc = zsc[:, :PAD], zsc[:, PAD:]
        h = finish_block(z, sc, t_i, meta["c_w2"])
        t_i += 1

    # ---- output_proj: Linear(cat(h, s_emb)) -> SiLU -> Linear (concat via row-split) ----
    z = (dot_w(h, struct["c_out_a"], PAD)
         + dot_w(s_emb, struct["c_out_b"], PAD)
         + b_ref[:, struct["c_out_a"]:struct["c_out_a"] + PAD])
    o_ref[...] = lin(_silu(z), struct["c_out2"])


# ----------------------------- parameter packing (pad + column-stack) -----------------------------
def pack_params(params):
    """Zero-pad every Linear to 128x128 / 128, column-stack all weights into one
    [128, NSLOT*128] bf16 slab (and biases into a matching [1, NSLOT*128] f32 row),
    in the exact order/layout consumed by the kernel."""
    wslots, bslots = [], []

    def new_slot(w=None, b=None):
        W = jnp.zeros((PAD, PAD), jnp.float32)
        if w is not None:
            w = jnp.asarray(w, jnp.float32)
            assert w.shape[0] <= PAD and w.shape[1] <= PAD
            W = W.at[: w.shape[0], : w.shape[1]].set(w)
        Bv = jnp.zeros((PAD,), jnp.float32)
        if b is not None:
            b = jnp.asarray(b, jnp.float32)
            Bv = Bv.at[: b.shape[0]].set(b)
        off = len(wslots) * PAD
        wslots.append(W)
        bslots.append(Bv)
        return off

    struct = {}
    struct["c_time1"] = new_slot(*params["time_mlp"][0])
    struct["c_time2"] = new_slot(*params["time_mlp"][1])

    # all 7 residual-block timestep-branch weights, contiguous -> one wide matmul
    blocks_list = (list(params["encoder_blocks"]) + [params["mid_block"]]
                   + list(params["decoder_blocks"]))
    struct["c_wt"] = new_slot(blocks_list[0]["wt"], blocks_list[0]["bt"])
    for blk in blocks_list[1:]:
        new_slot(blk["wt"], blk["bt"])
    struct["n_blocks"] = len(blocks_list)

    struct["c_state1"] = new_slot(*params["state_encoder"][0])
    struct["c_state2"] = new_slot(*params["state_encoder"][1])
    struct["c_inproj"] = new_slot(*params["input_proj"])

    nb = len(params["encoder_blocks"])
    struct["n_enc"] = nb
    block_meta = []

    # encoder + mid blocks: plain input; fuse [w1 | ws] column-wise when ws exists
    for blk in list(params["encoder_blocks"]) + [params["mid_block"]]:
        has_sc = "ws" in blk
        c1 = new_slot(blk["w1"], blk["b1"])
        if has_sc:
            new_slot(blk["ws"], blk["bs"])            # -> contiguous [w1 | ws] wide RHS
        c2 = new_slot(blk["w2"], blk["b2"])
        block_meta.append(dict(has_sc=has_sc, c_in=c1, c_w2=c2))

    # decoder blocks: cat(h, skip) @ W == h @ W_top + skip @ W_bot; fuse (w1, ws) column-wise
    for i, blk in enumerate(params["decoder_blocks"]):
        # Identity shortcut on a concatenated input is incompatible with the row-split
        # trick; this architecture always has in_ch != out_ch for decoder blocks.
        assert "ws" in blk, "decoder block without Linear shortcut is unsupported"
        skip_ch = params["encoder_blocks"][nb - 1 - i]["w1"].shape[1]
        split = blk["w1"].shape[0] - skip_ch
        ca = new_slot(blk["w1"][:split], blk["b1"])   # biases live on the 'a' columns
        new_slot(blk["ws"][:split], blk["bs"])
        cb = new_slot(blk["w1"][split:])              # 'b' columns: zero biases
        new_slot(blk["ws"][split:])
        c2 = new_slot(blk["w2"], blk["b2"])
        block_meta.append(dict(c_in_a=ca, c_in_b=cb, c_w2=c2))

    struct["blocks"] = tuple(block_meta)

    # output_proj: Linear(cat(h, s_emb)) row-split, then final Linear
    w0, b0 = params["output_proj"][0]
    s_emb_dim = params["state_encoder"][1][0].shape[1]
    split = w0.shape[0] - s_emb_dim
    struct["c_out_a"] = new_slot(w0[:split], b0)
    struct["c_out_b"] = new_slot(w0[split:])
    struct["c_out2"] = new_slot(*params["output_proj"][1])

    W_all = jnp.concatenate(wslots, axis=1).astype(jnp.bfloat16)   # [128, NSLOT*128]
    B_all = jnp.concatenate(bslots)[None, :].astype(jnp.float32)   # [1,   NSLOT*128]
    return W_all, B_all, struct


# ----------------------------- forward-pass builder -----------------------------
def sinusoidal_emb(t, dim):
    half = dim // 2
    scale = np.log(10000.0) / (half - 1)
    freqs = jnp.exp(jnp.arange(half, dtype=jnp.float32) * -scale)
    args = t.astype(jnp.float32)[:, None] * freqs[None, :]
    return jnp.concatenate([jnp.sin(args), jnp.cos(args)], axis=-1)


def build_forward(params):
    W_all, B_all, struct = pack_params(params)
    kern = functools.partial(_fused_unet_kernel, struct=struct)

    @jax.jit
    def forward(w_all, b_all, x, timesteps, states):
        batch = x.shape[0]
        mp = max(8, ((batch + 7) // 8) * 8)           # sublane-friendly row count
        t_sin = sinusoidal_emb(timesteps, TIME_EMB_DIM)

        # pack the three (padded) activation inputs into ONE array -> one prologue DMA
        acts = jnp.zeros((3, mp, PAD), jnp.float32)
        acts = acts.at[0, :batch, : x.shape[1]].set(x.astype(jnp.float32))
        acts = acts.at[1, :batch, : t_sin.shape[1]].set(t_sin)
        acts = acts.at[2, :batch, : states.shape[1]].set(states.astype(jnp.float32))

        out = pl.pallas_call(
            kern,
            out_shape=jax.ShapeDtypeStruct((mp, PAD), jnp.float32),
            in_specs=[pl.BlockSpec(memory_space=pltpu.MemorySpace.VMEM)] * 3,
            out_specs=pl.BlockSpec(memory_space=pltpu.MemorySpace.VMEM),
        )(acts, w_all, b_all)
        return out[:batch, :ACTION_DIM]

    return functools.partial(forward, W_all, B_all)


# ----------------------------- parameter init (deterministic) -----------------------------
def init_linear(key, fan_in, fan_out):
    k1, k2 = jax.random.split(key)
    bound = 1.0 / np.sqrt(fan_in)
    w = jax.random.uniform(k1, (fan_in, fan_out), jnp.float32, -bound, bound)
    b = jax.random.uniform(k2, (fan_out,), jnp.float32, -bound, bound)
    return w, b


def init_resblock(key, in_ch, out_ch, time_dim):
    keys = jax.random.split(key, 4)
    blk = {}
    blk["w1"], blk["b1"] = init_linear(keys[0], in_ch, out_ch)
    blk["wt"], blk["bt"] = init_linear(keys[1], time_dim, out_ch)
    blk["w2"], blk["b2"] = init_linear(keys[2], out_ch, out_ch)
    if in_ch != out_ch:
        blk["ws"], blk["bs"] = init_linear(keys[3], in_ch, out_ch)
    return blk


def init_params(key):
    p = {}
    keys = jax.random.split(key, 16)
    ki = iter(keys)
    p["time_mlp"] = [
        init_linear(next(ki), TIME_EMB_DIM, TIME_EMB_DIM * 4),
        init_linear(next(ki), TIME_EMB_DIM * 4, TIME_EMB_DIM),
    ]
    p["state_encoder"] = [
        init_linear(next(ki), STATE_DIM, HIDDEN_DIM),
        init_linear(next(ki), HIDDEN_DIM, HIDDEN_DIM),
    ]
    p["input_proj"] = init_linear(next(ki), ACTION_DIM, HIDDEN_DIM)
    p["encoder_blocks"] = []
    for i in range(NUM_BLOCKS):
        in_ch = HIDDEN_DIM if i == 0 else HIDDEN_DIM * 2 ** (i - 1)
        out_ch = HIDDEN_DIM * 2 ** i
        p["encoder_blocks"].append(init_resblock(next(ki), in_ch, out_ch, TIME_EMB_DIM))
    mid_dim = HIDDEN_DIM * 2 ** (NUM_BLOCKS - 1)
    p["mid_block"] = init_resblock(next(ki), mid_dim, mid_dim, TIME_EMB_DIM)
    p["decoder_blocks"] = []
    for i in range(NUM_BLOCKS):
        in_ch = mid_dim // 2 ** i + HIDDEN_DIM * 2 ** (NUM_BLOCKS - 1 - i)
        out_ch = mid_dim // 2 ** (i + 1) if i < NUM_BLOCKS - 1 else HIDDEN_DIM
        p["decoder_blocks"].append(init_resblock(next(ki), in_ch, out_ch, TIME_EMB_DIM))
    p["output_proj"] = [
        init_linear(next(ki), HIDDEN_DIM * 2, HIDDEN_DIM),
        init_linear(next(ki), HIDDEN_DIM, ACTION_DIM),
    ]
    return p


# ----------------------------- pure-JAX reference (for correctness check) -----------------------------
def _ref_linear(x, wb):
    w, b = wb
    return x @ w + b


def _ref_resblock(x, t, blk):
    h = _silu(x @ blk["w1"] + blk["b1"])
    h = h + (_silu(t) @ blk["wt"] + blk["bt"])
    h = _silu(h @ blk["w2"] + blk["b2"])
    sc = x @ blk["ws"] + blk["bs"] if "ws" in blk else x
    return h + sc


def reference_forward(params, x, timesteps, states):
    t_sin = sinusoidal_emb(timesteps, TIME_EMB_DIM)
    t_emb = _ref_linear(_silu(_ref_linear(t_sin, params["time_mlp"][0])), params["time_mlp"][1])
    s_emb = _silu(_ref_linear(_silu(_ref_linear(states, params["state_encoder"][0])),
                              params["state_encoder"][1]))
    h = _ref_linear(x, params["input_proj"])
    enc = []
    for blk in params["encoder_blocks"]:
        h = _ref_resblock(h, t_emb, blk)
        enc.append(h)
    h = _ref_resblock(h, t_emb, params["mid_block"])
    for i, blk in enumerate(params["decoder_blocks"]):
        if i < len(enc):
            h = jnp.concatenate([h, enc[-(i + 1)]], axis=-1)
        h = _ref_resblock(h, t_emb, blk)
    h = jnp.concatenate([h, s_emb], axis=-1)
    return _ref_linear(_silu(_ref_linear(h, params["output_proj"][0])), params["output_proj"][1])


# ----------------------------- main -----------------------------
if __name__ == "__main__":
    key = jax.random.PRNGKey(0)
    kp, kx, kt, ks = jax.random.split(key, 4)

    params = init_params(kp)
    x = jax.random.normal(kx, (BATCH, ACTION_DIM), jnp.float32)          # noisy actions
    timesteps = jax.random.randint(kt, (BATCH,), 0, 1000)                # diffusion timesteps
    states = jax.random.normal(ks, (BATCH, STATE_DIM), jnp.float32)      # conditional states

    forward = build_forward(params)
    out = jax.block_until_ready(forward(x, timesteps, states))

    ref = reference_forward(params, x, timesteps, states)
    assert out.shape == (BATCH, ACTION_DIM)
    # bf16 weights/activations in the dots -> relaxed tolerance vs the f32 reference.
    assert jnp.allclose(out, ref, atol=5e-2, rtol=5e-2), "Pallas output mismatch vs reference"

    print("KERNEL_OK")
</pallas_src>

<mosaic_0001>
module attributes {stable_mosaic.version = 11 : i64} {
  func.func @_fused_unet_kernel(%arg0: memref<3x8x128xf32, #tpu.memory_space<vmem>>, %arg1: memref<128x5120xbf16, #tpu.memory_space<vmem>>, %arg2: memref<1x5120xf32, #tpu.memory_space<vmem>>, %arg3: memref<8x128xf32, #tpu.memory_space<vmem>>) attributes {dimension_semantics = [], scalar_prefetch = 0 : i64, scratch_operands = 0 : i64, tpu.core_type = #tpu.core_type<tc>} {
    %c0 = arith.constant 0 : index
    %c0_0 = arith.constant 0 : index
    %c0_1 = arith.constant 0 : index
    %0 = vector.load %arg0[%c0, %c0_0, %c0_1] : memref<3x8x128xf32, #tpu.memory_space<vmem>>, vector<1x8x128xf32>
    %1 = vector.shape_cast %0 : vector<1x8x128xf32> to vector<8x128xf32>
    %c1 = arith.constant 1 : index
    %c0_2 = arith.constant 0 : index
    %c0_3 = arith.constant 0 : index
    %2 = vector.load %arg0[%c1, %c0_2, %c0_3] : memref<3x8x128xf32, #tpu.memory_space<vmem>>, vector<1x8x128xf32>
    %3 = vector.shape_cast %2 : vector<1x8x128xf32> to vector<8x128xf32>
    %c2 = arith.constant 2 : index
    %c0_4 = arith.constant 0 : index
    %c0_5 = arith.constant 0 : index
    %4 = vector.load %arg0[%c2, %c0_4, %c0_5] : memref<3x8x128xf32, #tpu.memory_space<vmem>>, vector<1x8x128xf32>
    %5 = vector.shape_cast %4 : vector<1x8x128xf32> to vector<8x128xf32>
    %6 = arith.truncf %3 : vector<8x128xf32> to vector<8x128xbf16>
    %c0_6 = arith.constant 0 : index
    %c0_7 = arith.constant 0 : index
    %7 = vector.load %arg1[%c0_6, %c0_7] : memref<128x5120xbf16, #tpu.memory_space<vmem>>, vector<128x128xbf16>
    %cst = arith.constant dense<0.000000e+00> : vector<8x128xf32>
    %8 = tpu.matmul %6, %7, %cst {dimension_numbers = #tpu.dot_dimension_numbers<[1], [0], [0], [1], [0, 0, 1, 1], [], []>} : vector<8x128xbf16>, vector<128x128xbf16>, vector<8x128xf32> -> vector<8x128xf32>
    %c0_8 = arith.constant 0 : index
    %c0_9 = arith.constant 0 : index
    %9 = vector.load %arg2[%c0_8, %c0_9] : memref<1x5120xf32, #tpu.memory_space<vmem>>, vector<1x128xf32>
    %10 = vector.broadcast %9 : vector<1x128xf32> to vector<8x128xf32>
    %11 = arith.addf %8, %10 : vector<8x128xf32>
    %12 = arith.negf %11 : vector<8x128xf32>
    %13 = math.exp %12 : vector<8x128xf32>
    %cst_10 = arith.constant 1.000000e+00 : f32
    %14 = vector.broadcast %cst_10 : f32 to vector<8x128xf32>
    %15 = arith.addf %14, %13 : vector<8x128xf32>
    %16 = arith.divf %14, %15 : vector<8x128xf32>
    %17 = arith.mulf %11, %16 : vector<8x128xf32>
    %18 = arith.truncf %17 : vector<8x128xf32> to vector<8x128xbf16>
    %c0_11 = arith.constant 0 : index
    %c128 = arith.constant 128 : index
    %19 = vector.load %arg1[%c0_11, %c128] : memref<128x5120xbf16, #tpu.memory_space<vmem>>, vector<128x128xbf16>
    %cst_12 = arith.constant dense<0.000000e+00> : vector<8x128xf32>
    %20 = tpu.matmul %18, %19, %cst_12 {dimension_numbers = #tpu.dot_dimension_numbers<[1], [0], [0], [1], [0, 0, 1, 1], [], []>} : vector<8x128xbf16>, vector<128x128xbf16>, vector<8x128xf32> -> vector<8x128xf32>
    %c0_13 = arith.constant 0 : index
    %c128_14 = arith.constant 128 : index
    %21 = vector.load %arg2[%c0_13, %c128_14] : memref<1x5120xf32, #tpu.memory_space<vmem>>, vector<1x128xf32>
    %22 = vector.broadcast %21 : vector<1x128xf32> to vector<8x128xf32>
    %23 = arith.addf %20, %22 : vector<8x128xf32>
    %24 = arith.negf %23 : vector<8x128xf32>
    %25 = math.exp %24 : vector<8x128xf32>
    %cst_15 = arith.constant 1.000000e+00 : f32
    %26 = vector.broadcast %cst_15 : f32 to vector<8x128xf32>
    %27 = arith.addf %26, %25 : vector<8x128xf32>
    %28 = arith.divf %26, %27 : vector<8x128xf32>
    %29 = arith.mulf %23, %28 : vector<8x128xf32>
    %30 = arith.truncf %29 : vector<8x128xf32> to vector<8x128xbf16>
    %c0_16 = arith.constant 0 : index
    %c256 = arith.constant 256 : index
    %31 = vector.load %arg1[%c0_16, %c256] : memref<128x5120xbf16, #tpu.memory_space<vmem>>, vector<128x896xbf16>
    %cst_17 = arith.constant dense<0.000000e+00> : vector<8x896xf32>
    %32 = tpu.matmul %30, %31, %cst_17 {dimension_numbers = #tpu.dot_dimension_numbers<[1], [0], [0], [1], [0, 0, 1, 1], [], []>} : vector<8x128xbf16>, vector<128x896xbf16>, vector<8x896xf32> -> vector<8x896xf32>
    %c0_18 = arith.constant 0 : index
    %c256_19 = arith.constant 256 : index
    %33 = vector.load %arg2[%c0_18, %c256_19] : memref<1x5120xf32, #tpu.memory_space<vmem>>, vector<1x896xf32>
    %34 = vector.broadcast %33 : vector<1x896xf32> to vector<8x896xf32>
    %35 = arith.addf %32, %34 : vector<8x896xf32>
    %36 = arith.truncf %5 : vector<8x128xf32> to vector<8x128xbf16>
    %c0_20 = arith.constant 0 : index
    %c1152 = arith.constant 1152 : index
    %37 = vector.load %arg1[%c0_20, %c1152] : memref<128x5120xbf16, #tpu.memory_space<vmem>>, vector<128x128xbf16>
    %cst_21 = arith.constant dense<0.000000e+00> : vector<8x128xf32>
    %38 = tpu.matmul %36, %37, %cst_21 {dimension_numbers = #tpu.dot_dimension_numbers<[1], [0], [0], [1], [0, 0, 1, 1], [], []>} : vector<8x128xbf16>, vector<128x128xbf16>, vector<8x128xf32> -> vector<8x128xf32>
    %c0_22 = arith.constant 0 : index
    %c1152_23 = arith.constant 1152 : index
    %39 = vector.load %arg2[%c0_22, %c1152_23] : memref<1x5120xf32, #tpu.memory_space<vmem>>, vector<1x128xf32>
    %40 = vector.broadcast %39 : vector<1x128xf32> to vector<8x128xf32>
    %41 = arith.addf %38, %40 : vector<8x128xf32>
    %42 = arith.negf %41 : vector<8x128xf32>
    %43 = math.exp %42 : vector<8x128xf32>
    %cst_24 = arith.constant 1.000000e+00 : f32
    %44 = vector.broadcast %cst_24 : f32 to vector<8x128xf32>
    %45 = arith.addf %44, %43 : vector<8x128xf32>
    %46 = arith.divf %44, %45 : vector<8x128xf32>
    %47 = arith.mulf %41, %46 : vector<8x128xf32>
    %48 = arith.truncf %47 : vector<8x128xf32> to vector<8x128xbf16>
    %c0_25 = arith.constant 0 : index
    %c1280 = arith.constant 1280 : index
    %49 = vector.load %arg1[%c0_25, %c1280] : memref<128x5120xbf16, #tpu.memory_space<vmem>>, vector<128x128xbf16>
    %cst_26 = arith.constant dense<0.000000e+00> : vector<8x128xf32>
    %50 = tpu.matmul %48, %49, %cst_26 {dimension_numbers = #tpu.dot_dimension_numbers<[1], [0], [0], [1], [0, 0, 1, 1], [], []>} : vector<8x128xbf16>, vector<128x128xbf16>, vector<8x128xf32> -> vector<8x128xf32>
    %c0_27 = arith.constant 0 : index
    %c1280_28 = arith.constant 1280 : index
    %51 = vector.load %arg2[%c0_27, %c1280_28] : memref<1x5120xf32, #tpu.memory_space<vmem>>, vector<1x128xf32>
    %52 = vector.broadcast %51 : vector<1x128xf32> to vector<8x128xf32>
    %53 = arith.addf %50, %52 : vector<8x128xf32>
    %54 = arith.negf %53 : vector<8x128xf32>
    %55 = math.exp %54 : vector<8x128xf32>
    %cst_29 = arith.constant 1.000000e+00 : f32
    %56 = vector.broadcast %cst_29 : f32 to vector<8x128xf32>
    %57 = arith.addf %56, %55 : vector<8x128xf32>
    %58 = arith.divf %56, %57 : vector<8x128xf32>
    %59 = arith.mulf %53, %58 : vector<8x128xf32>
    %60 = arith.truncf %1 : vector<8x128xf32> to vector<8x128xbf16>
    %c0_30 = arith.constant 0 : index
    %c1408 = arith.constant 1408 : index
    %61 = vector.load %arg1[%c0_30, %c1408] : memref<128x5120xbf16, #tpu.memory_space<vmem>>, vector<128x128xbf16>
    %cst_31 = arith.constant dense<0.000000e+00> : vector<8x128xf32>
    %62 = tpu.matmul %60, %61, %cst_31 {dimension_numbers = #tpu.dot_dimension_numbers<[1], [0], [0], [1], [0, 0, 1, 1], [], []>} : vector<8x128xbf16>, vector<128x128xbf16>, vector<8x128xf32> -> vector<8x128xf32>
    %c0_32 = arith.constant 0 : index
    %c1408_33 = arith.constant 1408 : index
    %63 = vector.load %arg2[%c0_32, %c1408_33] : memref<1x5120xf32, #tpu.memory_space<vmem>>, vector<1x128xf32>
    %64 = vector.broadcast %63 : vector<1x128xf32> to vector<8x128xf32>
    %65 = arith.addf %62, %64 : vector<8x128xf32>
    %66 = arith.truncf %65 : vector<8x128xf32> to vector<8x128xbf16>
    %c0_34 = arith.constant 0 : index
    %c1536 = arith.constant 1536 : index
    %67 = vector.load %arg1[%c0_34, %c1536] : memref<128x5120xbf16, #tpu.memory_space<vmem>>, vector<128x128xbf16>
    %cst_35 = arith.constant dense<0.000000e+00> : vector<8x128xf32>
    %68 = tpu.matmul %66, %67, %cst_35 {dimension_numbers = #tpu.dot_dimension_numbers<[1], [0], [0], [1], [0, 0, 1, 1], [], []>} : vector<8x128xbf16>, vector<128x128xbf16>, vector<8x128xf32> -> vector<8x128xf32>
    %c0_36 = arith.constant 0 : index
    %c1536_37 = arith.constant 1536 : index
    %69 = vector.load %arg2[%c0_36, %c1536_37] : memref<1x5120xf32, #tpu.memory_space<vmem>>, vector<1x128xf32>
    %70 = vector.broadcast %69 : vector<1x128xf32> to vector<8x128xf32>
    %71 = arith.addf %68, %70 : vector<8x128xf32>
    %72 = arith.negf %71 : vector<8x128xf32>
    %73 = math.exp %72 : vector<8x128xf32>
    %cst_38 = arith.constant 1.000000e+00 : f32
    %74 = vector.broadcast %cst_38 : f32 to vector<8x128xf32>
    %75 = arith.addf %74, %73 : vector<8x128xf32>
    %76 = arith.divf %74, %75 : vector<8x128xf32>
    %77 = arith.mulf %71, %76 : vector<8x128xf32>
    %78 = vector.extract_strided_slice %35 {offsets = [0, 0], sizes = [8, 128], strides = [1, 1]} : vector<8x896xf32> to vector<8x128xf32>
    %79 = arith.addf %77, %78 : vector<8x128xf32>
    %80 = arith.truncf %79 : vector<8x128xf32> to vector<8x128xbf16>
    %c0_39 = arith.constant 0 : index
    %c1664 = arith.constant 1664 : index
    %81 = vector.load %arg1[%c0_39, %c1664] : memref<128x5120xbf16, #tpu.memory_space<vmem>>, vector<128x128xbf16>
    %cst_40 = arith.constant dense<0.000000e+00> : vector<8x128xf32>
    %82 = tpu.matmul %80, %81, %cst_40 {dimension_numbers = #tpu.dot_dimension_numbers<[1], [0], [0], [1], [0, 0, 1, 1], [], []>} : vector<8x128xbf16>, vector<128x128xbf16>, vector<8x128xf32> -> vector<8x128xf32>
    %c0_41 = arith.constant 0 : index
    %c1664_42 = arith.constant 1664 : index
    %83 = vector.load %arg2[%c0_41, %c1664_42] : memref<1x5120xf32, #tpu.memory_space<vmem>>, vector<1x128xf32>
    %84 = vector.broadcast %83 : vector<1x128xf32> to vector<8x128xf32>
    %85 = arith.addf %82, %84 : vector<8x128xf32>
    %86 = arith.negf %85 : vector<8x128xf32>
    %87 = math.exp %86 : vector<8x128xf32>
    %cst_43 = arith.constant 1.000000e+00 : f32
    %88 = vector.broadcast %cst_43 : f32 to vector<8x128xf32>
    %89 = arith.addf %88, %87 : vector<8x128xf32>
    %90 = arith.divf %88, %89 : vector<8x128xf32>
    %91 = arith.mulf %85, %90 : vector<8x128xf32>
    %92 = arith.addf %91, %65 : vector<8x128xf32>
    %93 = arith.truncf %92 : vector<8x128xf32> to vector<8x128xbf16>
    %c0_44 = arith.constant 0 : index
    %c1792 = arith.constant 1792 : index
    %94 = vector.load %arg1[%c0_44, %c1792] : memref<128x5120xbf16, #tpu.memory_space<vmem>>, vector<128x256xbf16>
    %cst_45 = arith.constant dense<0.000000e+00> : vector<8x256xf32>
    %95 = tpu.matmul %93, %94, %cst_45 {dimension_numbers = #tpu.dot_dimension_numbers<[1], [0], [0], [1], [0, 0, 1, 1], [], []>} : vector<8x128xbf16>, vector<128x256xbf16>, vector<8x256xf32> -> vector<8x256xf32>
    %c0_46 = arith.constant 0 : index
    %c1792_47 = arith.constant 1792 : index
    %96 = vector.load %arg2[%c0_46, %c1792_47] : memref<1x5120xf32, #tpu.memory_space<vmem>>, vector<1x256xf32>
    %97 = vector.broadcast %96 : vector<1x256xf32> to vector<8x256xf32>
    %98 = arith.addf %95, %97 : vector<8x256xf32>
    %99 = vector.extract_strided_slice %98 {offsets = [0, 0], sizes = [8, 128], strides = [1, 1]} : vector<8x256xf32> to vector<8x128xf32>
    %100 = vector.extract_strided_slice %98 {offsets = [0, 128], sizes = [8, 128], strides = [1, 1]} : vector<8x256xf32> to vector<8x128xf32>
    %101 = arith.negf %99 : vector<8x128xf32>
    %102 = math.exp %101 : vector<8x128xf32>
    %cst_48 = arith.constant 1.000000e+00 : f32
    %103 = vector.broadcast %cst_48 : f32 to vector<8x128xf32>
    %104 = arith.addf %103, %102 : vector<8x128xf32>
    %105 = arith.divf %103, %104 : vector<8x128xf32>
    %106 = arith.mulf %99, %105 : vector<8x128xf32>
    %107 = vector.extract_strided_slice %35 {offsets = [0, 128], sizes = [8, 128], strides = [1, 1]} : vector<8x896xf32> to vector<8x128xf32>
    %108 = arith.addf %106, %107 : vector<8x128xf32>
    %109 = arith.truncf %108 : vector<8x128xf32> to vector<8x128xbf16>
    %c0_49 = arith.constant 0 : index
    %c2048 = arith.constant 2048 : index
    %110 = vector.load %arg1[%c0_49, %c2048] : memref<128x5120xbf16, #tpu.memory_space<vmem>>, vector<128x128xbf16>
    %cst_50 = arith.constant dense<0.000000e+00> : vector<8x128xf32>
    %111 = tpu.matmul %109, %110, %cst_50 {dimension_numbers = #tpu.dot_dimension_numbers<[1], [0], [0], [1], [0, 0, 1, 1], [], []>} : vector<8x128xbf16>, vector<128x128xbf16>, vector<8x128xf32> -> vector<8x128xf32>
    %c0_51 = arith.constant 0 : index
    %c2048_52 = arith.constant 2048 : index
    %112 = vector.load %arg2[%c0_51, %c2048_52] : memref<1x5120xf32, #tpu.memory_space<vmem>>, vector<1x128xf32>
    %113 = vector.broadcast %112 : vector<1x128xf32> to vector<8x128xf32>
    %114 = arith.addf %111, %113 : vector<8x128xf32>
    %115 = arith.negf %114 : vector<8x128xf32>
    %116 = math.exp %115 : vector<8x128xf32>
    %cst_53 = arith.constant 1.000000e+00 : f32
    %117 = vector.broadcast %cst_53 : f32 to vector<8x128xf32>
    %118 = arith.addf %117, %116 : vector<8x128xf32>
    %119 = arith.divf %117, %118 : vector<8x128xf32>
    %120 = arith.mulf %114, %119 : vector<8x128xf32>
    %121 = arith.addf %120, %100 : vector<8x128xf32>
    %122 = arith.truncf %121 : vector<8x128xf32> to vector<8x128xbf16>
    %c0_54 = arith.constant 0 : index
    %c2176 = arith.constant 2176 : index
    %123 = vector.load %arg1[%c0_54, %c2176] : memref<128x5120xbf16, #tpu.memory_space<vmem>>, vector<128x256xbf16>
    %cst_55 = arith.constant dense<0.000000e+00> : vector<8x256xf32>
    %124 = tpu.matmul %122, %123, %cst_55 {dimension_numbers = #tpu.dot_dimension_numbers<[1], [0], [0], [1], [0, 0, 1, 1], [], []>} : vector<8x128xbf16>, vector<128x256xbf16>, vector<8x256xf32> -> vector<8x256xf32>
    %c0_56 = arith.constant 0 : index
    %c2176_57 = arith.constant 2176 : index
    %125 = vector.load %arg2[%c0_56, %c2176_57] : memref<1x5120xf32, #tpu.memory_space<vmem>>, vector<1x256xf32>
    %126 = vector.broadcast %125 : vector<1x256xf32> to vector<8x256xf32>
    %127 = arith.addf %124, %126 : vector<8x256xf32>
    %128 = vector.extract_strided_slice %127 {offsets = [0, 0], sizes = [8, 128], strides = [1, 1]} : vector<8x256xf32> to vector<8x128xf32>
    %129 = vector.extract_strided_slice %127 {offsets = [0, 128], sizes = [8, 128], strides = [1, 1]} : vector<8x256xf32> to vector<8x128xf32>
    %130 = arith.negf %128 : vector<8x128xf32>
    %131 = math.exp %130 : vector<8x128xf32>
    %cst_58 = arith.constant 1.000000e+00 : f32
    %132 = vector.broadcast %cst_58 : f32 to vector<8x128xf32>
    %133 = arith.addf %132, %131 : vector<8x128xf32>
    %134 = arith.divf %132, %133 : vector<8x128xf32>
    %135 = arith.mulf %128, %134 : vector<8x128xf32>
    %136 = vector.extract_strided_slice %35 {offsets = [0, 256], sizes = [8, 128], strides = [1, 1]} : vector<8x896xf32> to vector<8x128xf32>
    %137 = arith.addf %135, %136 : vector<8x128xf32>
    %138 = arith.truncf %137 : vector<8x128xf32> to vector<8x128xbf16>
    %c0_59 = arith.constant 0 : index
    %c2432 = arith.constant 2432 : index
    %139 = vector.load %arg1[%c0_59, %c2432] : memref<128x5120xbf16, #tpu.memory_space<vmem>>, vector<128x128xbf16>
    %cst_60 = arith.constant dense<0.000000e+00> : vector<8x128xf32>
    %140 = tpu.matmul %138, %139, %cst_60 {dimension_numbers = #tpu.dot_dimension_numbers<[1], [0], [0], [1], [0, 0, 1, 1], [], []>} : vector<8x128xbf16>, vector<128x128xbf16>, vector<8x128xf32> -> vector<8x128xf32>
    %c0_61 = arith.constant 0 : index
    %c2432_62 = arith.constant 2432 : index
    %141 = vector.load %arg2[%c0_61, %c2432_62] : memref<1x5120xf32, #tpu.memory_space<vmem>>, vector<1x128xf32>
    %142 = vector.broadcast %141 : vector<1x128xf32> to vector<8x128xf32>
    %143 = arith.addf %140, %142 : vector<8x128xf32>
    %144 = arith.negf %143 : vector<8x128xf32>
    %145 = math.exp %144 : vector<8x128xf32>
    %cst_63 = arith.constant 1.000000e+00 : f32
    %146 = vector.broadcast %cst_63 : f32 to vector<8x128xf32>
    %147 = arith.addf %146, %145 : vector<8x128xf32>
    %148 = arith.divf %146, %147 : vector<8x128xf32>
    %149 = arith.mulf %143, %148 : vector<8x128xf32>
    %150 = arith.addf %149, %129 : vector<8x128xf32>
    %151 = arith.truncf %150 : vector<8x128xf32> to vector<8x128xbf16>
    %c0_64 = arith.constant 0 : index
    %c2560 = arith.constant 2560 : index
    %152 = vector.load %arg1[%c0_64, %c2560] : memref<128x5120xbf16, #tpu.memory_space<vmem>>, vector<128x128xbf16>
    %cst_65 = arith.constant dense<0.000000e+00> : vector<8x128xf32>
    %153 = tpu.matmul %151, %152, %cst_65 {dimension_numbers = #tpu.dot_dimension_numbers<[1], [0], [0], [1], [0, 0, 1, 1], [], []>} : vector<8x128xbf16>, vector<128x128xbf16>, vector<8x128xf32> -> vector<8x128xf32>
    %c0_66 = arith.constant 0 : index
    %c2560_67 = arith.constant 2560 : index
    %154 = vector.load %arg2[%c0_66, %c2560_67] : memref<1x5120xf32, #tpu.memory_space<vmem>>, vector<1x128xf32>
    %155 = vector.broadcast %154 : vector<1x128xf32> to vector<8x128xf32>
    %156 = arith.addf %153, %155 : vector<8x128xf32>
    %157 = arith.negf %156 : vector<8x128xf32>
    %158 = math.exp %157 : vector<8x128xf32>
    %cst_68 = arith.constant 1.000000e+00 : f32
    %159 = vector.broadcast %cst_68 : f32 to vector<8x128xf32>
    %160 = arith.addf %159, %158 : vector<8x128xf32>
    %161 = arith.divf %159, %160 : vector<8x128xf32>
    %162 = arith.mulf %156, %161 : vector<8x128xf32>
    %163 = vector.extract_strided_slice %35 {offsets = [0, 384], sizes = [8, 128], strides = [1, 1]} : vector<8x896xf32> to vector<8x128xf32>
    %164 = arith.addf %162, %163 : vector<8x128xf32>
    %165 = arith.truncf %164 : vector<8x128xf32> to vector<8x128xbf16>
    %c0_69 = arith.constant 0 : index
    %c2688 = arith.constant 2688 : index
    %166 = vector.load %arg1[%c0_69, %c2688] : memref<128x5120xbf16, #tpu.memory_space<vmem>>, vector<128x128xbf16>
    %cst_70 = arith.constant dense<0.000000e+00> : vector<8x128xf32>
    %167 = tpu.matmul %165, %166, %cst_70 {dimension_numbers = #tpu.dot_dimension_numbers<[1], [0], [0], [1], [0, 0, 1, 1], [], []>} : vector<8x128xbf16>, vector<128x128xbf16>, vector<8x128xf32> -> vector<8x128xf32>
    %c0_71 = arith.constant 0 : index
    %c2688_72 = arith.constant 2688 : index
    %168 = vector.load %arg2[%c0_71, %c2688_72] : memref<1x5120xf32, #tpu.memory_space<vmem>>, vector<1x128xf32>
    %169 = vector.broadcast %168 : vector<1x128xf32> to vector<8x128xf32>
    %170 = arith.addf %167, %169 : vector<8x128xf32>
    %171 = arith.negf %170 : vector<8x128xf32>
    %172 = math.exp %171 : vector<8x128xf32>
    %cst_73 = arith.constant 1.000000e+00 : f32
    %173 = vector.broadcast %cst_73 : f32 to vector<8x128xf32>
    %174 = arith.addf %173, %172 : vector<8x128xf32>
    %175 = arith.divf %173, %174 : vector<8x128xf32>
    %176 = arith.mulf %170, %175 : vector<8x128xf32>
    %177 = arith.addf %176, %150 : vector<8x128xf32>
    %178 = arith.truncf %177 : vector<8x128xf32> to vector<8x128xbf16>
    %c0_74 = arith.constant 0 : index
    %c2816 = arith.constant 2816 : index
    %179 = vector.load %arg1[%c0_74, %c2816] : memref<128x5120xbf16, #tpu.memory_space<vmem>>, vector<128x256xbf16>
    %cst_75 = arith.constant dense<0.000000e+00> : vector<8x256xf32>
    %180 = tpu.matmul %178, %179, %cst_75 {dimension_numbers = #tpu.dot_dimension_numbers<[1], [0], [0], [1], [0, 0, 1, 1], [], []>} : vector<8x128xbf16>, vector<128x256xbf16>, vector<8x256xf32> -> vector<8x256xf32>
    %181 = arith.truncf %150 : vector<8x128xf32> to vector<8x128xbf16>
    %c0_76 = arith.constant 0 : index
    %c3072 = arith.constant 3072 : index
    %182 = vector.load %arg1[%c0_76, %c3072] : memref<128x5120xbf16, #tpu.memory_space<vmem>>, vector<128x256xbf16>
    %cst_77 = arith.constant dense<0.000000e+00> : vector<8x256xf32>
    %183 = tpu.matmul %181, %182, %cst_77 {dimension_numbers = #tpu.dot_dimension_numbers<[1], [0], [0], [1], [0, 0, 1, 1], [], []>} : vector<8x128xbf16>, vector<128x256xbf16>, vector<8x256xf32> -> vector<8x256xf32>
    %184 = arith.addf %180, %183 : vector<8x256xf32>
    %c0_78 = arith.constant 0 : index
    %c2816_79 = arith.constant 2816 : index
    %185 = vector.load %arg2[%c0_78, %c2816_79] : memref<1x5120xf32, #tpu.memory_space<vmem>>, vector<1x256xf32>
    %186 = vector.broadcast %185 : vector<1x256xf32> to vector<8x256xf32>
    %187 = arith.addf %184, %186 : vector<8x256xf32>
    %188 = vector.extract_strided_slice %187 {offsets = [0, 0], sizes = [8, 128], strides = [1, 1]} : vector<8x256xf32> to vector<8x128xf32>
    %189 = vector.extract_strided_slice %187 {offsets = [0, 128], sizes = [8, 128], strides = [1, 1]} : vector<8x256xf32> to vector<8x128xf32>
    %190 = arith.negf %188 : vector<8x128xf32>
    %191 = math.exp %190 : vector<8x128xf32>
    %cst_80 = arith.constant 1.000000e+00 : f32
    %192 = vector.broadcast %cst_80 : f32 to vector<8x128xf32>
    %193 = arith.addf %192, %191 : vector<8x128xf32>
    %194 = arith.divf %192, %193 : vector<8x128xf32>
    %195 = arith.mulf %188, %194 : vector<8x128xf32>
    %196 = vector.extract_strided_slice %35 {offsets = [0, 512], sizes = [8, 128], strides = [1, 1]} : vector<8x896xf32> to vector<8x128xf32>
    %197 = arith.addf %195, %196 : vector<8x128xf32>
    %198 = arith.truncf %197 : vector<8x128xf32> to vector<8x128xbf16>
    %c0_81 = arith.constant 0 : index
    %c3328 = arith.constant 3328 : index
    %199 = vector.load %arg1[%c0_81, %c3328] : memref<128x5120xbf16, #tpu.memory_space<vmem>>, vector<128x128xbf16>
    %cst_82 = arith.constant dense<0.000000e+00> : vector<8x128xf32>
    %200 = tpu.matmul %198, %199, %cst_82 {dimension_numbers = #tpu.dot_dimension_numbers<[1], [0], [0], [1], [0, 0, 1, 1], [], []>} : vector<8x128xbf16>, vector<128x128xbf16>, vector<8x128xf32> -> vector<8x128xf32>
    %c0_83 = arith.constant 0 : index
    %c3328_84 = arith.constant 3328 : index
    %201 = vector.load %arg2[%c0_83, %c3328_84] : memref<1x5120xf32, #tpu.memory_space<vmem>>, vector<1x128xf32>
    %202 = vector.broadcast %201 : vector<1x128xf32> to vector<8x128xf32>
    %203 = arith.addf %200, %202 : vector<8x128xf32>
    %204 = arith.negf %203 : vector<8x128xf32>
    %205 = math.exp %204 : vector<8x128xf32>
    %cst_85 = arith.constant 1.000000e+00 : f32
    %206 = vector.broadcast %cst_85 : f32 to vector<8x128xf32>
    %207 = arith.addf %206, %205 : vector<8x128xf32>
    %208 = arith.divf %206, %207 : vector<8x128xf32>
    %209 = arith.mulf %203, %208 : vector<8x128xf32>
    %210 = arith.addf %209, %189 : vector<8x128xf32>
    %211 = arith.truncf %210 : vector<8x128xf32> to vector<8x128xbf16>
    %c0_86 = arith.constant 0 : index
    %c3456 = arith.constant 3456 : index
    %212 = vector.load %arg1[%c0_86, %c3456] : memref<128x5120xbf16, #tpu.memory_space<vmem>>, vector<128x256xbf16>
    %cst_87 = arith.constant dense<0.000000e+00> : vector<8x256xf32>
    %213 = tpu.matmul %211, %212, %cst_87 {dimension_numbers = #tpu.dot_dimension_numbers<[1], [0], [0], [1], [0, 0, 1, 1], [], []>} : vector<8x128xbf16>, vector<128x256xbf16>, vector<8x256xf32> -> vector<8x256xf32>
    %214 = arith.truncf %121 : vector<8x128xf32> to vector<8x128xbf16>
    %c0_88 = arith.constant 0 : index
    %c3712 = arith.constant 3712 : index
    %215 = vector.load %arg1[%c0_88, %c3712] : memref<128x5120xbf16, #tpu.memory_space<vmem>>, vector<128x256xbf16>
    %cst_89 = arith.constant dense<0.000000e+00> : vector<8x256xf32>
    %216 = tpu.matmul %214, %215, %cst_89 {dimension_numbers = #tpu.dot_dimension_numbers<[1], [0], [0], [1], [0, 0, 1, 1], [], []>} : vector<8x128xbf16>, vector<128x256xbf16>, vector<8x256xf32> -> vector<8x256xf32>
    %217 = arith.addf %213, %216 : vector<8x256xf32>
    %c0_90 = arith.constant 0 : index
    %c3456_91 = arith.constant 3456 : index
    %218 = vector.load %arg2[%c0_90, %c3456_91] : memref<1x5120xf32, #tpu.memory_space<vmem>>, vector<1x256xf32>
    %219 = vector.broadcast %218 : vector<1x256xf32> to vector<8x256xf32>
    %220 = arith.addf %217, %219 : vector<8x256xf32>
    %221 = vector.extract_strided_slice %220 {offsets = [0, 0], sizes = [8, 128], strides = [1, 1]} : vector<8x256xf32> to vector<8x128xf32>
    %222 = vector.extract_strided_slice %220 {offsets = [0, 128], sizes = [8, 128], strides = [1, 1]} : vector<8x256xf32> to vector<8x128xf32>
    %223 = arith.negf %221 : vector<8x128xf32>
    %224 = math.exp %223 : vector<8x128xf32>
    %cst_92 = arith.constant 1.000000e+00 : f32
    %225 = vector.broadcast %cst_92 : f32 to vector<8x128xf32>
    %226 = arith.addf %225, %224 : vector<8x128xf32>
    %227 = arith.divf %225, %226 : vector<8x128xf32>
    %228 = arith.mulf %221, %227 : vector<8x128xf32>
    %229 = vector.extract_strided_slice %35 {offsets = [0, 640], sizes = [8, 128], strides = [1, 1]} : vector<8x896xf32> to vector<8x128xf32>
    %230 = arith.addf %228, %229 : vector<8x128xf32>
    %231 = arith.truncf %230 : vector<8x128xf32> to vector<8x128xbf16>
    %c0_93 = arith.constant 0 : index
    %c3968 = arith.constant 3968 : index
    %232 = vector.load %arg1[%c0_93, %c3968] : memref<128x5120xbf16, #tpu.memory_space<vmem>>, vector<128x128xbf16>
    %cst_94 = arith.constant dense<0.000000e+00> : vector<8x128xf32>
    %233 = tpu.matmul %231, %232, %cst_94 {dimension_numbers = #tpu.dot_dimension_numbers<[1], [0], [0], [1], [0, 0, 1, 1], [], []>} : vector<8x128xbf16>, vector<128x128xbf16>, vector<8x128xf32> -> vector<8x128xf32>
    %c0_95 = arith.constant 0 : index
    %c3968_96 = arith.constant 3968 : index
    %234 = vector.load %arg2[%c0_95, %c3968_96] : memref<1x5120xf32, #tpu.memory_space<vmem>>, vector<1x128xf32>
    %235 = vector.broadcast %234 : vector<1x128xf32> to vector<8x128xf32>
    %236 = arith.addf %233, %235 : vector<8x128xf32>
    %237 = arith.negf %236 : vector<8x128xf32>
    %238 = math.exp %237 : vector<8x128xf32>
    %cst_97 = arith.constant 1.000000e+00 : f32
    %239 = vector.broadcast %cst_97 : f32 to vector<8x128xf32>
    %240 = arith.addf %239, %238 : vector<8x128xf32>
    %241 = arith.divf %239, %240 : vector<8x128xf32>
    %242 = arith.mulf %236, %241 : vector<8x128xf32>
    %243 = arith.addf %242, %222 : vector<8x128xf32>
    %244 = arith.truncf %243 : vector<8x128xf32> to vector<8x128xbf16>
    %c0_98 = arith.constant 0 : index
    %c4096 = arith.constant 4096 : index
    %245 = vector.load %arg1[%c0_98, %c4096] : memref<128x5120xbf16, #tpu.memory_space<vmem>>, vector<128x256xbf16>
    %cst_99 = arith.constant dense<0.000000e+00> : vector<8x256xf32>
    %246 = tpu.matmul %244, %245, %cst_99 {dimension_numbers = #tpu.dot_dimension_numbers<[1], [0], [0], [1], [0, 0, 1, 1], [], []>} : vector<8x128xbf16>, vector<128x256xbf16>, vector<8x256xf32> -> vector<8x256xf32>
    %247 = arith.truncf %92 : vector<8x128xf32> to vector<8x128xbf16>
    %c0_100 = arith.constant 0 : index
    %c4352 = arith.constant 4352 : index
    %248 = vector.load %arg1[%c0_100, %c4352] : memref<128x5120xbf16, #tpu.memory_space<vmem>>, vector<128x256xbf16>
    %cst_101 = arith.constant dense<0.000000e+00> : vector<8x256xf32>
    %249 = tpu.matmul %247, %248, %cst_101 {dimension_numbers = #tpu.dot_dimension_numbers<[1], [0], [0], [1], [0, 0, 1, 1], [], []>} : vector<8x128xbf16>, vector<128x256xbf16>, vector<8x256xf32> -> vector<8x256xf32>
    %250 = arith.addf %246, %249 : vector<8x256xf32>
    %c0_102 = arith.constant 0 : index
    %c4096_103 = arith.constant 4096 : index
    %251 = vector.load %arg2[%c0_102, %c4096_103] : memref<1x5120xf32, #tpu.memory_space<vmem>>, vector<1x256xf32>
    %252 = vector.broadcast %251 : vector<1x256xf32> to vector<8x256xf32>
    %253 = arith.addf %250, %252 : vector<8x256xf32>
    %254 = vector.extract_strided_slice %253 {offsets = [0, 0], sizes = [8, 128], strides = [1, 1]} : vector<8x256xf32> to vector<8x128xf32>
    %255 = vector.extract_strided_slice %253 {offsets = [0, 128], sizes = [8, 128], strides = [1, 1]} : vector<8x256xf32> to vector<8x128xf32>
    %256 = arith.negf %254 : vector<8x128xf32>
    %257 = math.exp %256 : vector<8x128xf32>
    %cst_104 = arith.constant 1.000000e+00 : f32
    %258 = vector.broadcast %cst_104 : f32 to vector<8x128xf32>
    %259 = arith.addf %258, %257 : vector<8x128xf32>
    %260 = arith.divf %258, %259 : vector<8x128xf32>
    %261 = arith.mulf %254, %260 : vector<8x128xf32>
    %262 = vector.extract_strided_slice %35 {offsets = [0, 768], sizes = [8, 128], strides = [1, 1]} : vector<8x896xf32> to vector<8x128xf32>
    %263 = arith.addf %261, %262 : vector<8x128xf32>
    %264 = arith.truncf %263 : vector<8x128xf32> to vector<8x128xbf16>
    %c0_105 = arith.constant 0 : index
    %c4608 = arith.constant 4608 : index
    %265 = vector.load %arg1[%c0_105, %c4608] : memref<128x5120xbf16, #tpu.memory_space<vmem>>, vector<128x128xbf16>
    %cst_106 = arith.constant dense<0.000000e+00> : vector<8x128xf32>
    %266 = tpu.matmul %264, %265, %cst_106 {dimension_numbers = #tpu.dot_dimension_numbers<[1], [0], [0], [1], [0, 0, 1, 1], [], []>} : vector<8x128xbf16>, vector<128x128xbf16>, vector<8x128xf32> -> vector<8x128xf32>
    %c0_107 = arith.constant 0 : index
    %c4608_108 = arith.constant 4608 : index
    %267 = vector.load %arg2[%c0_107, %c4608_108] : memref<1x5120xf32, #tpu.memory_space<vmem>>, vector<1x128xf32>
    %268 = vector.broadcast %267 : vector<1x128xf32> to vector<8x128xf32>
    %269 = arith.addf %266, %268 : vector<8x128xf32>
    %270 = arith.negf %269 : vector<8x128xf32>
    %271 = math.exp %270 : vector<8x128xf32>
    %cst_109 = arith.constant 1.000000e+00 : f32
    %272 = vector.broadcast %cst_109 : f32 to vector<8x128xf32>
    %273 = arith.addf %272, %271 : vector<8x128xf32>
    %274 = arith.divf %272, %273 : vector<8x128xf32>
    %275 = arith.mulf %269, %274 : vector<8x128xf32>
    %276 = arith.addf %275, %255 : vector<8x128xf32>
    %277 = arith.truncf %276 : vector<8x128xf32> to vector<8x128xbf16>
    %c0_110 = arith.constant 0 : index
    %c4736 = arith.constant 4736 : index
    %278 = vector.load %arg1[%c0_110, %c4736] : memref<128x5120xbf16, #tpu.memory_space<vmem>>, vector<128x128xbf16>
    %cst_111 = arith.constant dense<0.000000e+00> : vector<8x128xf32>
    %279 = tpu.matmul %277, %278, %cst_111 {dimension_numbers = #tpu.dot_dimension_numbers<[1], [0], [0], [1], [0, 0, 1, 1], [], []>} : vector<8x128xbf16>, vector<128x128xbf16>, vector<8x128xf32> -> vector<8x128xf32>
    %280 = arith.truncf %59 : vector<8x128xf32> to vector<8x128xbf16>
    %c0_112 = arith.constant 0 : index
    %c4864 = arith.constant 4864 : index
    %281 = vector.load %arg1[%c0_112, %c4864] : memref<128x5120xbf16, #tpu.memory_space<vmem>>, vector<128x128xbf16>
    %cst_113 = arith.constant dense<0.000000e+00> : vector<8x128xf32>
    %282 = tpu.matmul %280, %281, %cst_113 {dimension_numbers = #tpu.dot_dimension_numbers<[1], [0], [0], [1], [0, 0, 1, 1], [], []>} : vector<8x128xbf16>, vector<128x128xbf16>, vector<8x128xf32> -> vector<8x128xf32>
    %283 = arith.addf %279, %282 : vector<8x128xf32>
    %c0_114 = arith.constant 0 : index
    %c4736_115 = arith.constant 4736 : index
    %284 = vector.load %arg2[%c0_114, %c4736_115] : memref<1x5120xf32, #tpu.memory_space<vmem>>, vector<1x128xf32>
    %285 = vector.broadcast %284 : vector<1x128xf32> to vector<8x128xf32>
    %286 = arith.addf %283, %285 : vector<8x128xf32>
    %287 = arith.negf %286 : vector<8x128xf32>
    %288 = math.exp %287 : vector<8x128xf32>
    %cst_116 = arith.constant 1.000000e+00 : f32
    %289 = vector.broadcast %cst_116 : f32 to vector<8x128xf32>
    %290 = arith.addf %289, %288 : vector<8x128xf32>
    %291 = arith.divf %289, %290 : vector<8x128xf32>
    %292 = arith.mulf %286, %291 : vector<8x128xf32>
    %293 = arith.truncf %292 : vector<8x128xf32> to vector<8x128xbf16>
    %c0_117 = arith.constant 0 : index
    %c4992 = arith.constant 4992 : index
    %294 = vector.load %arg1[%c0_117, %c4992] : memref<128x5120xbf16, #tpu.memory_space<vmem>>, vector<128x128xbf16>
    %cst_118 = arith.constant dense<0.000000e+00> : vector<8x128xf32>
    %295 = tpu.matmul %293, %294, %cst_118 {dimension_numbers = #tpu.dot_dimension_numbers<[1], [0], [0], [1], [0, 0, 1, 1], [], []>} : vector<8x128xbf16>, vector<128x128xbf16>, vector<8x128xf32> -> vector<8x128xf32>
    %c0_119 = arith.constant 0 : index
    %c4992_120 = arith.constant 4992 : index
    %296 = vector.load %arg2[%c0_119, %c4992_120] : memref<1x5120xf32, #tpu.memory_space<vmem>>, vector<1x128xf32>
    %297 = vector.broadcast %296 : vector<1x128xf32> to vector<8x128xf32>
    %298 = arith.addf %295, %297 : vector<8x128xf32>
    %c0_121 = arith.constant 0 : index
    %c0_122 = arith.constant 0 : index
    %299 = vector.load %arg3[%c0_121, %c0_122] : memref<8x128xf32, #tpu.memory_space<vmem>>, vector<8x128xf32>
    tpu.vector_store %arg3[%c0_121, %c0_122], %298 {strides = array<i32>} : memref<8x128xf32, #tpu.memory_space<vmem>>, vector<8x128xf32>,
    return
  }
}

</mosaic_0001>

<llo_original>
// kernel: forward.1
$region0: #{forward.1}
  #allocation0 [shape = 'u32[]', space=smem, size = 0x4, offset = 0x4, fixed_abs, tag = 'smem constant byte address 0x4 - core index']
  #allocation1 [shape = 'u32[144,128]{1,0:T(1,128)}', space=vmem, size = 0x12000, scoped, tag = 'internal scratch']
  %s0 = inlined_call_operand.vmem [shape: f32[3,8,128], index: 0, kind: input, shape index: {}]
  %s1 = inlined_call_operand.hbm [shape: bf16[128,5120], index: 1, kind: input, shape index: {}]
  %s2 = inlined_call_operand.hbm [shape: f32[1,5120], index: 2, kind: input, shape index: {}]
  %s3 = inlined_call_operand.hbm [shape: f32[8,128], index: 3, kind: output, shape index: {}]
  %s4 = sld [smem:[#allocation0]]
  $region30: #{forward.1} parent=0
    _
  %s6 = ssub.s32 1, %s4
  %s7 = scalar_select 0, %s6, %s4
  $region1: #{forward.1} parent=0
    #allocation2 [shape = 'u8[1310720]{0}', space=vmem, size = 0x140000, scoped, tag = 'input window, operand 1, single buffered']
    #allocation3 [shape = 's32[1]{0}', space=sflag, size = 0x4, scoped, tag = 'scoped memory for forward.1']
    #allocation4 [shape = 's32[1]{0}', space=sflag, size = 0x4, scoped, tag = 'scoped memory for forward.1']
    #allocation5 [shape = 'u8[20480]{0}', space=vmem, size = 0x5000, scoped, tag = 'input window, operand 2, single buffered']
    #allocation6 [shape = 's32[1]{0}', space=sflag, size = 0x4, scoped, tag = 'scoped memory for forward.1']
    #allocation7 [shape = 'u8[4096]{0}', space=vmem, size = 0x1000, scoped, tag = 'output window, operand 0, single buffered']
    %8 = vsyncpa [#allocation3], 0
    %9 = vsyncpa [#allocation6], 0
    %10 = vsyncpa [#allocation4], 0
    // Predicated region
    $region2: #{forward.1} parent=1 // pred_check
      _
    $region3: #{forward.1} parent=1 // pred_check_branch
      %12 = sbr.rel (0) target = $region5
    $region4: #{forward.1} parent=1 // pred_region
      _
    $region5: #{forward.1} parent=1 // pred_fallthru
      _
    // Predicated region
    $region6: #{forward.1} parent=1 // pred_check
      _
    $region7: #{forward.1} parent=1 // pred_check_branch
      %14 = sbr.rel (0) target = $region9
    $region8: #{forward.1} parent=1 // pred_region
      %s16 = ssub.s32 40960, 40960
      %17 = vsyncadd [#allocation3], %s16
      %s18 = sshll.u32 [#allocation2], 4
      %s19 = int_to_ptr.vmem [resolvable:$true] %s18
      %24 = dma.hbm_to_vmem [thread:$0]  %s1, 40960, %s19, [#allocation3], 2560, 2560, 160
    $region9: #{forward.1} parent=1 // pred_fallthru
      _
    // Predicated region
    $region10: #{forward.1} parent=1 // pred_check
      _
    $region11: #{forward.1} parent=1 // pred_check_branch
      %26 = sbr.rel (0) target = $region13
    $region12: #{forward.1} parent=1 // pred_region
      %s28 = ssub.s32 640, 640
      %29 = vsyncadd [#allocation6], %s28
      %s31 = sshll.u32 [#allocation5], 4
      %s32 = int_to_ptr.vmem [resolvable:$true] %s31
      %34 = dma.hbm_to_vmem [thread:$0]  %s2, 640, %s32, [#allocation6]
    $region13: #{forward.1} parent=1 // pred_fallthru
      _
    // Predicated region
    $region14: #{forward.1} parent=1 // pred_check
      _
    $region15: #{forward.1} parent=1 // pred_check_branch
      %36 = sbr.rel (0) target = $region17
    $region16: #{forward.1} parent=1 // pred_region
      %37 = dma.done [#allocation3], 40960
    $region17: #{forward.1} parent=1 // pred_fallthru
      _
    // Predicated region
    $region18: #{forward.1} parent=1 // pred_check
      _
    $region19: #{forward.1} parent=1 // pred_check_branch
      %39 = sbr.rel (0) target = $region21
    $region20: #{forward.1} parent=1 // pred_region
      %40 = dma.done [#allocation6], 640
    $region21: #{forward.1} parent=1 // pred_fallthru
      _
    %v42 = vld [vmem:[%s0] sm:$0xff]
    %s43 = scalar_lea.vmem %s0, 8
    %v44 = vld [vmem:[%s43] sm:$0xff]
    %s45 = scalar_lea.vmem %s0, 16
    %v46 = vld [vmem:[%s45] sm:$0xff]
    %v47 = vpack.c.bf16 %v44, %v44
    %v48 = vld [vmem:[#allocation2] sm:$0xf]
    %v49 = vld [vmem:[#allocation2 + $0xa0] sm:$0xf]
    %v50 = vld [vmem:[#allocation2 + $0x140] sm:$0xf]
    %v51 = vld [vmem:[#allocation2 + $0x1e0] sm:$0xf]
    %v52 = vld [vmem:[#allocation2 + $0x280] sm:$0xf]
    %v53 = vld [vmem:[#allocation2 + $0x320] sm:$0xf]
    %v54 = vld [vmem:[#allocation2 + $0x3c0] sm:$0xf]
    %v55 = vld [vmem:[#allocation2 + $0x460] sm:$0xf]
    %v56 = vld [vmem:[#allocation2 + $0x500] sm:$0xf]
    %v57 = vld [vmem:[#allocation2 + $0x5a0] sm:$0xf]
    %v58 = vld [vmem:[#allocation2 + $0x640] sm:$0xf]
    %v59 = vld [vmem:[#allocation2 + $0x6e0] sm:$0xf]
    %v60 = vld [vmem:[#allocation2 + $0x780] sm:$0xf]
    %v61 = vld [vmem:[#allocation2 + $0x820] sm:$0xf]
    %v62 = vld [vmem:[#allocation2 + $0x8c0] sm:$0xf]
    %v63 = vld [vmem:[#allocation2 + $0x960] sm:$0xf]
    %v64 = vld [vmem:[#allocation5] sm:$0x1]
    %v66 = vlaneseq
    %v67 = vshrl.u32 %v66, 7
    %v68 = vsub.s32 0, %v67
    %v69 = vrot.slane %v64, %v68
    %v87 = vunpack.c.l.b16 %v48
    %v88 = vunpack.c.l.b16 %v49
    %v89 = vunpack.c.l.b16 %v50
    %v90 = vunpack.c.l.b16 %v51
    %v91 = vunpack.c.l.b16 %v52
    %v92 = vunpack.c.l.b16 %v53
    %v93 = vunpack.c.l.b16 %v54
    %v94 = vunpack.c.l.b16 %v55
    %v95 = vunpack.c.l.b16 %v56
    %v96 = vunpack.c.l.b16 %v57
    %v97 = vunpack.c.l.b16 %v58
    %v98 = vunpack.c.l.b16 %v59
    %v99 = vunpack.c.l.b16 %v60
    %v100 = vunpack.c.l.b16 %v61
    %v101 = vunpack.c.l.b16 %v62
    %v102 = vunpack.c.l.b16 %v63
    %v103 = vpack.c.b16 %v88, %v87
    %v104 = vpack.c.b16 %v90, %v89
    %v105 = vpack.c.b16 %v92, %v91
    %v106 = vpack.c.b16 %v94, %v93
    %v107 = vpack.c.b16 %v96, %v95
    %v108 = vpack.c.b16 %v98, %v97
    %v109 = vpack.c.b16 %v100, %v99
    %v110 = vpack.c.b16 %v102, %v101
    %119 = vmatprep.subr.bf16.mxu0 0
    %120 = vmatpush1.bf16.msra.mxu0 %v103
    %121 = vmatprep.subr.bf16.mxu0 0
    %122 = vmatpush1.bf16.msra.mxu0 %v104
    %123 = vmatprep.subr.bf16.mxu0 0
    %124 = vmatpush1.bf16.msra.mxu0 %v105
    %125 = vmatprep.subr.bf16.mxu0 0
    %126 = vmatpush1.bf16.msra.mxu0 %v106
    %127 = vmatprep.subr.bf16.mxu0 0
    %128 = vmatpush1.bf16.msra.mxu0 %v107
    %129 = vmatprep.subr.bf16.mxu0 0
    %130 = vmatpush1.bf16.msra.mxu0 %v108
    %131 = vmatprep.subr.bf16.mxu0 0
    %132 = vmatpush1.bf16.msra.mxu0 %v109
    %133 = vmatprep.subr.bf16.mxu0 0
    %134 = vmatpush1.bf16.msra.mxu0 %v110
    %135 = vmatprep.subr.bf16.mxu0 0
    %136 = vmatpush1.bf16.msra.mxu0 0
    %137 = vmatprep.subr.bf16.mxu0 0
    %138 = vmatpush1.bf16.msra.mxu0 0
    %139 = vmatprep.subr.bf16.mxu0 0
    %140 = vmatpush1.bf16.msra.mxu0 0
    %141 = vmatprep.subr.bf16.mxu0 0
    %142 = vmatpush1.bf16.msra.mxu0 0
    %143 = vmatprep.subr.bf16.mxu0 0
    %144 = vmatpush1.bf16.msra.mxu0 0
    %145 = vmatprep.subr.bf16.mxu0 0
    %146 = vmatpush1.bf16.msra.mxu0 0
    %147 = vmatprep.subr.bf16.mxu0 0
    %148 = vmatpush1.bf16.msra.mxu0 0
    %149 = vmatprep.subr.bf16.mxu0 0
    %150 = vmatpush1.bf16.msra.mxu0 0
    %151 = vmatprep.mubr.bf16.mxu0 0
    %152 = vmatmul.mubr.bf16.gmra.mrb[0].mxu0 %v47
    %v153 = vpop.f32.mrb[0].mxu0
    %v154 = vadd.f32 %v69, %v153
    %v155 = vpop.f32.mrb[0].mxu0
    %v156 = vpop.f32.mrb[0].mxu0
    %v157 = vpop.f32.mrb[0].mxu0
    %158 = vdwg.mxu0
    %v159 = vxor.u32 %v154, 2147483648
    %v160 = vmul.f32 %v159, 1.442695
    %v161 = vpow.pop %v160
    %v162 = vadd.f32 %v161, 1.0
    %v163 = vrcp.pop %v162
    %v164 = vmul.f32 1.0, %v163
    %v165 = vmul.f32 %v154, %v164
    %v166 = vpack.c.bf16 %v165, %v165
    %v167 = vld [vmem:[#allocation2 + $0x4] sm:$0xf]
    %v168 = vld [vmem:[#allocation2 + $0xa4] sm:$0xf]
    %v169 = vld [vmem:[#allocation2 + $0x144] sm:$0xf]
    %v170 = vld [vmem:[#allocation2 + $0x1e4] sm:$0xf]
    %v171 = vld [vmem:[#allocation2 + $0x284] sm:$0xf]
    %v172 = vld [vmem:[#allocation2 + $0x324] sm:$0xf]
    %v173 = vld [vmem:[#allocation2 + $0x3c4] sm:$0xf]
    %v174 = vld [vmem:[#allocation2 + $0x464] sm:$0xf]
    %v175 = vld [vmem:[#allocation2 + $0x504] sm:$0xf]
    %v176 = vld [vmem:[#allocation2 + $0x5a4] sm:$0xf]
    %v177 = vld [vmem:[#allocation2 + $0x644] sm:$0xf]
    %v178 = vld [vmem:[#allocation2 + $0x6e4] sm:$0xf]
    %v179 = vld [vmem:[#allocation2 + $0x784] sm:$0xf]
    %v180 = vld [vmem:[#allocation2 + $0x824] sm:$0xf]
    %v181 = vld [vmem:[#allocation2 + $0x8c4] sm:$0xf]
    %v182 = vld [vmem:[#allocation2 + $0x964] sm:$0xf]
    %v183 = vld [vmem:[#allocation5 + $0x1] sm:$0x1]
    %v185 = vlaneseq
    %v186 = vshrl.u32 %v185, 7
    %v187 = vsub.s32 0, %v186
    %v188 = vrot.slane %v183, %v187
    %v206 = vunpack.c.l.b16 %v167
    %v207 = vunpack.c.l.b16 %v168
    %v208 = vunpack.c.l.b16 %v169
    %v209 = vunpack.c.l.b16 %v170
    %v210 = vunpack.c.l.b16 %v171
    %v211 = vunpack.c.l.b16 %v172
    %v212 = vunpack.c.l.b16 %v173
    %v213 = vunpack.c.l.b16 %v174
    %v214 = vunpack.c.l.b16 %v175
    %v215 = vunpack.c.l.b16 %v176
    %v216 = vunpack.c.l.b16 %v177
    %v217 = vunpack.c.l.b16 %v178
    %v218 = vunpack.c.l.b16 %v179
    %v219 = vunpack.c.l.b16 %v180
    %v220 = vunpack.c.l.b16 %v181
    %v221 = vunpack.c.l.b16 %v182
    %v222 = vpack.c.b16 %v207, %v206
    %v223 = vpack.c.b16 %v209, %v208
    %v224 = vpack.c.b16 %v211, %v210
    %v225 = vpack.c.b16 %v213, %v212
    %v226 = vpack.c.b16 %v215, %v214
    %v227 = vpack.c.b16 %v217, %v216
    %v228 = vpack.c.b16 %v219, %v218
    %v229 = vpack.c.b16 %v221, %v220
    %238 = vmatprep.subr.bf16.mxu0 0
    %239 = vmatpush1.bf16.msra.mxu0 %v222
    %240 = vmatprep.subr.bf16.mxu0 0
    %241 = vmatpush1.bf16.msra.mxu0 %v223
    %242 = vmatprep.subr.bf16.mxu0 0
    %243 = vmatpush1.bf16.msra.mxu0 %v224
    %244 = vmatprep.subr.bf16.mxu0 0
    %245 = vmatpush1.bf16.msra.mxu0 %v225
    %246 = vmatprep.subr.bf16.mxu0 0
    %247 = vmatpush1.bf16.msra.mxu0 %v226
    %248 = vmatprep.subr.bf16.mxu0 0
    %249 = vmatpush1.bf16.msra.mxu0 %v227
    %250 = vmatprep.subr.bf16.mxu0 0
    %251 = vmatpush1.bf16.msra.mxu0 %v228
    %252 = vmatprep.subr.bf16.mxu0 0
    %253 = vmatpush1.bf16.msra.mxu0 %v229
    %254 = vmatprep.subr.bf16.mxu0 0
    %255 = vmatpush1.bf16.msra.mxu0 0
    %256 = vmatprep.subr.bf16.mxu0 0
    %257 = vmatpush1.bf16.msra.mxu0 0
    %258 = vmatprep.subr.bf16.mxu0 0
    %259 = vmatpush1.bf16.msra.mxu0 0
    %260 = vmatprep.subr.bf16.mxu0 0
    %261 = vmatpush1.bf16.msra.mxu0 0
    %262 = vmatprep.subr.bf16.mxu0 0
    %263 = vmatpush1.bf16.msra.mxu0 0
    %264 = vmatprep.subr.bf16.mxu0 0
    %265 = vmatpush1.bf16.msra.mxu0 0
    %266 = vmatprep.subr.bf16.mxu0 0
    %267 = vmatpush1.bf16.msra.mxu0 0
    %268 = vmatprep.subr.bf16.mxu0 0
    %269 = vmatpush1.bf16.msra.mxu0 0
    %270 = vmatprep.mubr.bf16.mxu0 0
    %271 = vmatmul.mubr.bf16.gmra.mrb[0].mxu0 %v166
    %v272 = vpop.f32.mrb[0].mxu0
    %v273 = vadd.f32 %v188, %v272
    %v274 = vpop.f32.mrb[0].mxu0
    %v275 = vpop.f32.mrb[0].mxu0
    %v276 = vpop.f32.mrb[0].mxu0
    %277 = vdwg.mxu0
    %v278 = vxor.u32 %v273, 2147483648
    %v279 = vmul.f32 %v278, 1.442695
    %v280 = vpow.pop %v279
    %v281 = vadd.f32 %v280, 1.0
    %v282 = vrcp.pop %v281
    %v283 = vmul.f32 1.0, %v282
    %v284 = vmul.f32 %v273, %v283
    %v285 = vpack.c.bf16 %v284, %v284
    %v286 = vld [vmem:[#allocation2 + $0x8] sm:$0xff]
    %v287 = vld [vmem:[#allocation2 + $0x10] sm:$0xff]
    %v288 = vld [vmem:[#allocation2 + $0x18] sm:$0xff]
    %v289 = vld [vmem:[#allocation2 + $0x20] sm:$0xf]
    %v290 = vld [vmem:[#allocation2 + $0xa8] sm:$0xff]
    %v291 = vld [vmem:[#allocation2 + $0xb0] sm:$0xff]
    %v292 = vld [vmem:[#allocation2 + $0xb8] sm:$0xff]
    %v293 = vld [vmem:[#allocation2 + $0xc0] sm:$0xf]
    %v294 = vld [vmem:[#allocation2 + $0x148] sm:$0xff]
    %v295 = vld [vmem:[#allocation2 + $0x150] sm:$0xff]
    %v296 = vld [vmem:[#allocation2 + $0x158] sm:$0xff]
    %v297 = vld [vmem:[#allocation2 + $0x160] sm:$0xf]
    %v298 = vld [vmem:[#allocation2 + $0x1e8] sm:$0xff]
    %v299 = vld [vmem:[#allocation2 + $0x1f0] sm:$0xff]
    %v300 = vld [vmem:[#allocation2 + $0x1f8] sm:$0xff]
    %v301 = vld [vmem:[#allocation2 + $0x200] sm:$0xf]
    %v302 = vld [vmem:[#allocation2 + $0x288] sm:$0xff]
    %v303 = vld [vmem:[#allocation2 + $0x290] sm:$0xff]
    %v304 = vld [vmem:[#allocation2 + $0x298] sm:$0xff]
    %v305 = vld [vmem:[#allocation2 + $0x2a0] sm:$0xf]
    %v306 = vld [vmem:[#allocation2 + $0x328] sm:$0xff]
    %v307 = vld [vmem:[#allocation2 + $0x330] sm:$0xff]
    %v308 = vld [vmem:[#allocation2 + $0x338] sm:$0xff]
    %v309 = vld [vmem:[#allocation2 + $0x340] sm:$0xf]
    %v310 = vld [vmem:[#allocation2 + $0x3c8] sm:$0xff]
    %v311 = vld [vmem:[#allocation2 + $0x3d0] sm:$0xff]
    %v312 = vld [vmem:[#allocation2 + $0x3d8] sm:$0xff]
    %v313 = vld [vmem:[#allocation2 + $0x3e0] sm:$0xf]
    %v314 = vld [vmem:[#allocation2 + $0x468] sm:$0xff]
    %v315 = vld [vmem:[#allocation2 + $0x470] sm:$0xff]
    %v316 = vld [vmem:[#allocation2 + $0x478] sm:$0xff]
    %v317 = vld [vmem:[#allocation2 + $0x480] sm:$0xf]
    %v318 = vld [vmem:[#allocation2 + $0x508] sm:$0xff]
    %v319 = vld [vmem:[#allocation2 + $0x510] sm:$0xff]
    %v320 = vld [vmem:[#allocation2 + $0x518] sm:$0xff]
    %v321 = vld [vmem:[#allocation2 + $0x520] sm:$0xf]
    %v322 = vld [vmem:[#allocation2 + $0x5a8] sm:$0xff]
    %v323 = vld [vmem:[#allocation2 + $0x5b0] sm:$0xff]
    %v324 = vld [vmem:[#allocation2 + $0x5b8] sm:$0xff]
    %v325 = vld [vmem:[#allocation2 + $0x5c0] sm:$0xf]
    %v326 = vld [vmem:[#allocation2 + $0x648] sm:$0xff]
    %v327 = vld [vmem:[#allocation2 + $0x650] sm:$0xff]
    %v328 = vld [vmem:[#allocation2 + $0x658] sm:$0xff]
    %v329 = vld [vmem:[#allocation2 + $0x660] sm:$0xf]
    %v330 = vld [vmem:[#allocation2 + $0x6e8] sm:$0xff]
    %v331 = vld [vmem:[#allocation2 + $0x6f0] sm:$0xff]
    %v332 = vld [vmem:[#allocation2 + $0x6f8] sm:$0xff]
    %v333 = vld [vmem:[#allocation2 + $0x700] sm:$0xf]
    %v334 = vld [vmem:[#allocation2 + $0x788] sm:$0xff]
    %v335 = vld [vmem:[#allocation2 + $0x790] sm:$0xff]
    %v336 = vld [vmem:[#allocation2 + $0x798] sm:$0xff]
    %v337 = vld [vmem:[#allocation2 + $0x7a0] sm:$0xf]
    %v338 = vld [vmem:[#allocation2 + $0x828] sm:$0xff]
    %v339 = vld [vmem:[#allocation2 + $0x830] sm:$0xff]
    %v340 = vld [vmem:[#allocation2 + $0x838] sm:$0xff]
    %v341 = vld [vmem:[#allocation2 + $0x840] sm:$0xf]
    %v342 = vld [vmem:[#allocation2 + $0x8c8] sm:$0xff]
    %v343 = vld [vmem:[#allocation2 + $0x8d0] sm:$0xff]
    %v344 = vld [vmem:[#allocation2 + $0x8d8] sm:$0xff]
    %v345 = vld [vmem:[#allocation2 + $0x8e0] sm:$0xf]
    %v346 = vld [vmem:[#allocation2 + $0x968] sm:$0xff]
    %v347 = vld [vmem:[#allocation2 + $0x970] sm:$0xff]
    %v348 = vld [vmem:[#allocation2 + $0x978] sm:$0xff]
    %v349 = vld [vmem:[#allocation2 + $0x980] sm:$0xf]
    %v350 = vld [vmem:[#allocation5 + $0x2] sm:$0xff]
    %v352 = vlaneseq
    %v353 = vshrl.u32 %v352, 7
    %v354 = vsub.s32 0, %v353
    %v355 = vrot.slane %v350, %v354
    %v356 = vlaneseq
    %v357 = vshrl.u32 %v356, 7
    %v358 = vsub.s32 1, %v357
    %v359 = vrot.slane %v350, %v358
    %v360 = vlaneseq
    %v361 = vshrl.u32 %v360, 7
    %v362 = vsub.s32 2, %v361
    %v363 = vrot.slane %v350, %v362
    %v364 = vlaneseq
    %v365 = vshrl.u32 %v364, 7
    %v366 = vsub.s32 3, %v365
    %v367 = vrot.slane %v350, %v366
    %v368 = vlaneseq
    %v369 = vshrl.u32 %v368, 7
    %v370 = vsub.s32 4, %v369
    %v371 = vrot.slane %v350, %v370
    %v372 = vlaneseq
    %v373 = vshrl.u32 %v372, 7
    %v374 = vsub.s32 5, %v373
    %v375 = vrot.slane %v350, %v374
    %v376 = vlaneseq
    %v377 = vshrl.u32 %v376, 7
    %v378 = vsub.s32 6, %v377
    %v379 = vrot.slane %v350, %v378
    %v451 = vunpack.c.l.b16 %v286
    %v452 = vunpack.c.h.b16 %v286
    %v453 = vunpack.c.l.b16 %v287
    %v454 = vunpack.c.h.b16 %v287
    %v455 = vunpack.c.l.b16 %v288
    %v456 = vunpack.c.h.b16 %v288
    %v457 = vunpack.c.l.b16 %v289
    %v458 = vunpack.c.l.b16 %v290
    %v459 = vunpack.c.h.b16 %v290
    %v460 = vunpack.c.l.b16 %v291
    %v461 = vunpack.c.h.b16 %v291
    %v462 = vunpack.c.l.b16 %v292
    %v463 = vunpack.c.h.b16 %v292
    %v464 = vunpack.c.l.b16 %v293
    %v465 = vunpack.c.l.b16 %v294
    %v466 = vunpack.c.h.b16 %v294
    %v467 = vunpack.c.l.b16 %v295
    %v468 = vunpack.c.h.b16 %v295
    %v469 = vunpack.c.l.b16 %v296
    %v470 = vunpack.c.h.b16 %v296
    %v471 = vunpack.c.l.b16 %v297
    %v472 = vunpack.c.l.b16 %v298
    %v473 = vunpack.c.h.b16 %v298
    %v474 = vunpack.c.l.b16 %v299
    %v475 = vunpack.c.h.b16 %v299
    %v476 = vunpack.c.l.b16 %v300
    %v477 = vunpack.c.h.b16 %v300
    %v478 = vunpack.c.l.b16 %v301
    %v479 = vunpack.c.l.b16 %v302
    %v480 = vunpack.c.h.b16 %v302
    %v481 = vunpack.c.l.b16 %v303
    %v482 = vunpack.c.h.b16 %v303
    %v483 = vunpack.c.l.b16 %v304
    %v484 = vunpack.c.h.b16 %v304
    %v485 = vunpack.c.l.b16 %v305
    %v486 = vunpack.c.l.b16 %v306
    %v487 = vunpack.c.h.b16 %v306
    %v488 = vunpack.c.l.b16 %v307
    %v489 = vunpack.c.h.b16 %v307
    %v490 = vunpack.c.l.b16 %v308
    %v491 = vunpack.c.h.b16 %v308
    %v492 = vunpack.c.l.b16 %v309
    %v493 = vunpack.c.l.b16 %v310
    %v494 = vunpack.c.h.b16 %v310
    %v495 = vunpack.c.l.b16 %v311
    %v496 = vunpack.c.h.b16 %v311
    %v497 = vunpack.c.l.b16 %v312
    %v498 = vunpack.c.h.b16 %v312
    %v499 = vunpack.c.l.b16 %v313
    %v500 = vunpack.c.l.b16 %v314
    %v501 = vunpack.c.h.b16 %v314
    %v502 = vunpack.c.l.b16 %v315
    %v503 = vunpack.c.h.b16 %v315
    %v504 = vunpack.c.l.b16 %v316
    %v505 = vunpack.c.h.b16 %v316
    %v506 = vunpack.c.l.b16 %v317
    %v507 = vunpack.c.l.b16 %v318
    %v508 = vunpack.c.h.b16 %v318
    %v509 = vunpack.c.l.b16 %v319
    %v510 = vunpack.c.h.b16 %v319
    %v511 = vunpack.c.l.b16 %v320
    %v512 = vunpack.c.h.b16 %v320
    %v513 = vunpack.c.l.b16 %v321
    %v514 = vunpack.c.l.b16 %v322
    %v515 = vunpack.c.h.b16 %v322
    %v516 = vunpack.c.l.b16 %v323
    %v517 = vunpack.c.h.b16 %v323
    %v518 = vunpack.c.l.b16 %v324
    %v519 = vunpack.c.h.b16 %v324
    %v520 = vunpack.c.l.b16 %v325
    %v521 = vunpack.c.l.b16 %v326
    %v522 = vunpack.c.h.b16 %v326
    %v523 = vunpack.c.l.b16 %v327
    %v524 = vunpack.c.h.b16 %v327
    %v525 = vunpack.c.l.b16 %v328
    %v526 = vunpack.c.h.b16 %v328
    %v527 = vunpack.c.l.b16 %v329
    %v528 = vunpack.c.l.b16 %v330
    %v529 = vunpack.c.h.b16 %v330
    %v530 = vunpack.c.l.b16 %v331
    %v531 = vunpack.c.h.b16 %v331
    %v532 = vunpack.c.l.b16 %v332
    %v533 = vunpack.c.h.b16 %v332
    %v534 = vunpack.c.l.b16 %v333
    %v535 = vunpack.c.l.b16 %v334
    %v536 = vunpack.c.h.b16 %v334
    %v537 = vunpack.c.l.b16 %v335
    %v538 = vunpack.c.h.b16 %v335
    %v539 = vunpack.c.l.b16 %v336
    %v540 = vunpack.c.h.b16 %v336
    %v541 = vunpack.c.l.b16 %v337
    %v542 = vunpack.c.l.b16 %v338
    %v543 = vunpack.c.h.b16 %v338
    %v544 = vunpack.c.l.b16 %v339
    %v545 = vunpack.c.h.b16 %v339
    %v546 = vunpack.c.l.b16 %v340
    %v547 = vunpack.c.h.b16 %v340
    %v548 = vunpack.c.l.b16 %v341
    %v549 = vunpack.c.l.b16 %v342
    %v550 = vunpack.c.h.b16 %v342
    %v551 = vunpack.c.l.b16 %v343
    %v552 = vunpack.c.h.b16 %v343
    %v553 = vunpack.c.l.b16 %v344
    %v554 = vunpack.c.h.b16 %v344
    %v555 = vunpack.c.l.b16 %v345
    %v556 = vunpack.c.l.b16 %v346
    %v557 = vunpack.c.h.b16 %v346
    %v558 = vunpack.c.l.b16 %v347
    %v559 = vunpack.c.h.b16 %v347
    %v560 = vunpack.c.l.b16 %v348
    %v561 = vunpack.c.h.b16 %v348
    %v562 = vunpack.c.l.b16 %v349
    %v563 = vpack.c.b16 %v458, %v451
    %v564 = vpack.c.b16 %v459, %v452
    %v565 = vpack.c.b16 %v460, %v453
    %v566 = vpack.c.b16 %v461, %v454
    %v567 = vpack.c.b16 %v462, %v455
    %v568 = vpack.c.b16 %v463, %v456
    %v569 = vpack.c.b16 %v464, %v457
    %v570 = vpack.c.b16 %v472, %v465
    %v571 = vpack.c.b16 %v473, %v466
    %v572 = vpack.c.b16 %v474, %v467
    %v573 = vpack.c.b16 %v475, %v468
    %v574 = vpack.c.b16 %v476, %v469
    %v575 = vpack.c.b16 %v477, %v470
    %v576 = vpack.c.b16 %v478, %v471
    %v577 = vpack.c.b16 %v486, %v479
    %v578 = vpack.c.b16 %v487, %v480
    %v579 = vpack.c.b16 %v488, %v481
    %v580 = vpack.c.b16 %v489, %v482
    %v581 = vpack.c.b16 %v490, %v483
    %v582 = vpack.c.b16 %v491, %v484
    %v583 = vpack.c.b16 %v492, %v485
    %v584 = vpack.c.b16 %v500, %v493
    %v585 = vpack.c.b16 %v501, %v494
    %v586 = vpack.c.b16 %v502, %v495
    %v587 = vpack.c.b16 %v503, %v496
    %v588 = vpack.c.b16 %v504, %v497
    %v589 = vpack.c.b16 %v505, %v498
    %v590 = vpack.c.b16 %v506, %v499
    %v591 = vpack.c.b16 %v514, %v507
    %v592 = vpack.c.b16 %v515, %v508
    %v593 = vpack.c.b16 %v516, %v509
    %v594 = vpack.c.b16 %v517, %v510
    %v595 = vpack.c.b16 %v518, %v511
    %v596 = vpack.c.b16 %v519, %v512
    %v597 = vpack.c.b16 %v520, %v513
    %v598 = vpack.c.b16 %v528, %v521
    %v599 = vpack.c.b16 %v529, %v522
    %v600 = vpack.c.b16 %v530, %v523
    %v601 = vpack.c.b16 %v531, %v524
    %v602 = vpack.c.b16 %v532, %v525
    %v603 = vpack.c.b16 %v533, %v526
    %v604 = vpack.c.b16 %v534, %v527
    %v605 = vpack.c.b16 %v542, %v535
    %v606 = vpack.c.b16 %v543, %v536
    %v607 = vpack.c.b16 %v544, %v537
    %v608 = vpack.c.b16 %v545, %v538
    %v609 = vpack.c.b16 %v546, %v539
    %v610 = vpack.c.b16 %v547, %v540
    %v611 = vpack.c.b16 %v548, %v541
    %v612 = vpack.c.b16 %v556, %v549
    %v613 = vpack.c.b16 %v557, %v550
    %v614 = vpack.c.b16 %v558, %v551
    %v615 = vpack.c.b16 %v559, %v552
    %v616 = vpack.c.b16 %v560, %v553
    %v617 = vpack.c.b16 %v561, %v554
    %v618 = vpack.c.b16 %v562, %v555
    %675 = vmatprep.subr.bf16.mxu0 %v564
    %676 = vmatpush1.bf16.msra.mxu0 %v563
    %677 = vmatprep.subr.bf16.mxu0 %v571
    %678 = vmatpush1.bf16.msra.mxu0 %v570
    %679 = vmatprep.subr.bf16.mxu0 %v578
    %680 = vmatpush1.bf16.msra.mxu0 %v577
    %681 = vmatprep.subr.bf16.mxu0 %v585
    %682 = vmatpush1.bf16.msra.mxu0 %v584
    %683 = vmatprep.subr.bf16.mxu0 %v592
    %684 = vmatpush1.bf16.msra.mxu0 %v591
    %685 = vmatprep.subr.bf16.mxu0 %v599
    %686 = vmatpush1.bf16.msra.mxu0 %v598
    %687 = vmatprep.subr.bf16.mxu0 %v606
    %688 = vmatpush1.bf16.msra.mxu0 %v605
    %689 = vmatprep.subr.bf16.mxu0 %v613
    %690 = vmatpush1.bf16.msra.mxu0 %v612
    %691 = vmatprep.subr.bf16.mxu0 0
    %692 = vmatpush1.bf16.msra.mxu0 0
    %693 = vmatprep.subr.bf16.mxu0 0
    %694 = vmatpush1.bf16.msra.mxu0 0
    %695 = vmatprep.subr.bf16.mxu0 0
    %696 = vmatpush1.bf16.msra.mxu0 0
    %697 = vmatprep.subr.bf16.mxu0 0
    %698 = vmatpush1.bf16.msra.mxu0 0
    %699 = vmatprep.subr.bf16.mxu0 0
    %700 = vmatpush1.bf16.msra.mxu0 0
    %701 = vmatprep.subr.bf16.mxu0 0
    %702 = vmatpush1.bf16.msra.mxu0 0
    %703 = vmatprep.subr.bf16.mxu0 0
    %704 = vmatpush1.bf16.msra.mxu0 0
    %705 = vmatprep.subr.bf16.mxu0 0
    %706 = vmatpush1.bf16.msra.mxu0 0
    %707 = vmatprep.mubr.bf16.mxu0 0
    %708 = vmatmul.mubr.bf16.gmra.mrb[0].mxu0 %v285
    %v709 = vpop.f32.mrb[0].mxu0
    %v710 = vadd.f32 %v355, %v709
    %v711 = vpop.f32.mrb[0].mxu0
    %v712 = vadd.f32 %v359, %v711
    %v713 = vpop.f32.mrb[0].mxu0
    %v714 = vpop.f32.mrb[0].mxu0
    %715 = vdwg.mxu0
    %716 = vmatprep.subr.bf16.mxu0 %v566
    %717 = vmatpush1.bf16.msra.mxu0 %v565
    %718 = vmatprep.subr.bf16.mxu0 %v573
    %719 = vmatpush1.bf16.msra.mxu0 %v572
    %720 = vmatprep.subr.bf16.mxu0 %v580
    %721 = vmatpush1.bf16.msra.mxu0 %v579
    %722 = vmatprep.subr.bf16.mxu0 %v587
    %723 = vmatpush1.bf16.msra.mxu0 %v586
    %724 = vmatprep.subr.bf16.mxu0 %v594
    %725 = vmatpush1.bf16.msra.mxu0 %v593
    %726 = vmatprep.subr.bf16.mxu0 %v601
    %727 = vmatpush1.bf16.msra.mxu0 %v600
    %728 = vmatprep.subr.bf16.mxu0 %v608
    %729 = vmatpush1.bf16.msra.mxu0 %v607
    %730 = vmatprep.subr.bf16.mxu0 %v615
    %731 = vmatpush1.bf16.msra.mxu0 %v614
    %732 = vmatprep.subr.bf16.mxu0 0
    %733 = vmatpush1.bf16.msra.mxu0 0
    %734 = vmatprep.subr.bf16.mxu0 0
    %735 = vmatpush1.bf16.msra.mxu0 0
    %736 = vmatprep.subr.bf16.mxu0 0
    %737 = vmatpush1.bf16.msra.mxu0 0
    %738 = vmatprep.subr.bf16.mxu0 0
    %739 = vmatpush1.bf16.msra.mxu0 0
    %740 = vmatprep.subr.bf16.mxu0 0
    %741 = vmatpush1.bf16.msra.mxu0 0
    %742 = vmatprep.subr.bf16.mxu0 0
    %743 = vmatpush1.bf16.msra.mxu0 0
    %744 = vmatprep.subr.bf16.mxu0 0
    %745 = vmatpush1.bf16.msra.mxu0 0
    %746 = vmatprep.subr.bf16.mxu0 0
    %747 = vmatpush1.bf16.msra.mxu0 0
    %748 = vmatprep.mubr.bf16.mxu0 0
    %749 = vmatmul.mubr.bf16.gmra.mrb[0].mxu0 %v285
    %v750 = vpop.f32.mrb[0].mxu0
    %v751 = vadd.f32 %v363, %v750
    %v752 = vpop.f32.mrb[0].mxu0
    %v753 = vadd.f32 %v367, %v752
    %v754 = vpop.f32.mrb[0].mxu0
    %v755 = vpop.f32.mrb[0].mxu0
    %756 = vdwg.mxu0
    %757 = vmatprep.subr.bf16.mxu0 %v568
    %758 = vmatpush1.bf16.msra.mxu0 %v567
    %759 = vmatprep.subr.bf16.mxu0 %v575
    %760 = vmatpush1.bf16.msra.mxu0 %v574
    %761 = vmatprep.subr.bf16.mxu0 %v582
    %762 = vmatpush1.bf16.msra.mxu0 %v581
    %763 = vmatprep.subr.bf16.mxu0 %v589
    %764 = vmatpush1.bf16.msra.mxu0 %v588
    %765 = vmatprep.subr.bf16.mxu0 %v596
    %766 = vmatpush1.bf16.msra.mxu0 %v595
    %767 = vmatprep.subr.bf16.mxu0 %v603
    %768 = vmatpush1.bf16.msra.mxu0 %v602
    %769 = vmatprep.subr.bf16.mxu0 %v610
    %770 = vmatpush1.bf16.msra.mxu0 %v609
    %771 = vmatprep.subr.bf16.mxu0 %v617
    %772 = vmatpush1.bf16.msra.mxu0 %v616
    %773 = vmatprep.subr.bf16.mxu0 0
    %774 = vmatpush1.bf16.msra.mxu0 0
    %775 = vmatprep.subr.bf16.mxu0 0
    %776 = vmatpush1.bf16.msra.mxu0 0
    %777 = vmatprep.subr.bf16.mxu0 0
    %778 = vmatpush1.bf16.msra.mxu0 0
    %779 = vmatprep.subr.bf16.mxu0 0
    %780 = vmatpush1.bf16.msra.mxu0 0
    %781 = vmatprep.subr.bf16.mxu0 0
    %782 = vmatpush1.bf16.msra.mxu0 0
    %783 = vmatprep.subr.bf16.mxu0 0
    %784 = vmatpush1.bf16.msra.mxu0 0
    %785 = vmatprep.subr.bf16.mxu0 0
    %786 = vmatpush1.bf16.msra.mxu0 0
    %787 = vmatprep.subr.bf16.mxu0 0
    %788 = vmatpush1.bf16.msra.mxu0 0
    %789 = vmatprep.mubr.bf16.mxu0 0
    %790 = vmatmul.mubr.bf16.gmra.mrb[0].mxu0 %v285
    %v791 = vpop.f32.mrb[0].mxu0
    %v792 = vadd.f32 %v371, %v791
    %v793 = vpop.f32.mrb[0].mxu0
    %v794 = vadd.f32 %v375, %v793
    %v795 = vpop.f32.mrb[0].mxu0
    %v796 = vpop.f32.mrb[0].mxu0
    %797 = vdwg.mxu0
    %798 = vmatprep.subr.bf16.mxu0 0
    %799 = vmatpush1.bf16.msra.mxu0 %v569
    %800 = vmatprep.subr.bf16.mxu0 0
    %801 = vmatpush1.bf16.msra.mxu0 %v576
    %802 = vmatprep.subr.bf16.mxu0 0
    %803 = vmatpush1.bf16.msra.mxu0 %v583
    %804 = vmatprep.subr.bf16.mxu0 0
    %805 = vmatpush1.bf16.msra.mxu0 %v590
    %806 = vmatprep.subr.bf16.mxu0 0
    %807 = vmatpush1.bf16.msra.mxu0 %v597
    %808 = vmatprep.subr.bf16.mxu0 0
    %809 = vmatpush1.bf16.msra.mxu0 %v604
    %810 = vmatprep.subr.bf16.mxu0 0
    %811 = vmatpush1.bf16.msra.mxu0 %v611
    %812 = vmatprep.subr.bf16.mxu0 0
    %813 = vmatpush1.bf16.msra.mxu0 %v618
    %814 = vmatprep.subr.bf16.mxu0 0
    %815 = vmatpush1.bf16.msra.mxu0 0
    %816 = vmatprep.subr.bf16.mxu0 0
    %817 = vmatpush1.bf16.msra.mxu0 0
    %818 = vmatprep.subr.bf16.mxu0 0
    %819 = vmatpush1.bf16.msra.mxu0 0
    %820 = vmatprep.subr.bf16.mxu0 0
    %821 = vmatpush1.bf16.msra.mxu0 0
    %822 = vmatprep.subr.bf16.mxu0 0
    %823 = vmatpush1.bf16.msra.mxu0 0
    %824 = vmatprep.subr.bf16.mxu0 0
    %825 = vmatpush1.bf16.msra.mxu0 0
    %826 = vmatprep.subr.bf16.mxu0 0
    %827 = vmatpush1.bf16.msra.mxu0 0
    %828 = vmatprep.subr.bf16.mxu0 0
    %829 = vmatpush1.bf16.msra.mxu0 0
    %830 = vmatprep.mubr.bf16.mxu0 0
    %831 = vmatmul.mubr.bf16.gmra.mrb[0].mxu0 %v285
    %v832 = vpop.f32.mrb[0].mxu0
    %v833 = vadd.f32 %v379, %v832
    %v834 = vpop.f32.mrb[0].mxu0
    %v835 = vpop.f32.mrb[0].mxu0
    %v836 = vpop.f32.mrb[0].mxu0
    %837 = vdwg.mxu0
    %v838 = vpack.c.bf16 %v46, %v46
    %v839 = vld [vmem:[#allocation2 + $0x24] sm:$0xf]
    %v840 = vld [vmem:[#allocation2 + $0xc4] sm:$0xf]
    %v841 = vld [vmem:[#allocation2 + $0x164] sm:$0xf]
    %v842 = vld [vmem:[#allocation2 + $0x204] sm:$0xf]
    %v843 = vld [vmem:[#allocation2 + $0x2a4] sm:$0xf]
    %v844 = vld [vmem:[#allocation2 + $0x344] sm:$0xf]
    %v845 = vld [vmem:[#allocation2 + $0x3e4] sm:$0xf]
    %v846 = vld [vmem:[#allocation2 + $0x484] sm:$0xf]
    %v847 = vld [vmem:[#allocation2 + $0x524] sm:$0xf]
    %v848 = vld [vmem:[#allocation2 + $0x5c4] sm:$0xf]
    %v849 = vld [vmem:[#allocation2 + $0x664] sm:$0xf]
    %v850 = vld [vmem:[#allocation2 + $0x704] sm:$0xf]
    %v851 = vld [vmem:[#allocation2 + $0x7a4] sm:$0xf]
    %v852 = vld [vmem:[#allocation2 + $0x844] sm:$0xf]
    %v853 = vld [vmem:[#allocation2 + $0x8e4] sm:$0xf]
    %v854 = vld [vmem:[#allocation2 + $0x984] sm:$0xf]
    %v855 = vld [vmem:[#allocation5 + $0x9] sm:$0x1]
    %v857 = vlaneseq
    %v858 = vshrl.u32 %v857, 7
    %v859 = vsub.s32 0, %v858
    %v860 = vrot.slane %v855, %v859
    %v878 = vunpack.c.l.b16 %v839
    %v879 = vunpack.c.l.b16 %v840
    %v880 = vunpack.c.l.b16 %v841
    %v881 = vunpack.c.l.b16 %v842
    %v882 = vunpack.c.l.b16 %v843
    %v883 = vunpack.c.l.b16 %v844
    %v884 = vunpack.c.l.b16 %v845
    %v885 = vunpack.c.l.b16 %v846
    %v886 = vunpack.c.l.b16 %v847
    %v887 = vunpack.c.l.b16 %v848
    %v888 = vunpack.c.l.b16 %v849
    %v889 = vunpack.c.l.b16 %v850
    %v890 = vunpack.c.l.b16 %v851
    %v891 = vunpack.c.l.b16 %v852
    %v892 = vunpack.c.l.b16 %v853
    %v893 = vunpack.c.l.b16 %v854
    %v894 = vpack.c.b16 %v879, %v878
    %v895 = vpack.c.b16 %v881, %v880
    %v896 = vpack.c.b16 %v883, %v882
    %v897 = vpack.c.b16 %v885, %v884
    %v898 = vpack.c.b16 %v887, %v886
    %v899 = vpack.c.b16 %v889, %v888
    %v900 = vpack.c.b16 %v891, %v890
    %v901 = vpack.c.b16 %v893, %v892
    %910 = vmatprep.subr.bf16.mxu0 0
    %911 = vmatpush1.bf16.msra.mxu0 %v894
    %912 = vmatprep.subr.bf16.mxu0 0
    %913 = vmatpush1.bf16.msra.mxu0 %v895
    %914 = vmatprep.subr.bf16.mxu0 0
    %915 = vmatpush1.bf16.msra.mxu0 %v896
    %916 = vmatprep.subr.bf16.mxu0 0
    %917 = vmatpush1.bf16.msra.mxu0 %v897
    %918 = vmatprep.subr.bf16.mxu0 0
    %919 = vmatpush1.bf16.msra.mxu0 %v898
    %920 = vmatprep.subr.bf16.mxu0 0
    %921 = vmatpush1.bf16.msra.mxu0 %v899
    %922 = vmatprep.subr.bf16.mxu0 0
    %923 = vmatpush1.bf16.msra.mxu0 %v900
    %924 = vmatprep.subr.bf16.mxu0 0
    %925 = vmatpush1.bf16.msra.mxu0 %v901
    %926 = vmatprep.subr.bf16.mxu0 0
    %927 = vmatpush1.bf16.msra.mxu0 0
    %928 = vmatprep.subr.bf16.mxu0 0
    %929 = vmatpush1.bf16.msra.mxu0 0
    %930 = vmatprep.subr.bf16.mxu0 0
    %931 = vmatpush1.bf16.msra.mxu0 0
    %932 = vmatprep.subr.bf16.mxu0 0
    %933 = vmatpush1.bf16.msra.mxu0 0
    %934 = vmatprep.subr.bf16.mxu0 0
    %935 = vmatpush1.bf16.msra.mxu0 0
    %936 = vmatprep.subr.bf16.mxu0 0
    %937 = vmatpush1.bf16.msra.mxu0 0
    %938 = vmatprep.subr.bf16.mxu0 0
    %939 = vmatpush1.bf16.msra.mxu0 0
    %940 = vmatprep.subr.bf16.mxu0 0
    %941 = vmatpush1.bf16.msra.mxu0 0
    %942 = vmatprep.mubr.bf16.mxu0 0
    %943 = vmatmul.mubr.bf16.gmra.mrb[0].mxu0 %v838
    %v944 = vpop.f32.mrb[0].mxu0
    %v945 = vadd.f32 %v860, %v944
    %v946 = vpop.f32.mrb[0].mxu0
    %v947 = vpop.f32.mrb[0].mxu0
    %v948 = vpop.f32.mrb[0].mxu0
    %949 = vdwg.mxu0
    %v950 = vxor.u32 %v945, 2147483648
    %v951 = vmul.f32 %v950, 1.442695
    %v952 = vpow.pop %v951
    %v953 = vadd.f32 %v952, 1.0
    %v954 = vrcp.pop %v953
    %v955 = vmul.f32 1.0, %v954
    %v956 = vmul.f32 %v945, %v955
    %v957 = vpack.c.bf16 %v956, %v956
    %v958 = vld [vmem:[#allocation2 + $0x28] sm:$0xf]
    %v959 = vld [vmem:[#allocation2 + $0xc8] sm:$0xf]
    %v960 = vld [vmem:[#allocation2 + $0x168] sm:$0xf]
    %v961 = vld [vmem:[#allocation2 + $0x208] sm:$0xf]
    %v962 = vld [vmem:[#allocation2 + $0x2a8] sm:$0xf]
    %v963 = vld [vmem:[#allocation2 + $0x348] sm:$0xf]
    %v964 = vld [vmem:[#allocation2 + $0x3e8] sm:$0xf]
    %v965 = vld [vmem:[#allocation2 + $0x488] sm:$0xf]
    %v966 = vld [vmem:[#allocation2 + $0x528] sm:$0xf]
    %v967 = vld [vmem:[#allocation2 + $0x5c8] sm:$0xf]
    %v968 = vld [vmem:[#allocation2 + $0x668] sm:$0xf]
    %v969 = vld [vmem:[#allocation2 + $0x708] sm:$0xf]
    %v970 = vld [vmem:[#allocation2 + $0x7a8] sm:$0xf]
    %v971 = vld [vmem:[#allocation2 + $0x848] sm:$0xf]
    %v972 = vld [vmem:[#allocation2 + $0x8e8] sm:$0xf]
    %v973 = vld [vmem:[#allocation2 + $0x988] sm:$0xf]
    %v974 = vld [vmem:[#allocation5 + $0xa] sm:$0x1]
    %v976 = vlaneseq
    %v977 = vshrl.u32 %v976, 7
    %v978 = vsub.s32 0, %v977
    %v979 = vrot.slane %v974, %v978
    %v997 = vunpack.c.l.b16 %v958
    %v998 = vunpack.c.l.b16 %v959
    %v999 = vunpack.c.l.b16 %v960
    %v1000 = vunpack.c.l.b16 %v961
    %v1001 = vunpack.c.l.b16 %v962
    %v1002 = vunpack.c.l.b16 %v963
    %v1003 = vunpack.c.l.b16 %v964
    %v1004 = vunpack.c.l.b16 %v965
    %v1005 = vunpack.c.l.b16 %v966
    %v1006 = vunpack.c.l.b16 %v967
    %v1007 = vunpack.c.l.b16 %v968
    %v1008 = vunpack.c.l.b16 %v969
    %v1009 = vunpack.c.l.b16 %v970
    %v1010 = vunpack.c.l.b16 %v971
    %v1011 = vunpack.c.l.b16 %v972
    %v1012 = vunpack.c.l.b16 %v973
    %v1013 = vpack.c.b16 %v998, %v997
    %v1014 = vpack.c.b16 %v1000, %v999
    %v1015 = vpack.c.b16 %v1002, %v1001
    %v1016 = vpack.c.b16 %v1004, %v1003
    %v1017 = vpack.c.b16 %v1006, %v1005
    %v1018 = vpack.c.b16 %v1008, %v1007
    %v1019 = vpack.c.b16 %v1010, %v1009
    %v1020 = vpack.c.b16 %v1012, %v1011
    %1029 = vmatprep.subr.bf16.mxu0 0
    %1030 = vmatpush1.bf16.msra.mxu0 %v1013
    %1031 = vmatprep.subr.bf16.mxu0 0
    %1032 = vmatpush1.bf16.msra.mxu0 %v1014
    %1033 = vmatprep.subr.bf16.mxu0 0
    %1034 = vmatpush1.bf16.msra.mxu0 %v1015
    %1035 = vmatprep.subr.bf16.mxu0 0
    %1036 = vmatpush1.bf16.msra.mxu0 %v1016
    %1037 = vmatprep.subr.bf16.mxu0 0
    %1038 = vmatpush1.bf16.msra.mxu0 %v1017
    %1039 = vmatprep.subr.bf16.mxu0 0
    %1040 = vmatpush1.bf16.msra.mxu0 %v1018
    %1041 = vmatprep.subr.bf16.mxu0 0
    %1042 = vmatpush1.bf16.msra.mxu0 %v1019
    %1043 = vmatprep.subr.bf16.mxu0 0
    %1044 = vmatpush1.bf16.msra.mxu0 %v1020
    %1045 = vmatprep.subr.bf16.mxu0 0
    %1046 = vmatpush1.bf16.msra.mxu0 0
    %1047 = vmatprep.subr.bf16.mxu0 0
    %1048 = vmatpush1.bf16.msra.mxu0 0
    %1049 = vmatprep.subr.bf16.mxu0 0
    %1050 = vmatpush1.bf16.msra.mxu0 0
    %1051 = vmatprep.subr.bf16.mxu0 0
    %1052 = vmatpush1.bf16.msra.mxu0 0
    %1053 = vmatprep.subr.bf16.mxu0 0
    %1054 = vmatpush1.bf16.msra.mxu0 0
    %1055 = vmatprep.subr.bf16.mxu0 0
    %1056 = vmatpush1.bf16.msra.mxu0 0
    %1057 = vmatprep.subr.bf16.mxu0 0
    %1058 = vmatpush1.bf16.msra.mxu0 0
    %1059 = vmatprep.subr.bf16.mxu0 0
    %1060 = vmatpush1.bf16.msra.mxu0 0
    %1061 = vmatprep.mubr.bf16.mxu0 0
    %1062 = vmatmul.mubr.bf16.gmra.mrb[0].mxu0 %v957
    %v1063 = vpop.f32.mrb[0].mxu0
    %v1064 = vadd.f32 %v979, %v1063
    %v1065 = vpop.f32.mrb[0].mxu0
    %v1066 = vpop.f32.mrb[0].mxu0
    %v1067 = vpop.f32.mrb[0].mxu0
    %1068 = vdwg.mxu0
    %v1069 = vxor.u32 %v1064, 2147483648
    %v1070 = vmul.f32 %v1069, 1.442695
    %v1071 = vpow.pop %v1070
    %v1072 = vadd.f32 %v1071, 1.0
    %v1073 = vrcp.pop %v1072
    %v1074 = vmul.f32 1.0, %v1073
    %v1075 = vmul.f32 %v1064, %v1074
    %v1076 = vpack.c.bf16 %v42, %v42
    %v1077 = vld [vmem:[#allocation2 + $0x2c] sm:$0xf]
    %v1078 = vld [vmem:[#allocation2 + $0xcc] sm:$0xf]
    %v1079 = vld [vmem:[#allocation2 + $0x16c] sm:$0xf]
    %v1080 = vld [vmem:[#allocation2 + $0x20c] sm:$0xf]
    %v1081 = vld [vmem:[#allocation2 + $0x2ac] sm:$0xf]
    %v1082 = vld [vmem:[#allocation2 + $0x34c] sm:$0xf]
    %v1083 = vld [vmem:[#allocation2 + $0x3ec] sm:$0xf]
    %v1084 = vld [vmem:[#allocation2 + $0x48c] sm:$0xf]
    %v1085 = vld [vmem:[#allocation2 + $0x52c] sm:$0xf]
    %v1086 = vld [vmem:[#allocation2 + $0x5cc] sm:$0xf]
    %v1087 = vld [vmem:[#allocation2 + $0x66c] sm:$0xf]
    %v1088 = vld [vmem:[#allocation2 + $0x70c] sm:$0xf]
    %v1089 = vld [vmem:[#allocation2 + $0x7ac] sm:$0xf]
    %v1090 = vld [vmem:[#allocation2 + $0x84c] sm:$0xf]
    %v1091 = vld [vmem:[#allocation2 + $0x8ec] sm:$0xf]
    %v1092 = vld [vmem:[#allocation2 + $0x98c] sm:$0xf]
    %v1093 = vld [vmem:[#allocation5 + $0xb] sm:$0x1]
    %v1095 = vlaneseq
    %v1096 = vshrl.u32 %v1095, 7
    %v1097 = vsub.s32 0, %v1096
    %v1098 = vrot.slane %v1093, %v1097
    %v1116 = vunpack.c.l.b16 %v1077
    %v1117 = vunpack.c.l.b16 %v1078
    %v1118 = vunpack.c.l.b16 %v1079
    %v1119 = vunpack.c.l.b16 %v1080
    %v1120 = vunpack.c.l.b16 %v1081
    %v1121 = vunpack.c.l.b16 %v1082
    %v1122 = vunpack.c.l.b16 %v1083
    %v1123 = vunpack.c.l.b16 %v1084
    %v1124 = vunpack.c.l.b16 %v1085
    %v1125 = vunpack.c.l.b16 %v1086
    %v1126 = vunpack.c.l.b16 %v1087
    %v1127 = vunpack.c.l.b16 %v1088
    %v1128 = vunpack.c.l.b16 %v1089
    %v1129 = vunpack.c.l.b16 %v1090
    %v1130 = vunpack.c.l.b16 %v1091
    %v1131 = vunpack.c.l.b16 %v1092
    %v1132 = vpack.c.b16 %v1117, %v1116
    %v1133 = vpack.c.b16 %v1119, %v1118
    %v1134 = vpack.c.b16 %v1121, %v1120
    %v1135 = vpack.c.b16 %v1123, %v1122
    %v1136 = vpack.c.b16 %v1125, %v1124
    %v1137 = vpack.c.b16 %v1127, %v1126
    %v1138 = vpack.c.b16 %v1129, %v1128
    %v1139 = vpack.c.b16 %v1131, %v1130
    %1148 = vmatprep.subr.bf16.mxu0 0
    %1149 = vmatpush1.bf16.msra.mxu0 %v1132
    %1150 = vmatprep.subr.bf16.mxu0 0
    %1151 = vmatpush1.bf16.msra.mxu0 %v1133
    %1152 = vmatprep.subr.bf16.mxu0 0
    %1153 = vmatpush1.bf16.msra.mxu0 %v1134
    %1154 = vmatprep.subr.bf16.mxu0 0
    %1155 = vmatpush1.bf16.msra.mxu0 %v1135
    %1156 = vmatprep.subr.bf16.mxu0 0
    %1157 = vmatpush1.bf16.msra.mxu0 %v1136
    %1158 = vmatprep.subr.bf16.mxu0 0
    %1159 = vmatpush1.bf16.msra.mxu0 %v1137
    %1160 = vmatprep.subr.bf16.mxu0 0
    %1161 = vmatpush1.bf16.msra.mxu0 %v1138
    %1162 = vmatprep.subr.bf16.mxu0 0
    %1163 = vmatpush1.bf16.msra.mxu0 %v1139
    %1164 = vmatprep.subr.bf16.mxu0 0
    %1165 = vmatpush1.bf16.msra.mxu0 0
    %1166 = vmatprep.subr.bf16.mxu0 0
    %1167 = vmatpush1.bf16.msra.mxu0 0
    %1168 = vmatprep.subr.bf16.mxu0 0
    %1169 = vmatpush1.bf16.msra.mxu0 0
    %1170 = vmatprep.subr.bf16.mxu0 0
    %1171 = vmatpush1.bf16.msra.mxu0 0
    %1172 = vmatprep.subr.bf16.mxu0 0
    %1173 = vmatpush1.bf16.msra.mxu0 0
    %1174 = vmatprep.subr.bf16.mxu0 0
    %1175 = vmatpush1.bf16.msra.mxu0 0
    %1176 = vmatprep.subr.bf16.mxu0 0
    %1177 = vmatpush1.bf16.msra.mxu0 0
    %1178 = vmatprep.subr.bf16.mxu0 0
    %1179 = vmatpush1.bf16.msra.mxu0 0
    %1180 = vmatprep.mubr.bf16.mxu0 0
    %1181 = vmatmul.mubr.bf16.gmra.mrb[0].mxu0 %v1076
    %v1182 = vpop.f32.mrb[0].mxu0
    %v1183 = vadd.f32 %v1098, %v1182
    %v1184 = vpop.f32.mrb[0].mxu0
    %v1185 = vpop.f32.mrb[0].mxu0
    %v1186 = vpop.f32.mrb[0].mxu0
    %1187 = vdwg.mxu0
    %v1188 = vpack.c.bf16 %v1183, %v1183
    %v1189 = vld [vmem:[#allocation2 + $0x30] sm:$0xf]
    %v1190 = vld [vmem:[#allocation2 + $0xd0] sm:$0xf]
    %v1191 = vld [vmem:[#allocation2 + $0x170] sm:$0xf]
    %v1192 = vld [vmem:[#allocation2 + $0x210] sm:$0xf]
    %v1193 = vld [vmem:[#allocation2 + $0x2b0] sm:$0xf]
    %v1194 = vld [vmem:[#allocation2 + $0x350] sm:$0xf]
    %v1195 = vld [vmem:[#allocation2 + $0x3f0] sm:$0xf]
    %v1196 = vld [vmem:[#allocation2 + $0x490] sm:$0xf]
    %v1197 = vld [vmem:[#allocation2 + $0x530] sm:$0xf]
    %v1198 = vld [vmem:[#allocation2 + $0x5d0] sm:$0xf]
    %v1199 = vld [vmem:[#allocation2 + $0x670] sm:$0xf]
    %v1200 = vld [vmem:[#allocation2 + $0x710] sm:$0xf]
    %v1201 = vld [vmem:[#allocation2 + $0x7b0] sm:$0xf]
    %v1202 = vld [vmem:[#allocation2 + $0x850] sm:$0xf]
    %v1203 = vld [vmem:[#allocation2 + $0x8f0] sm:$0xf]
    %v1204 = vld [vmem:[#allocation2 + $0x990] sm:$0xf]
    %v1205 = vld [vmem:[#allocation5 + $0xc] sm:$0x1]
    %v1207 = vlaneseq
    %v1208 = vshrl.u32 %v1207, 7
    %v1209 = vsub.s32 0, %v1208
    %v1210 = vrot.slane %v1205, %v1209
    %v1228 = vunpack.c.l.b16 %v1189
    %v1229 = vunpack.c.l.b16 %v1190
    %v1230 = vunpack.c.l.b16 %v1191
    %v1231 = vunpack.c.l.b16 %v1192
    %v1232 = vunpack.c.l.b16 %v1193
    %v1233 = vunpack.c.l.b16 %v1194
    %v1234 = vunpack.c.l.b16 %v1195
    %v1235 = vunpack.c.l.b16 %v1196
    %v1236 = vunpack.c.l.b16 %v1197
    %v1237 = vunpack.c.l.b16 %v1198
    %v1238 = vunpack.c.l.b16 %v1199
    %v1239 = vunpack.c.l.b16 %v1200
    %v1240 = vunpack.c.l.b16 %v1201
    %v1241 = vunpack.c.l.b16 %v1202
    %v1242 = vunpack.c.l.b16 %v1203
    %v1243 = vunpack.c.l.b16 %v1204
    %v1244 = vpack.c.b16 %v1229, %v1228
    %v1245 = vpack.c.b16 %v1231, %v1230
    %v1246 = vpack.c.b16 %v1233, %v1232
    %v1247 = vpack.c.b16 %v1235, %v1234
    %v1248 = vpack.c.b16 %v1237, %v1236
    %v1249 = vpack.c.b16 %v1239, %v1238
    %v1250 = vpack.c.b16 %v1241, %v1240
    %v1251 = vpack.c.b16 %v1243, %v1242
    %1260 = vmatprep.subr.bf16.mxu0 0
    %1261 = vmatpush1.bf16.msra.mxu0 %v1244
    %1262 = vmatprep.subr.bf16.mxu0 0
    %1263 = vmatpush1.bf16.msra.mxu0 %v1245
    %1264 = vmatprep.subr.bf16.mxu0 0
    %1265 = vmatpush1.bf16.msra.mxu0 %v1246
    %1266 = vmatprep.subr.bf16.mxu0 0
    %1267 = vmatpush1.bf16.msra.mxu0 %v1247
    %1268 = vmatprep.subr.bf16.mxu0 0
    %1269 = vmatpush1.bf16.msra.mxu0 %v1248
    %1270 = vmatprep.subr.bf16.mxu0 0
    %1271 = vmatpush1.bf16.msra.mxu0 %v1249
    %1272 = vmatprep.subr.bf16.mxu0 0
    %1273 = vmatpush1.bf16.msra.mxu0 %v1250
    %1274 = vmatprep.subr.bf16.mxu0 0
    %1275 = vmatpush1.bf16.msra.mxu0 %v1251
    %1276 = vmatprep.subr.bf16.mxu0 0
    %1277 = vmatpush1.bf16.msra.mxu0 0
    %1278 = vmatprep.subr.bf16.mxu0 0
    %1279 = vmatpush1.bf16.msra.mxu0 0
    %1280 = vmatprep.subr.bf16.mxu0 0
    %1281 = vmatpush1.bf16.msra.mxu0 0
    %1282 = vmatprep.subr.bf16.mxu0 0
    %1283 = vmatpush1.bf16.msra.mxu0 0
    %1284 = vmatprep.subr.bf16.mxu0 0
    %1285 = vmatpush1.bf16.msra.mxu0 0
    %1286 = vmatprep.subr.bf16.mxu0 0
    %1287 = vmatpush1.bf16.msra.mxu0 0
    %1288 = vmatprep.subr.bf16.mxu0 0
    %1289 = vmatpush1.bf16.msra.mxu0 0
    %1290 = vmatprep.subr.bf16.mxu0 0
    %1291 = vmatpush1.bf16.msra.mxu0 0
    %1292 = vmatprep.mubr.bf16.mxu0 0
    %1293 = vmatmul.mubr.bf16.gmra.mrb[0].mxu0 %v1188
    %v1294 = vpop.f32.mrb[0].mxu0
    %v1295 = vadd.f32 %v1210, %v1294
    %v1296 = vpop.f32.mrb[0].mxu0
    %v1297 = vpop.f32.mrb[0].mxu0
    %v1298 = vpop.f32.mrb[0].mxu0
    %1299 = vdwg.mxu0
    %v1300 = vxor.u32 %v1295, 2147483648
    %v1301 = vmul.f32 %v1300, 1.442695
    %v1302 = vpow.pop %v1301
    %v1303 = vadd.f32 %v1302, 1.0
    %v1304 = vrcp.pop %v1303
    %v1305 = vmul.f32 1.0, %v1304
    %v1306 = vmul.f32 %v1295, %v1305
    %v1307 = vadd.f32 %v1306, %v710
    %v1308 = vpack.c.bf16 %v1307, %v1307
    %v1309 = vld [vmem:[#allocation2 + $0x34] sm:$0xf]
    %v1310 = vld [vmem:[#allocation2 + $0xd4] sm:$0xf]
    %v1311 = vld [vmem:[#allocation2 + $0x174] sm:$0xf]
    %v1312 = vld [vmem:[#allocation2 + $0x214] sm:$0xf]
    %v1313 = vld [vmem:[#allocation2 + $0x2b4] sm:$0xf]
    %v1314 = vld [vmem:[#allocation2 + $0x354] sm:$0xf]
    %v1315 = vld [vmem:[#allocation2 + $0x3f4] sm:$0xf]
    %v1316 = vld [vmem:[#allocation2 + $0x494] sm:$0xf]
    %v1317 = vld [vmem:[#allocation2 + $0x534] sm:$0xf]
    %v1318 = vld [vmem:[#allocation2 + $0x5d4] sm:$0xf]
    %v1319 = vld [vmem:[#allocation2 + $0x674] sm:$0xf]
    %v1320 = vld [vmem:[#allocation2 + $0x714] sm:$0xf]
    %v1321 = vld [vmem:[#allocation2 + $0x7b4] sm:$0xf]
    %v1322 = vld [vmem:[#allocation2 + $0x854] sm:$0xf]
    %v1323 = vld [vmem:[#allocation2 + $0x8f4] sm:$0xf]
    %v1324 = vld [vmem:[#allocation2 + $0x994] sm:$0xf]
    %v1325 = vld [vmem:[#allocation5 + $0xd] sm:$0x1]
    %v1327 = vlaneseq
    %v1328 = vshrl.u32 %v1327, 7
    %v1329 = vsub.s32 0, %v1328
    %v1330 = vrot.slane %v1325, %v1329
    %v1348 = vunpack.c.l.b16 %v1309
    %v1349 = vunpack.c.l.b16 %v1310
    %v1350 = vunpack.c.l.b16 %v1311
    %v1351 = vunpack.c.l.b16 %v1312
    %v1352 = vunpack.c.l.b16 %v1313
    %v1353 = vunpack.c.l.b16 %v1314
    %v1354 = vunpack.c.l.b16 %v1315
    %v1355 = vunpack.c.l.b16 %v1316
    %v1356 = vunpack.c.l.b16 %v1317
    %v1357 = vunpack.c.l.b16 %v1318
    %v1358 = vunpack.c.l.b16 %v1319
    %v1359 = vunpack.c.l.b16 %v1320
    %v1360 = vunpack.c.l.b16 %v1321
    %v1361 = vunpack.c.l.b16 %v1322
    %v1362 = vunpack.c.l.b16 %v1323
    %v1363 = vunpack.c.l.b16 %v1324
    %v1364 = vpack.c.b16 %v1349, %v1348
    %v1365 = vpack.c.b16 %v1351, %v1350
    %v1366 = vpack.c.b16 %v1353, %v1352
    %v1367 = vpack.c.b16 %v1355, %v1354
    %v1368 = vpack.c.b16 %v1357, %v1356
    %v1369 = vpack.c.b16 %v1359, %v1358
    %v1370 = vpack.c.b16 %v1361, %v1360
    %v1371 = vpack.c.b16 %v1363, %v1362
    %1380 = vmatprep.subr.bf16.mxu0 0
    %1381 = vmatpush1.bf16.msra.mxu0 %v1364
    %1382 = vmatprep.subr.bf16.mxu0 0
    %1383 = vmatpush1.bf16.msra.mxu0 %v1365
    %1384 = vmatprep.subr.bf16.mxu0 0
    %1385 = vmatpush1.bf16.msra.mxu0 %v1366
    %1386 = vmatprep.subr.bf16.mxu0 0
    %1387 = vmatpush1.bf16.msra.mxu0 %v1367
    %1388 = vmatprep.subr.bf16.mxu0 0
    %1389 = vmatpush1.bf16.msra.mxu0 %v1368
    %1390 = vmatprep.subr.bf16.mxu0 0
    %1391 = vmatpush1.bf16.msra.mxu0 %v1369
    %1392 = vmatprep.subr.bf16.mxu0 0
    %1393 = vmatpush1.bf16.msra.mxu0 %v1370
    %1394 = vmatprep.subr.bf16.mxu0 0
    %1395 = vmatpush1.bf16.msra.mxu0 %v1371
    %1396 = vmatprep.subr.bf16.mxu0 0
    %1397 = vmatpush1.bf16.msra.mxu0 0
    %1398 = vmatprep.subr.bf16.mxu0 0
    %1399 = vmatpush1.bf16.msra.mxu0 0
    %1400 = vmatprep.subr.bf16.mxu0 0
    %1401 = vmatpush1.bf16.msra.mxu0 0
    %1402 = vmatprep.subr.bf16.mxu0 0
    %1403 = vmatpush1.bf16.msra.mxu0 0
    %1404 = vmatprep.subr.bf16.mxu0 0
    %1405 = vmatpush1.bf16.msra.mxu0 0
    %1406 = vmatprep.subr.bf16.mxu0 0
    %1407 = vmatpush1.bf16.msra.mxu0 0
    %1408 = vmatprep.subr.bf16.mxu0 0
    %1409 = vmatpush1.bf16.msra.mxu0 0
    %1410 = vmatprep.subr.bf16.mxu0 0
    %1411 = vmatpush1.bf16.msra.mxu0 0
    %1412 = vmatprep.mubr.bf16.mxu0 0
    %1413 = vmatmul.mubr.bf16.gmra.mrb[0].mxu0 %v1308
    %v1414 = vpop.f32.mrb[0].mxu0
    %v1415 = vadd.f32 %v1330, %v1414
    %v1416 = vpop.f32.mrb[0].mxu0
    %v1417 = vpop.f32.mrb[0].mxu0
    %v1418 = vpop.f32.mrb[0].mxu0
    %1419 = vdwg.mxu0
    %v1420 = vxor.u32 %v1415, 2147483648
    %v1421 = vmul.f32 %v1420, 1.442695
    %v1422 = vpow.pop %v1421
    %v1423 = vadd.f32 %v1422, 1.0
    %v1424 = vrcp.pop %v1423
    %v1425 = vmul.f32 1.0, %v1424
    %v1426 = vmul.f32 %v1415, %v1425
    %v1427 = vadd.f32 %v1426, %v1183
    %v1428 = vpack.c.bf16 %v1427, %v1427
    %v1429 = vld [vmem:[#allocation2 + $0x38] sm:$0xff]
    %v1430 = vld [vmem:[#allocation2 + $0xd8] sm:$0xff]
    %v1431 = vld [vmem:[#allocation2 + $0x178] sm:$0xff]
    %v1432 = vld [vmem:[#allocation2 + $0x218] sm:$0xff]
    %v1433 = vld [vmem:[#allocation2 + $0x2b8] sm:$0xff]
    %v1434 = vld [vmem:[#allocation2 + $0x358] sm:$0xff]
    %v1435 = vld [vmem:[#allocation2 + $0x3f8] sm:$0xff]
    %v1436 = vld [vmem:[#allocation2 + $0x498] sm:$0xff]
    %v1437 = vld [vmem:[#allocation2 + $0x538] sm:$0xff]
    %v1438 = vld [vmem:[#allocation2 + $0x5d8] sm:$0xff]
    %v1439 = vld [vmem:[#allocation2 + $0x678] sm:$0xff]
    %v1440 = vld [vmem:[#allocation2 + $0x718] sm:$0xff]
    %v1441 = vld [vmem:[#allocation2 + $0x7b8] sm:$0xff]
    %v1442 = vld [vmem:[#allocation2 + $0x858] sm:$0xff]
    %v1443 = vld [vmem:[#allocation2 + $0x8f8] sm:$0xff]
    %v1444 = vld [vmem:[#allocation2 + $0x998] sm:$0xff]
    %v1445 = vld [vmem:[#allocation5 + $0xe] sm:$0x3]
    %v1447 = vlaneseq
    %v1448 = vshrl.u32 %v1447, 7
    %v1449 = vsub.s32 0, %v1448
    %v1450 = vrot.slane %v1445, %v1449
    %v1451 = vlaneseq
    %v1452 = vshrl.u32 %v1451, 7
    %v1453 = vsub.s32 1, %v1452
    %v1454 = vrot.slane %v1445, %v1453
    %v1473 = vunpack.c.l.b16 %v1429
    %v1474 = vunpack.c.h.b16 %v1429
    %v1475 = vunpack.c.l.b16 %v1430
    %v1476 = vunpack.c.h.b16 %v1430
    %v1477 = vunpack.c.l.b16 %v1431
    %v1478 = vunpack.c.h.b16 %v1431
    %v1479 = vunpack.c.l.b16 %v1432
    %v1480 = vunpack.c.h.b16 %v1432
    %v1481 = vunpack.c.l.b16 %v1433
    %v1482 = vunpack.c.h.b16 %v1433
    %v1483 = vunpack.c.l.b16 %v1434
    %v1484 = vunpack.c.h.b16 %v1434
    %v1485 = vunpack.c.l.b16 %v1435
    %v1486 = vunpack.c.h.b16 %v1435
    %v1487 = vunpack.c.l.b16 %v1436
    %v1488 = vunpack.c.h.b16 %v1436
    %v1489 = vunpack.c.l.b16 %v1437
    %v1490 = vunpack.c.h.b16 %v1437
    %v1491 = vunpack.c.l.b16 %v1438
    %v1492 = vunpack.c.h.b16 %v1438
    %v1493 = vunpack.c.l.b16 %v1439
    %v1494 = vunpack.c.h.b16 %v1439
    %v1495 = vunpack.c.l.b16 %v1440
    %v1496 = vunpack.c.h.b16 %v1440
    %v1497 = vunpack.c.l.b16 %v1441
    %v1498 = vunpack.c.h.b16 %v1441
    %v1499 = vunpack.c.l.b16 %v1442
    %v1500 = vunpack.c.h.b16 %v1442
    %v1501 = vunpack.c.l.b16 %v1443
    %v1502 = vunpack.c.h.b16 %v1443
    %v1503 = vunpack.c.l.b16 %v1444
    %v1504 = vunpack.c.h.b16 %v1444
    %v1505 = vpack.c.b16 %v1475, %v1473
    %v1506 = vpack.c.b16 %v1476, %v1474
    %v1507 = vpack.c.b16 %v1479, %v1477
    %v1508 = vpack.c.b16 %v1480, %v1478
    %v1509 = vpack.c.b16 %v1483, %v1481
    %v1510 = vpack.c.b16 %v1484, %v1482
    %v1511 = vpack.c.b16 %v1487, %v1485
    %v1512 = vpack.c.b16 %v1488, %v1486
    %v1513 = vpack.c.b16 %v1491, %v1489
    %v1514 = vpack.c.b16 %v1492, %v1490
    %v1515 = vpack.c.b16 %v1495, %v1493
    %v1516 = vpack.c.b16 %v1496, %v1494
    %v1517 = vpack.c.b16 %v1499, %v1497
    %v1518 = vpack.c.b16 %v1500, %v1498
    %v1519 = vpack.c.b16 %v1503, %v1501
    %v1520 = vpack.c.b16 %v1504, %v1502
    %1537 = vmatprep.subr.bf16.mxu0 %v1506
    %1538 = vmatpush1.bf16.msra.mxu0 %v1505
    %1539 = vmatprep.subr.bf16.mxu0 %v1508
    %1540 = vmatpush1.bf16.msra.mxu0 %v1507
    %1541 = vmatprep.subr.bf16.mxu0 %v1510
    %1542 = vmatpush1.bf16.msra.mxu0 %v1509
    %1543 = vmatprep.subr.bf16.mxu0 %v1512
    %1544 = vmatpush1.bf16.msra.mxu0 %v1511
    %1545 = vmatprep.subr.bf16.mxu0 %v1514
    %1546 = vmatpush1.bf16.msra.mxu0 %v1513
    %1547 = vmatprep.subr.bf16.mxu0 %v1516
    %1548 = vmatpush1.bf16.msra.mxu0 %v1515
    %1549 = vmatprep.subr.bf16.mxu0 %v1518
    %1550 = vmatpush1.bf16.msra.mxu0 %v1517
    %1551 = vmatprep.subr.bf16.mxu0 %v1520
    %1552 = vmatpush1.bf16.msra.mxu0 %v1519
    %1553 = vmatprep.subr.bf16.mxu0 0
    %1554 = vmatpush1.bf16.msra.mxu0 0
    %1555 = vmatprep.subr.bf16.mxu0 0
    %1556 = vmatpush1.bf16.msra.mxu0 0
    %1557 = vmatprep.subr.bf16.mxu0 0
    %1558 = vmatpush1.bf16.msra.mxu0 0
    %1559 = vmatprep.subr.bf16.mxu0 0
    %1560 = vmatpush1.bf16.msra.mxu0 0
    %1561 = vmatprep.subr.bf16.mxu0 0
    %1562 = vmatpush1.bf16.msra.mxu0 0
    %1563 = vmatprep.subr.bf16.mxu0 0
    %1564 = vmatpush1.bf16.msra.mxu0 0
    %1565 = vmatprep.subr.bf16.mxu0 0
    %1566 = vmatpush1.bf16.msra.mxu0 0
    %1567 = vmatprep.subr.bf16.mxu0 0
    %1568 = vmatpush1.bf16.msra.mxu0 0
    %1569 = vmatprep.mubr.bf16.mxu0 0
    %1570 = vmatmul.mubr.bf16.gmra.mrb[0].mxu0 %v1428
    %v1571 = vpop.f32.mrb[0].mxu0
    %v1572 = vadd.f32 %v1450, %v1571
    %v1573 = vpop.f32.mrb[0].mxu0
    %v1574 = vadd.f32 %v1454, %v1573
    %v1575 = vpop.f32.mrb[0].mxu0
    %v1576 = vpop.f32.mrb[0].mxu0
    %1577 = vdwg.mxu0
    %v1578 = vxor.u32 %v1572, 2147483648
    %v1579 = vmul.f32 %v1578, 1.442695
    %v1580 = vpow.pop %v1579
    %v1581 = vadd.f32 %v1580, 1.0
    %v1582 = vrcp.pop %v1581
    %v1583 = vmul.f32 1.0, %v1582
    %v1584 = vmul.f32 %v1572, %v1583
    %v1585 = vadd.f32 %v1584, %v712
    %v1586 = vpack.c.bf16 %v1585, %v1585
    %v1587 = vld [vmem:[#allocation2 + $0x40] sm:$0xf]
    %v1588 = vld [vmem:[#allocation2 + $0xe0] sm:$0xf]
    %v1589 = vld [vmem:[#allocation2 + $0x180] sm:$0xf]
    %v1590 = vld [vmem:[#allocation2 + $0x220] sm:$0xf]
    %v1591 = vld [vmem:[#allocation2 + $0x2c0] sm:$0xf]
    %v1592 = vld [vmem:[#allocation2 + $0x360] sm:$0xf]
    %v1593 = vld [vmem:[#allocation2 + $0x400] sm:$0xf]
    %v1594 = vld [vmem:[#allocation2 + $0x4a0] sm:$0xf]
    %v1595 = vld [vmem:[#allocation2 + $0x540] sm:$0xf]
    %v1596 = vld [vmem:[#allocation2 + $0x5e0] sm:$0xf]
    %v1597 = vld [vmem:[#allocation2 + $0x680] sm:$0xf]
    %v1598 = vld [vmem:[#allocation2 + $0x720] sm:$0xf]
    %v1599 = vld [vmem:[#allocation2 + $0x7c0] sm:$0xf]
    %v1600 = vld [vmem:[#allocation2 + $0x860] sm:$0xf]
    %v1601 = vld [vmem:[#allocation2 + $0x900] sm:$0xf]
    %v1602 = vld [vmem:[#allocation2 + $0x9a0] sm:$0xf]
    %v1603 = vld [vmem:[#allocation5 + $0x10] sm:$0x1]
    %v1605 = vlaneseq
    %v1606 = vshrl.u32 %v1605, 7
    %v1607 = vsub.s32 0, %v1606
    %v1608 = vrot.slane %v1603, %v1607
    %v1626 = vunpack.c.l.b16 %v1587
    %v1627 = vunpack.c.l.b16 %v1588
    %v1628 = vunpack.c.l.b16 %v1589
    %v1629 = vunpack.c.l.b16 %v1590
    %v1630 = vunpack.c.l.b16 %v1591
    %v1631 = vunpack.c.l.b16 %v1592
    %v1632 = vunpack.c.l.b16 %v1593
    %v1633 = vunpack.c.l.b16 %v1594
    %v1634 = vunpack.c.l.b16 %v1595
    %v1635 = vunpack.c.l.b16 %v1596
    %v1636 = vunpack.c.l.b16 %v1597
    %v1637 = vunpack.c.l.b16 %v1598
    %v1638 = vunpack.c.l.b16 %v1599
    %v1639 = vunpack.c.l.b16 %v1600
    %v1640 = vunpack.c.l.b16 %v1601
    %v1641 = vunpack.c.l.b16 %v1602
    %v1642 = vpack.c.b16 %v1627, %v1626
    %v1643 = vpack.c.b16 %v1629, %v1628
    %v1644 = vpack.c.b16 %v1631, %v1630
    %v1645 = vpack.c.b16 %v1633, %v1632
    %v1646 = vpack.c.b16 %v1635, %v1634
    %v1647 = vpack.c.b16 %v1637, %v1636
    %v1648 = vpack.c.b16 %v1639, %v1638
    %v1649 = vpack.c.b16 %v1641, %v1640
    %1658 = vmatprep.subr.bf16.mxu0 0
    %1659 = vmatpush1.bf16.msra.mxu0 %v1642
    %1660 = vmatprep.subr.bf16.mxu0 0
    %1661 = vmatpush1.bf16.msra.mxu0 %v1643
    %1662 = vmatprep.subr.bf16.mxu0 0
    %1663 = vmatpush1.bf16.msra.mxu0 %v1644
    %1664 = vmatprep.subr.bf16.mxu0 0
    %1665 = vmatpush1.bf16.msra.mxu0 %v1645
    %1666 = vmatprep.subr.bf16.mxu0 0
    %1667 = vmatpush1.bf16.msra.mxu0 %v1646
    %1668 = vmatprep.subr.bf16.mxu0 0
    %1669 = vmatpush1.bf16.msra.mxu0 %v1647
    %1670 = vmatprep.subr.bf16.mxu0 0
    %1671 = vmatpush1.bf16.msra.mxu0 %v1648
    %1672 = vmatprep.subr.bf16.mxu0 0
    %1673 = vmatpush1.bf16.msra.mxu0 %v1649
    %1674 = vmatprep.subr.bf16.mxu0 0
    %1675 = vmatpush1.bf16.msra.mxu0 0
    %1676 = vmatprep.subr.bf16.mxu0 0
    %1677 = vmatpush1.bf16.msra.mxu0 0
    %1678 = vmatprep.subr.bf16.mxu0 0
    %1679 = vmatpush1.bf16.msra.mxu0 0
    %1680 = vmatprep.subr.bf16.mxu0 0
    %1681 = vmatpush1.bf16.msra.mxu0 0
    %1682 = vmatprep.subr.bf16.mxu0 0
    %1683 = vmatpush1.bf16.msra.mxu0 0
    %1684 = vmatprep.subr.bf16.mxu0 0
    %1685 = vmatpush1.bf16.msra.mxu0 0
    %1686 = vmatprep.subr.bf16.mxu0 0
    %1687 = vmatpush1.bf16.msra.mxu0 0
    %1688 = vmatprep.subr.bf16.mxu0 0
    %1689 = vmatpush1.bf16.msra.mxu0 0
    %1690 = vmatprep.mubr.bf16.mxu0 0
    %1691 = vmatmul.mubr.bf16.gmra.mrb[0].mxu0 %v1586
    %v1692 = vpop.f32.mrb[0].mxu0
    %v1693 = vadd.f32 %v1608, %v1692
    %v1694 = vpop.f32.mrb[0].mxu0
    %v1695 = vpop.f32.mrb[0].mxu0
    %v1696 = vpop.f32.mrb[0].mxu0
    %1697 = vdwg.mxu0
    %v1698 = vxor.u32 %v1693, 2147483648
    %v1699 = vmul.f32 %v1698, 1.442695
    %v1700 = vpow.pop %v1699
    %v1701 = vadd.f32 %v1700, 1.0
    %v1702 = vrcp.pop %v1701
    %v1703 = vmul.f32 1.0, %v1702
    %v1704 = vmul.f32 %v1693, %v1703
    %v1705 = vadd.f32 %v1704, %v1574
    %v1706 = vpack.c.bf16 %v1705, %v1705
    %v1707 = vld [vmem:[#allocation2 + $0x44] sm:$0xff]
    %v1708 = vld [vmem:[#allocation2 + $0xe4] sm:$0xff]
    %v1709 = vld [vmem:[#allocation2 + $0x184] sm:$0xff]
    %v1710 = vld [vmem:[#allocation2 + $0x224] sm:$0xff]
    %v1711 = vld [vmem:[#allocation2 + $0x2c4] sm:$0xff]
    %v1712 = vld [vmem:[#allocation2 + $0x364] sm:$0xff]
    %v1713 = vld [vmem:[#allocation2 + $0x404] sm:$0xff]
    %v1714 = vld [vmem:[#allocation2 + $0x4a4] sm:$0xff]
    %v1715 = vld [vmem:[#allocation2 + $0x544] sm:$0xff]
    %v1716 = vld [vmem:[#allocation2 + $0x5e4] sm:$0xff]
    %v1717 = vld [vmem:[#allocation2 + $0x684] sm:$0xff]
    %v1718 = vld [vmem:[#allocation2 + $0x724] sm:$0xff]
    %v1719 = vld [vmem:[#allocation2 + $0x7c4] sm:$0xff]
    %v1720 = vld [vmem:[#allocation2 + $0x864] sm:$0xff]
    %v1721 = vld [vmem:[#allocation2 + $0x904] sm:$0xff]
    %v1722 = vld [vmem:[#allocation2 + $0x9a4] sm:$0xff]
    %v1723 = vld [vmem:[#allocation5 + $0x11] sm:$0x3]
    %v1725 = vlaneseq
    %v1726 = vshrl.u32 %v1725, 7
    %v1727 = vsub.s32 0, %v1726
    %v1728 = vrot.slane %v1723, %v1727
    %v1729 = vlaneseq
    %v1730 = vshrl.u32 %v1729, 7
    %v1731 = vsub.s32 1, %v1730
    %v1732 = vrot.slane %v1723, %v1731
    %v1751 = vunpack.c.l.b16 %v1707
    %v1752 = vunpack.c.h.b16 %v1707
    %v1753 = vunpack.c.l.b16 %v1708
    %v1754 = vunpack.c.h.b16 %v1708
    %v1755 = vunpack.c.l.b16 %v1709
    %v1756 = vunpack.c.h.b16 %v1709
    %v1757 = vunpack.c.l.b16 %v1710
    %v1758 = vunpack.c.h.b16 %v1710
    %v1759 = vunpack.c.l.b16 %v1711
    %v1760 = vunpack.c.h.b16 %v1711
    %v1761 = vunpack.c.l.b16 %v1712
    %v1762 = vunpack.c.h.b16 %v1712
    %v1763 = vunpack.c.l.b16 %v1713
    %v1764 = vunpack.c.h.b16 %v1713
    %v1765 = vunpack.c.l.b16 %v1714
    %v1766 = vunpack.c.h.b16 %v1714
    %v1767 = vunpack.c.l.b16 %v1715
    %v1768 = vunpack.c.h.b16 %v1715
    %v1769 = vunpack.c.l.b16 %v1716
    %v1770 = vunpack.c.h.b16 %v1716
    %v1771 = vunpack.c.l.b16 %v1717
    %v1772 = vunpack.c.h.b16 %v1717
    %v1773 = vunpack.c.l.b16 %v1718
    %v1774 = vunpack.c.h.b16 %v1718
    %v1775 = vunpack.c.l.b16 %v1719
    %v1776 = vunpack.c.h.b16 %v1719
    %v1777 = vunpack.c.l.b16 %v1720
    %v1778 = vunpack.c.h.b16 %v1720
    %v1779 = vunpack.c.l.b16 %v1721
    %v1780 = vunpack.c.h.b16 %v1721
    %v1781 = vunpack.c.l.b16 %v1722
    %v1782 = vunpack.c.h.b16 %v1722
    %v1783 = vpack.c.b16 %v1753, %v1751
    %v1784 = vpack.c.b16 %v1754, %v1752
    %v1785 = vpack.c.b16 %v1757, %v1755
    %v1786 = vpack.c.b16 %v1758, %v1756
    %v1787 = vpack.c.b16 %v1761, %v1759
    %v1788 = vpack.c.b16 %v1762, %v1760
    %v1789 = vpack.c.b16 %v1765, %v1763
    %v1790 = vpack.c.b16 %v1766, %v1764
    %v1791 = vpack.c.b16 %v1769, %v1767
    %v1792 = vpack.c.b16 %v1770, %v1768
    %v1793 = vpack.c.b16 %v1773, %v1771
    %v1794 = vpack.c.b16 %v1774, %v1772
    %v1795 = vpack.c.b16 %v1777, %v1775
    %v1796 = vpack.c.b16 %v1778, %v1776
    %v1797 = vpack.c.b16 %v1781, %v1779
    %v1798 = vpack.c.b16 %v1782, %v1780
    %1815 = vmatprep.subr.bf16.mxu0 %v1784
    %1816 = vmatpush1.bf16.msra.mxu0 %v1783
    %1817 = vmatprep.subr.bf16.mxu0 %v1786
    %1818 = vmatpush1.bf16.msra.mxu0 %v1785
    %1819 = vmatprep.subr.bf16.mxu0 %v1788
    %1820 = vmatpush1.bf16.msra.mxu0 %v1787
    %1821 = vmatprep.subr.bf16.mxu0 %v1790
    %1822 = vmatpush1.bf16.msra.mxu0 %v1789
    %1823 = vmatprep.subr.bf16.mxu0 %v1792
    %1824 = vmatpush1.bf16.msra.mxu0 %v1791
    %1825 = vmatprep.subr.bf16.mxu0 %v1794
    %1826 = vmatpush1.bf16.msra.mxu0 %v1793
    %1827 = vmatprep.subr.bf16.mxu0 %v1796
    %1828 = vmatpush1.bf16.msra.mxu0 %v1795
    %1829 = vmatprep.subr.bf16.mxu0 %v1798
    %1830 = vmatpush1.bf16.msra.mxu0 %v1797
    %1831 = vmatprep.subr.bf16.mxu0 0
    %1832 = vmatpush1.bf16.msra.mxu0 0
    %1833 = vmatprep.subr.bf16.mxu0 0
    %1834 = vmatpush1.bf16.msra.mxu0 0
    %1835 = vmatprep.subr.bf16.mxu0 0
    %1836 = vmatpush1.bf16.msra.mxu0 0
    %1837 = vmatprep.subr.bf16.mxu0 0
    %1838 = vmatpush1.bf16.msra.mxu0 0
    %1839 = vmatprep.subr.bf16.mxu0 0
    %1840 = vmatpush1.bf16.msra.mxu0 0
    %1841 = vmatprep.subr.bf16.mxu0 0
    %1842 = vmatpush1.bf16.msra.mxu0 0
    %1843 = vmatprep.subr.bf16.mxu0 0
    %1844 = vmatpush1.bf16.msra.mxu0 0
    %1845 = vmatprep.subr.bf16.mxu0 0
    %1846 = vmatpush1.bf16.msra.mxu0 0
    %1847 = vmatprep.mubr.bf16.mxu0 0
    %1848 = vmatmul.mubr.bf16.gmra.mrb[0].mxu0 %v1706
    %v1849 = vpop.f32.mrb[0].mxu0
    %v1850 = vadd.f32 %v1728, %v1849
    %v1851 = vpop.f32.mrb[0].mxu0
    %v1852 = vadd.f32 %v1732, %v1851
    %v1853 = vpop.f32.mrb[0].mxu0
    %v1854 = vpop.f32.mrb[0].mxu0
    %1855 = vdwg.mxu0
    %v1856 = vxor.u32 %v1850, 2147483648
    %v1857 = vmul.f32 %v1856, 1.442695
    %v1858 = vpow.pop %v1857
    %v1859 = vadd.f32 %v1858, 1.0
    %v1860 = vrcp.pop %v1859
    %v1861 = vmul.f32 1.0, %v1860
    %v1862 = vmul.f32 %v1850, %v1861
    %v1863 = vadd.f32 %v1862, %v751
    %v1864 = vpack.c.bf16 %v1863, %v1863
    %v1865 = vld [vmem:[#allocation2 + $0x4c] sm:$0xf]
    %v1866 = vld [vmem:[#allocation2 + $0xec] sm:$0xf]
    %v1867 = vld [vmem:[#allocation2 + $0x18c] sm:$0xf]
    %v1868 = vld [vmem:[#allocation2 + $0x22c] sm:$0xf]
    %v1869 = vld [vmem:[#allocation2 + $0x2cc] sm:$0xf]
    %v1870 = vld [vmem:[#allocation2 + $0x36c] sm:$0xf]
    %v1871 = vld [vmem:[#allocation2 + $0x40c] sm:$0xf]
    %v1872 = vld [vmem:[#allocation2 + $0x4ac] sm:$0xf]
    %v1873 = vld [vmem:[#allocation2 + $0x54c] sm:$0xf]
    %v1874 = vld [vmem:[#allocation2 + $0x5ec] sm:$0xf]
    %v1875 = vld [vmem:[#allocation2 + $0x68c] sm:$0xf]
    %v1876 = vld [vmem:[#allocation2 + $0x72c] sm:$0xf]
    %v1877 = vld [vmem:[#allocation2 + $0x7cc] sm:$0xf]
    %v1878 = vld [vmem:[#allocation2 + $0x86c] sm:$0xf]
    %v1879 = vld [vmem:[#allocation2 + $0x90c] sm:$0xf]
    %v1880 = vld [vmem:[#allocation2 + $0x9ac] sm:$0xf]
    %v1881 = vld [vmem:[#allocation5 + $0x13] sm:$0x1]
    %v1883 = vlaneseq
    %v1884 = vshrl.u32 %v1883, 7
    %v1885 = vsub.s32 0, %v1884
    %v1886 = vrot.slane %v1881, %v1885
    %v1904 = vunpack.c.l.b16 %v1865
    %v1905 = vunpack.c.l.b16 %v1866
    %v1906 = vunpack.c.l.b16 %v1867
    %v1907 = vunpack.c.l.b16 %v1868
    %v1908 = vunpack.c.l.b16 %v1869
    %v1909 = vunpack.c.l.b16 %v1870
    %v1910 = vunpack.c.l.b16 %v1871
    %v1911 = vunpack.c.l.b16 %v1872
    %v1912 = vunpack.c.l.b16 %v1873
    %v1913 = vunpack.c.l.b16 %v1874
    %v1914 = vunpack.c.l.b16 %v1875
    %v1915 = vunpack.c.l.b16 %v1876
    %v1916 = vunpack.c.l.b16 %v1877
    %v1917 = vunpack.c.l.b16 %v1878
    %v1918 = vunpack.c.l.b16 %v1879
    %v1919 = vunpack.c.l.b16 %v1880
    %v1920 = vpack.c.b16 %v1905, %v1904
    %v1921 = vpack.c.b16 %v1907, %v1906
    %v1922 = vpack.c.b16 %v1909, %v1908
    %v1923 = vpack.c.b16 %v1911, %v1910
    %v1924 = vpack.c.b16 %v1913, %v1912
    %v1925 = vpack.c.b16 %v1915, %v1914
    %v1926 = vpack.c.b16 %v1917, %v1916
    %v1927 = vpack.c.b16 %v1919, %v1918
    %1936 = vmatprep.subr.bf16.mxu0 0
    %1937 = vmatpush1.bf16.msra.mxu0 %v1920
    %1938 = vmatprep.subr.bf16.mxu0 0
    %1939 = vmatpush1.bf16.msra.mxu0 %v1921
    %1940 = vmatprep.subr.bf16.mxu0 0
    %1941 = vmatpush1.bf16.msra.mxu0 %v1922
    %1942 = vmatprep.subr.bf16.mxu0 0
    %1943 = vmatpush1.bf16.msra.mxu0 %v1923
    %1944 = vmatprep.subr.bf16.mxu0 0
    %1945 = vmatpush1.bf16.msra.mxu0 %v1924
    %1946 = vmatprep.subr.bf16.mxu0 0
    %1947 = vmatpush1.bf16.msra.mxu0 %v1925
    %1948 = vmatprep.subr.bf16.mxu0 0
    %1949 = vmatpush1.bf16.msra.mxu0 %v1926
    %1950 = vmatprep.subr.bf16.mxu0 0
    %1951 = vmatpush1.bf16.msra.mxu0 %v1927
    %1952 = vmatprep.subr.bf16.mxu0 0
    %1953 = vmatpush1.bf16.msra.mxu0 0
    %1954 = vmatprep.subr.bf16.mxu0 0
    %1955 = vmatpush1.bf16.msra.mxu0 0
    %1956 = vmatprep.subr.bf16.mxu0 0
    %1957 = vmatpush1.bf16.msra.mxu0 0
    %1958 = vmatprep.subr.bf16.mxu0 0
    %1959 = vmatpush1.bf16.msra.mxu0 0
    %1960 = vmatprep.subr.bf16.mxu0 0
    %1961 = vmatpush1.bf16.msra.mxu0 0
    %1962 = vmatprep.subr.bf16.mxu0 0
    %1963 = vmatpush1.bf16.msra.mxu0 0
    %1964 = vmatprep.subr.bf16.mxu0 0
    %1965 = vmatpush1.bf16.msra.mxu0 0
    %1966 = vmatprep.subr.bf16.mxu0 0
    %1967 = vmatpush1.bf16.msra.mxu0 0
    %1968 = vmatprep.mubr.bf16.mxu0 0
    %1969 = vmatmul.mubr.bf16.gmra.mrb[0].mxu0 %v1864
    %v1970 = vpop.f32.mrb[0].mxu0
    %v1971 = vadd.f32 %v1886, %v1970
    %v1972 = vpop.f32.mrb[0].mxu0
    %v1973 = vpop.f32.mrb[0].mxu0
    %v1974 = vpop.f32.mrb[0].mxu0
    %1975 = vdwg.mxu0
    %v1976 = vxor.u32 %v1971, 2147483648
    %v1977 = vmul.f32 %v1976, 1.442695
    %v1978 = vpow.pop %v1977
    %v1979 = vadd.f32 %v1978, 1.0
    %v1980 = vrcp.pop %v1979
    %v1981 = vmul.f32 1.0, %v1980
    %v1982 = vmul.f32 %v1971, %v1981
    %v1983 = vadd.f32 %v1982, %v1852
    %v1984 = vpack.c.bf16 %v1983, %v1983
    %v1985 = vld [vmem:[#allocation2 + $0x50] sm:$0xf]
    %v1986 = vld [vmem:[#allocation2 + $0xf0] sm:$0xf]
    %v1987 = vld [vmem:[#allocation2 + $0x190] sm:$0xf]
    %v1988 = vld [vmem:[#allocation2 + $0x230] sm:$0xf]
    %v1989 = vld [vmem:[#allocation2 + $0x2d0] sm:$0xf]
    %v1990 = vld [vmem:[#allocation2 + $0x370] sm:$0xf]
    %v1991 = vld [vmem:[#allocation2 + $0x410] sm:$0xf]
    %v1992 = vld [vmem:[#allocation2 + $0x4b0] sm:$0xf]
    %v1993 = vld [vmem:[#allocation2 + $0x550] sm:$0xf]
    %v1994 = vld [vmem:[#allocation2 + $0x5f0] sm:$0xf]
    %v1995 = vld [vmem:[#allocation2 + $0x690] sm:$0xf]
    %v1996 = vld [vmem:[#allocation2 + $0x730] sm:$0xf]
    %v1997 = vld [vmem:[#allocation2 + $0x7d0] sm:$0xf]
    %v1998 = vld [vmem:[#allocation2 + $0x870] sm:$0xf]
    %v1999 = vld [vmem:[#allocation2 + $0x910] sm:$0xf]
    %v2000 = vld [vmem:[#allocation2 + $0x9b0] sm:$0xf]
    %v2001 = vld [vmem:[#allocation5 + $0x14] sm:$0x1]
    %v2003 = vlaneseq
    %v2004 = vshrl.u32 %v2003, 7
    %v2005 = vsub.s32 0, %v2004
    %v2006 = vrot.slane %v2001, %v2005
    %v2024 = vunpack.c.l.b16 %v1985
    %v2025 = vunpack.c.l.b16 %v1986
    %v2026 = vunpack.c.l.b16 %v1987
    %v2027 = vunpack.c.l.b16 %v1988
    %v2028 = vunpack.c.l.b16 %v1989
    %v2029 = vunpack.c.l.b16 %v1990
    %v2030 = vunpack.c.l.b16 %v1991
    %v2031 = vunpack.c.l.b16 %v1992
    %v2032 = vunpack.c.l.b16 %v1993
    %v2033 = vunpack.c.l.b16 %v1994
    %v2034 = vunpack.c.l.b16 %v1995
    %v2035 = vunpack.c.l.b16 %v1996
    %v2036 = vunpack.c.l.b16 %v1997
    %v2037 = vunpack.c.l.b16 %v1998
    %v2038 = vunpack.c.l.b16 %v1999
    %v2039 = vunpack.c.l.b16 %v2000
    %v2040 = vpack.c.b16 %v2025, %v2024
    %v2041 = vpack.c.b16 %v2027, %v2026
    %v2042 = vpack.c.b16 %v2029, %v2028
    %v2043 = vpack.c.b16 %v2031, %v2030
    %v2044 = vpack.c.b16 %v2033, %v2032
    %v2045 = vpack.c.b16 %v2035, %v2034
    %v2046 = vpack.c.b16 %v2037, %v2036
    %v2047 = vpack.c.b16 %v2039, %v2038
    %2056 = vmatprep.subr.bf16.mxu0 0
    %2057 = vmatpush1.bf16.msra.mxu0 %v2040
    %2058 = vmatprep.subr.bf16.mxu0 0
    %2059 = vmatpush1.bf16.msra.mxu0 %v2041
    %2060 = vmatprep.subr.bf16.mxu0 0
    %2061 = vmatpush1.bf16.msra.mxu0 %v2042
    %2062 = vmatprep.subr.bf16.mxu0 0
    %2063 = vmatpush1.bf16.msra.mxu0 %v2043
    %2064 = vmatprep.subr.bf16.mxu0 0
    %2065 = vmatpush1.bf16.msra.mxu0 %v2044
    %2066 = vmatprep.subr.bf16.mxu0 0
    %2067 = vmatpush1.bf16.msra.mxu0 %v2045
    %2068 = vmatprep.subr.bf16.mxu0 0
    %2069 = vmatpush1.bf16.msra.mxu0 %v2046
    %2070 = vmatprep.subr.bf16.mxu0 0
    %2071 = vmatpush1.bf16.msra.mxu0 %v2047
    %2072 = vmatprep.subr.bf16.mxu0 0
    %2073 = vmatpush1.bf16.msra.mxu0 0
    %2074 = vmatprep.subr.bf16.mxu0 0
    %2075 = vmatpush1.bf16.msra.mxu0 0
    %2076 = vmatprep.subr.bf16.mxu0 0
    %2077 = vmatpush1.bf16.msra.mxu0 0
    %2078 = vmatprep.subr.bf16.mxu0 0
    %2079 = vmatpush1.bf16.msra.mxu0 0
    %2080 = vmatprep.subr.bf16.mxu0 0
    %2081 = vmatpush1.bf16.msra.mxu0 0
    %2082 = vmatprep.subr.bf16.mxu0 0
    %2083 = vmatpush1.bf16.msra.mxu0 0
    %2084 = vmatprep.subr.bf16.mxu0 0
    %2085 = vmatpush1.bf16.msra.mxu0 0
    %2086 = vmatprep.subr.bf16.mxu0 0
    %2087 = vmatpush1.bf16.msra.mxu0 0
    %2088 = vmatprep.mubr.bf16.mxu0 0
    %2089 = vmatmul.mubr.bf16.gmra.mrb[0].mxu0 %v1984
    %v2090 = vpop.f32.mrb[0].mxu0
    %v2091 = vadd.f32 %v2006, %v2090
    %v2092 = vpop.f32.mrb[0].mxu0
    %v2093 = vpop.f32.mrb[0].mxu0
    %v2094 = vpop.f32.mrb[0].mxu0
    %2095 = vdwg.mxu0
    %v2096 = vxor.u32 %v2091, 2147483648
    %v2097 = vmul.f32 %v2096, 1.442695
    %v2098 = vpow.pop %v2097
    %v2099 = vadd.f32 %v2098, 1.0
    %v2100 = vrcp.pop %v2099
    %v2101 = vmul.f32 1.0, %v2100
    %v2102 = vmul.f32 %v2091, %v2101
    %v2103 = vadd.f32 %v2102, %v753
    %v2104 = vpack.c.bf16 %v2103, %v2103
    %v2105 = vld [vmem:[#allocation2 + $0x54] sm:$0xf]
    %v2106 = vld [vmem:[#allocation2 + $0xf4] sm:$0xf]
    %v2107 = vld [vmem:[#allocation2 + $0x194] sm:$0xf]
    %v2108 = vld [vmem:[#allocation2 + $0x234] sm:$0xf]
    %v2109 = vld [vmem:[#allocation2 + $0x2d4] sm:$0xf]
    %v2110 = vld [vmem:[#allocation2 + $0x374] sm:$0xf]
    %v2111 = vld [vmem:[#allocation2 + $0x414] sm:$0xf]
    %v2112 = vld [vmem:[#allocation2 + $0x4b4] sm:$0xf]
    %v2113 = vld [vmem:[#allocation2 + $0x554] sm:$0xf]
    %v2114 = vld [vmem:[#allocation2 + $0x5f4] sm:$0xf]
    %v2115 = vld [vmem:[#allocation2 + $0x694] sm:$0xf]
    %v2116 = vld [vmem:[#allocation2 + $0x734] sm:$0xf]
    %v2117 = vld [vmem:[#allocation2 + $0x7d4] sm:$0xf]
    %v2118 = vld [vmem:[#allocation2 + $0x874] sm:$0xf]
    %v2119 = vld [vmem:[#allocation2 + $0x914] sm:$0xf]
    %v2120 = vld [vmem:[#allocation2 + $0x9b4] sm:$0xf]
    %v2121 = vld [vmem:[#allocation5 + $0x15] sm:$0x1]
    %v2123 = vlaneseq
    %v2124 = vshrl.u32 %v2123, 7
    %v2125 = vsub.s32 0, %v2124
    %v2126 = vrot.slane %v2121, %v2125
    %v2144 = vunpack.c.l.b16 %v2105
    %v2145 = vunpack.c.l.b16 %v2106
    %v2146 = vunpack.c.l.b16 %v2107
    %v2147 = vunpack.c.l.b16 %v2108
    %v2148 = vunpack.c.l.b16 %v2109
    %v2149 = vunpack.c.l.b16 %v2110
    %v2150 = vunpack.c.l.b16 %v2111
    %v2151 = vunpack.c.l.b16 %v2112
    %v2152 = vunpack.c.l.b16 %v2113
    %v2153 = vunpack.c.l.b16 %v2114
    %v2154 = vunpack.c.l.b16 %v2115
    %v2155 = vunpack.c.l.b16 %v2116
    %v2156 = vunpack.c.l.b16 %v2117
    %v2157 = vunpack.c.l.b16 %v2118
    %v2158 = vunpack.c.l.b16 %v2119
    %v2159 = vunpack.c.l.b16 %v2120
    %v2160 = vpack.c.b16 %v2145, %v2144
    %v2161 = vpack.c.b16 %v2147, %v2146
    %v2162 = vpack.c.b16 %v2149, %v2148
    %v2163 = vpack.c.b16 %v2151, %v2150
    %v2164 = vpack.c.b16 %v2153, %v2152
    %v2165 = vpack.c.b16 %v2155, %v2154
    %v2166 = vpack.c.b16 %v2157, %v2156
    %v2167 = vpack.c.b16 %v2159, %v2158
    %2176 = vmatprep.subr.bf16.mxu0 0
    %2177 = vmatpush1.bf16.msra.mxu0 %v2160
    %2178 = vmatprep.subr.bf16.mxu0 0
    %2179 = vmatpush1.bf16.msra.mxu0 %v2161
    %2180 = vmatprep.subr.bf16.mxu0 0
    %2181 = vmatpush1.bf16.msra.mxu0 %v2162
    %2182 = vmatprep.subr.bf16.mxu0 0
    %2183 = vmatpush1.bf16.msra.mxu0 %v2163
    %2184 = vmatprep.subr.bf16.mxu0 0
    %2185 = vmatpush1.bf16.msra.mxu0 %v2164
    %2186 = vmatprep.subr.bf16.mxu0 0
    %2187 = vmatpush1.bf16.msra.mxu0 %v2165
    %2188 = vmatprep.subr.bf16.mxu0 0
    %2189 = vmatpush1.bf16.msra.mxu0 %v2166
    %2190 = vmatprep.subr.bf16.mxu0 0
    %2191 = vmatpush1.bf16.msra.mxu0 %v2167
    %2192 = vmatprep.subr.bf16.mxu0 0
    %2193 = vmatpush1.bf16.msra.mxu0 0
    %2194 = vmatprep.subr.bf16.mxu0 0
    %2195 = vmatpush1.bf16.msra.mxu0 0
    %2196 = vmatprep.subr.bf16.mxu0 0
    %2197 = vmatpush1.bf16.msra.mxu0 0
    %2198 = vmatprep.subr.bf16.mxu0 0
    %2199 = vmatpush1.bf16.msra.mxu0 0
    %2200 = vmatprep.subr.bf16.mxu0 0
    %2201 = vmatpush1.bf16.msra.mxu0 0
    %2202 = vmatprep.subr.bf16.mxu0 0
    %2203 = vmatpush1.bf16.msra.mxu0 0
    %2204 = vmatprep.subr.bf16.mxu0 0
    %2205 = vmatpush1.bf16.msra.mxu0 0
    %2206 = vmatprep.subr.bf16.mxu0 0
    %2207 = vmatpush1.bf16.msra.mxu0 0
    %2208 = vmatprep.mubr.bf16.mxu0 0
    %2209 = vmatmul.mubr.bf16.gmra.mrb[0].mxu0 %v2104
    %v2210 = vpop.f32.mrb[0].mxu0
    %v2211 = vadd.f32 %v2126, %v2210
    %v2212 = vpop.f32.mrb[0].mxu0
    %v2213 = vpop.f32.mrb[0].mxu0
    %v2214 = vpop.f32.mrb[0].mxu0
    %2215 = vdwg.mxu0
    %v2216 = vxor.u32 %v2211, 2147483648
    %v2217 = vmul.f32 %v2216, 1.442695
    %v2218 = vpow.pop %v2217
    %v2219 = vadd.f32 %v2218, 1.0
    %v2220 = vrcp.pop %v2219
    %v2221 = vmul.f32 1.0, %v2220
    %v2222 = vmul.f32 %v2211, %v2221
    %v2223 = vadd.f32 %v2222, %v1983
    %v2224 = vpack.c.bf16 %v2223, %v2223
    %v2225 = vld [vmem:[#allocation2 + $0x58] sm:$0xff]
    %v2226 = vld [vmem:[#allocation2 + $0xf8] sm:$0xff]
    %v2227 = vld [vmem:[#allocation2 + $0x198] sm:$0xff]
    %v2228 = vld [vmem:[#allocation2 + $0x238] sm:$0xff]
    %v2229 = vld [vmem:[#allocation2 + $0x2d8] sm:$0xff]
    %v2230 = vld [vmem:[#allocation2 + $0x378] sm:$0xff]
    %v2231 = vld [vmem:[#allocation2 + $0x418] sm:$0xff]
    %v2232 = vld [vmem:[#allocation2 + $0x4b8] sm:$0xff]
    %v2233 = vld [vmem:[#allocation2 + $0x558] sm:$0xff]
    %v2234 = vld [vmem:[#allocation2 + $0x5f8] sm:$0xff]
    %v2235 = vld [vmem:[#allocation2 + $0x698] sm:$0xff]
    %v2236 = vld [vmem:[#allocation2 + $0x738] sm:$0xff]
    %v2237 = vld [vmem:[#allocation2 + $0x7d8] sm:$0xff]
    %v2238 = vld [vmem:[#allocation2 + $0x878] sm:$0xff]
    %v2239 = vld [vmem:[#allocation2 + $0x918] sm:$0xff]
    %v2240 = vld [vmem:[#allocation2 + $0x9b8] sm:$0xff]
    %v2241 = vld [vmem:[#allocation2 + $0x60] sm:$0xff]
    %v2242 = vld [vmem:[#allocation2 + $0x100] sm:$0xff]
    %v2243 = vld [vmem:[#allocation2 + $0x1a0] sm:$0xff]
    %v2244 = vld [vmem:[#allocation2 + $0x240] sm:$0xff]
    %v2245 = vld [vmem:[#allocation2 + $0x2e0] sm:$0xff]
    %v2246 = vld [vmem:[#allocation2 + $0x380] sm:$0xff]
    %v2247 = vld [vmem:[#allocation2 + $0x420] sm:$0xff]
    %v2248 = vld [vmem:[#allocation2 + $0x4c0] sm:$0xff]
    %v2249 = vld [vmem:[#allocation2 + $0x560] sm:$0xff]
    %v2250 = vld [vmem:[#allocation2 + $0x600] sm:$0xff]
    %v2251 = vld [vmem:[#allocation2 + $0x6a0] sm:$0xff]
    %v2252 = vld [vmem:[#allocation2 + $0x740] sm:$0xff]
    %v2253 = vld [vmem:[#allocation2 + $0x7e0] sm:$0xff]
    %v2254 = vld [vmem:[#allocation2 + $0x880] sm:$0xff]
    %v2255 = vld [vmem:[#allocation2 + $0x920] sm:$0xff]
    %v2256 = vld [vmem:[#allocation2 + $0x9c0] sm:$0xff]
    %v2273 = vunpack.c.l.b16 %v2241
    %v2274 = vunpack.c.h.b16 %v2241
    %v2275 = vunpack.c.l.b16 %v2242
    %v2276 = vunpack.c.h.b16 %v2242
    %v2277 = vunpack.c.l.b16 %v2243
    %v2278 = vunpack.c.h.b16 %v2243
    %v2279 = vunpack.c.l.b16 %v2244
    %v2280 = vunpack.c.h.b16 %v2244
    %v2281 = vunpack.c.l.b16 %v2245
    %v2282 = vunpack.c.h.b16 %v2245
    %v2283 = vunpack.c.l.b16 %v2246
    %v2284 = vunpack.c.h.b16 %v2246
    %v2285 = vunpack.c.l.b16 %v2247
    %v2286 = vunpack.c.h.b16 %v2247
    %v2287 = vunpack.c.l.b16 %v2248
    %v2288 = vunpack.c.h.b16 %v2248
    %v2289 = vunpack.c.l.b16 %v2249
    %v2290 = vunpack.c.h.b16 %v2249
    %v2291 = vunpack.c.l.b16 %v2250
    %v2292 = vunpack.c.h.b16 %v2250
    %v2293 = vunpack.c.l.b16 %v2251
    %v2294 = vunpack.c.h.b16 %v2251
    %v2295 = vunpack.c.l.b16 %v2252
    %v2296 = vunpack.c.h.b16 %v2252
    %v2297 = vunpack.c.l.b16 %v2253
    %v2298 = vunpack.c.h.b16 %v2253
    %v2299 = vunpack.c.l.b16 %v2254
    %v2300 = vunpack.c.h.b16 %v2254
    %v2301 = vunpack.c.l.b16 %v2255
    %v2302 = vunpack.c.h.b16 %v2255
    %v2303 = vunpack.c.l.b16 %v2256
    %v2304 = vunpack.c.h.b16 %v2256
    %v2305 = vpack.c.b16 %v2275, %v2273
    %v2306 = vpack.c.b16 %v2276, %v2274
    %v2307 = vpack.c.b16 %v2279, %v2277
    %v2308 = vpack.c.b16 %v2280, %v2278
    %v2309 = vpack.c.b16 %v2283, %v2281
    %v2310 = vpack.c.b16 %v2284, %v2282
    %v2311 = vpack.c.b16 %v2287, %v2285
    %v2312 = vpack.c.b16 %v2288, %v2286
    %v2313 = vpack.c.b16 %v2291, %v2289
    %v2314 = vpack.c.b16 %v2292, %v2290
    %v2315 = vpack.c.b16 %v2295, %v2293
    %v2316 = vpack.c.b16 %v2296, %v2294
    %v2317 = vpack.c.b16 %v2299, %v2297
    %v2318 = vpack.c.b16 %v2300, %v2298
    %v2319 = vpack.c.b16 %v2303, %v2301
    %v2320 = vpack.c.b16 %v2304, %v2302
    %2337 = vmatprep.subr.bf16.mxu0 %v2306
    %2338 = vmatpush1.bf16.msra.mxu0 %v2305
    %2339 = vmatprep.subr.bf16.mxu0 %v2308
    %2340 = vmatpush1.bf16.msra.mxu0 %v2307
    %2341 = vmatprep.subr.bf16.mxu0 %v2310
    %2342 = vmatpush1.bf16.msra.mxu0 %v2309
    %2343 = vmatprep.subr.bf16.mxu0 %v2312
    %2344 = vmatpush1.bf16.msra.mxu0 %v2311
    %2345 = vmatprep.subr.bf16.mxu0 %v2314
    %2346 = vmatpush1.bf16.msra.mxu0 %v2313
    %2347 = vmatprep.subr.bf16.mxu0 %v2316
    %2348 = vmatpush1.bf16.msra.mxu0 %v2315
    %2349 = vmatprep.subr.bf16.mxu0 %v2318
    %2350 = vmatpush1.bf16.msra.mxu0 %v2317
    %2351 = vmatprep.subr.bf16.mxu0 %v2320
    %2352 = vmatpush1.bf16.msra.mxu0 %v2319
    %2353 = vmatprep.subr.bf16.mxu0 0
    %2354 = vmatpush1.bf16.msra.mxu0 0
    %2355 = vmatprep.subr.bf16.mxu0 0
    %2356 = vmatpush1.bf16.msra.mxu0 0
    %2357 = vmatprep.subr.bf16.mxu0 0
    %2358 = vmatpush1.bf16.msra.mxu0 0
    %2359 = vmatprep.subr.bf16.mxu0 0
    %2360 = vmatpush1.bf16.msra.mxu0 0
    %2361 = vmatprep.subr.bf16.mxu0 0
    %2362 = vmatpush1.bf16.msra.mxu0 0
    %2363 = vmatprep.subr.bf16.mxu0 0
    %2364 = vmatpush1.bf16.msra.mxu0 0
    %2365 = vmatprep.subr.bf16.mxu0 0
    %2366 = vmatpush1.bf16.msra.mxu0 0
    %2367 = vmatprep.subr.bf16.mxu0 0
    %2368 = vmatpush1.bf16.msra.mxu0 0
    %2369 = vmatprep.mubr.bf16.mxu0 0
    %2370 = vmatmul.mubr.bf16.gmra.mrb[0].mxu0 %v1984
    %v2371 = vpop.f32.mrb[0].mxu0
    %v2372 = vadd.f32 0.0, %v2371
    %v2373 = vpop.f32.mrb[0].mxu0
    %v2374 = vadd.f32 0.0, %v2373
    %v2375 = vpop.f32.mrb[0].mxu0
    %v2376 = vpop.f32.mrb[0].mxu0
    %2377 = vdwg.mxu0
    %v2394 = vunpack.c.l.b16 %v2225
    %v2395 = vunpack.c.h.b16 %v2225
    %v2396 = vunpack.c.l.b16 %v2226
    %v2397 = vunpack.c.h.b16 %v2226
    %v2398 = vunpack.c.l.b16 %v2227
    %v2399 = vunpack.c.h.b16 %v2227
    %v2400 = vunpack.c.l.b16 %v2228
    %v2401 = vunpack.c.h.b16 %v2228
    %v2402 = vunpack.c.l.b16 %v2229
    %v2403 = vunpack.c.h.b16 %v2229
    %v2404 = vunpack.c.l.b16 %v2230
    %v2405 = vunpack.c.h.b16 %v2230
    %v2406 = vunpack.c.l.b16 %v2231
    %v2407 = vunpack.c.h.b16 %v2231
    %v2408 = vunpack.c.l.b16 %v2232
    %v2409 = vunpack.c.h.b16 %v2232
    %v2410 = vunpack.c.l.b16 %v2233
    %v2411 = vunpack.c.h.b16 %v2233
    %v2412 = vunpack.c.l.b16 %v2234
    %v2413 = vunpack.c.h.b16 %v2234
    %v2414 = vunpack.c.l.b16 %v2235
    %v2415 = vunpack.c.h.b16 %v2235
    %v2416 = vunpack.c.l.b16 %v2236
    %v2417 = vunpack.c.h.b16 %v2236
    %v2418 = vunpack.c.l.b16 %v2237
    %v2419 = vunpack.c.h.b16 %v2237
    %v2420 = vunpack.c.l.b16 %v2238
    %v2421 = vunpack.c.h.b16 %v2238
    %v2422 = vunpack.c.l.b16 %v2239
    %v2423 = vunpack.c.h.b16 %v2239
    %v2424 = vunpack.c.l.b16 %v2240
    %v2425 = vunpack.c.h.b16 %v2240
    %v2426 = vpack.c.b16 %v2396, %v2394
    %v2427 = vpack.c.b16 %v2397, %v2395
    %v2428 = vpack.c.b16 %v2400, %v2398
    %v2429 = vpack.c.b16 %v2401, %v2399
    %v2430 = vpack.c.b16 %v2404, %v2402
    %v2431 = vpack.c.b16 %v2405, %v2403
    %v2432 = vpack.c.b16 %v2408, %v2406
    %v2433 = vpack.c.b16 %v2409, %v2407
    %v2434 = vpack.c.b16 %v2412, %v2410
    %v2435 = vpack.c.b16 %v2413, %v2411
    %v2436 = vpack.c.b16 %v2416, %v2414
    %v2437 = vpack.c.b16 %v2417, %v2415
    %v2438 = vpack.c.b16 %v2420, %v2418
    %v2439 = vpack.c.b16 %v2421, %v2419
    %v2440 = vpack.c.b16 %v2424, %v2422
    %v2441 = vpack.c.b16 %v2425, %v2423
    %2458 = vmatprep.subr.bf16.mxu0 %v2427
    %2459 = vmatpush1.bf16.msra.mxu0 %v2426
    %2460 = vmatprep.subr.bf16.mxu0 %v2429
    %2461 = vmatpush1.bf16.msra.mxu0 %v2428
    %2462 = vmatprep.subr.bf16.mxu0 %v2431
    %2463 = vmatpush1.bf16.msra.mxu0 %v2430
    %2464 = vmatprep.subr.bf16.mxu0 %v2433
    %2465 = vmatpush1.bf16.msra.mxu0 %v2432
    %2466 = vmatprep.subr.bf16.mxu0 %v2435
    %2467 = vmatpush1.bf16.msra.mxu0 %v2434
    %2468 = vmatprep.subr.bf16.mxu0 %v2437
    %2469 = vmatpush1.bf16.msra.mxu0 %v2436
    %2470 = vmatprep.subr.bf16.mxu0 %v2439
    %2471 = vmatpush1.bf16.msra.mxu0 %v2438
    %2472 = vmatprep.subr.bf16.mxu0 %v2441
    %2473 = vmatpush1.bf16.msra.mxu0 %v2440
    %2474 = vmatprep.subr.bf16.mxu0 0
    %2475 = vmatpush1.bf16.msra.mxu0 0
    %2476 = vmatprep.subr.bf16.mxu0 0
    %2477 = vmatpush1.bf16.msra.mxu0 0
    %2478 = vmatprep.subr.bf16.mxu0 0
    %2479 = vmatpush1.bf16.msra.mxu0 0
    %2480 = vmatprep.subr.bf16.mxu0 0
    %2481 = vmatpush1.bf16.msra.mxu0 0
    %2482 = vmatprep.subr.bf16.mxu0 0
    %2483 = vmatpush1.bf16.msra.mxu0 0
    %2484 = vmatprep.subr.bf16.mxu0 0
    %2485 = vmatpush1.bf16.msra.mxu0 0
    %2486 = vmatprep.subr.bf16.mxu0 0
    %2487 = vmatpush1.bf16.msra.mxu0 0
    %2488 = vmatprep.subr.bf16.mxu0 0
    %2489 = vmatpush1.bf16.msra.mxu0 0
    %2490 = vmatprep.mubr.bf16.mxu0 0
    %2491 = vmatmul.mubr.bf16.gmra.mrb[0].mxu0 %v2224
    %v2492 = vpop.f32.mrb[0].mxu0
    %v2493 = vadd.f32 %v2372, %v2492
    %v2494 = vpop.f32.mrb[0].mxu0
    %v2495 = vadd.f32 %v2374, %v2494
    %v2496 = vpop.f32.mrb[0].mxu0
    %v2497 = vpop.f32.mrb[0].mxu0
    %2498 = vdwg.mxu0
    %v2499 = vld [vmem:[#allocation5 + $0x16] sm:$0x3]
    %v2501 = vlaneseq
    %v2502 = vshrl.u32 %v2501, 7
    %v2503 = vsub.s32 0, %v2502
    %v2504 = vrot.slane %v2499, %v2503
    %v2505 = vlaneseq
    %v2506 = vshrl.u32 %v2505, 7
    %v2507 = vsub.s32 1, %v2506
    %v2508 = vrot.slane %v2499, %v2507
    %v2511 = vadd.f32 %v2493, %v2504
    %v2512 = vadd.f32 %v2495, %v2508
    %v2513 = vxor.u32 %v2511, 2147483648
    %v2514 = vmul.f32 %v2513, 1.442695
    %v2515 = vpow.pop %v2514
    %v2516 = vadd.f32 %v2515, 1.0
    %v2517 = vrcp.pop %v2516
    %v2518 = vmul.f32 1.0, %v2517
    %v2519 = vmul.f32 %v2511, %v2518
    %v2520 = vadd.f32 %v2519, %v792
    %v2521 = vpack.c.bf16 %v2520, %v2520
    %v2522 = vld [vmem:[#allocation2 + $0x68] sm:$0xf]
    %v2523 = vld [vmem:[#allocation2 + $0x108] sm:$0xf]
    %v2524 = vld [vmem:[#allocation2 + $0x1a8] sm:$0xf]
    %v2525 = vld [vmem:[#allocation2 + $0x248] sm:$0xf]
    %v2526 = vld [vmem:[#allocation2 + $0x2e8] sm:$0xf]
    %v2527 = vld [vmem:[#allocation2 + $0x388] sm:$0xf]
    %v2528 = vld [vmem:[#allocation2 + $0x428] sm:$0xf]
    %v2529 = vld [vmem:[#allocation2 + $0x4c8] sm:$0xf]
    %v2530 = vld [vmem:[#allocation2 + $0x568] sm:$0xf]
    %v2531 = vld [vmem:[#allocation2 + $0x608] sm:$0xf]
    %v2532 = vld [vmem:[#allocation2 + $0x6a8] sm:$0xf]
    %v2533 = vld [vmem:[#allocation2 + $0x748] sm:$0xf]
    %v2534 = vld [vmem:[#allocation2 + $0x7e8] sm:$0xf]
    %v2535 = vld [vmem:[#allocation2 + $0x888] sm:$0xf]
    %v2536 = vld [vmem:[#allocation2 + $0x928] sm:$0xf]
    %v2537 = vld [vmem:[#allocation2 + $0x9c8] sm:$0xf]
    %v2538 = vld [vmem:[#allocation5 + $0x1a] sm:$0x1]
    %v2540 = vlaneseq
    %v2541 = vshrl.u32 %v2540, 7
    %v2542 = vsub.s32 0, %v2541
    %v2543 = vrot.slane %v2538, %v2542
    %v2561 = vunpack.c.l.b16 %v2522
    %v2562 = vunpack.c.l.b16 %v2523
    %v2563 = vunpack.c.l.b16 %v2524
    %v2564 = vunpack.c.l.b16 %v2525
    %v2565 = vunpack.c.l.b16 %v2526
    %v2566 = vunpack.c.l.b16 %v2527
    %v2567 = vunpack.c.l.b16 %v2528
    %v2568 = vunpack.c.l.b16 %v2529
    %v2569 = vunpack.c.l.b16 %v2530
    %v2570 = vunpack.c.l.b16 %v2531
    %v2571 = vunpack.c.l.b16 %v2532
    %v2572 = vunpack.c.l.b16 %v2533
    %v2573 = vunpack.c.l.b16 %v2534
    %v2574 = vunpack.c.l.b16 %v2535
    %v2575 = vunpack.c.l.b16 %v2536
    %v2576 = vunpack.c.l.b16 %v2537
    %v2577 = vpack.c.b16 %v2562, %v2561
    %v2578 = vpack.c.b16 %v2564, %v2563
    %v2579 = vpack.c.b16 %v2566, %v2565
    %v2580 = vpack.c.b16 %v2568, %v2567
    %v2581 = vpack.c.b16 %v2570, %v2569
    %v2582 = vpack.c.b16 %v2572, %v2571
    %v2583 = vpack.c.b16 %v2574, %v2573
    %v2584 = vpack.c.b16 %v2576, %v2575
    %2593 = vmatprep.subr.bf16.mxu0 0
    %2594 = vmatpush1.bf16.msra.mxu0 %v2577
    %2595 = vmatprep.subr.bf16.mxu0 0
    %2596 = vmatpush1.bf16.msra.mxu0 %v2578
    %2597 = vmatprep.subr.bf16.mxu0 0
    %2598 = vmatpush1.bf16.msra.mxu0 %v2579
    %2599 = vmatprep.subr.bf16.mxu0 0
    %2600 = vmatpush1.bf16.msra.mxu0 %v2580
    %2601 = vmatprep.subr.bf16.mxu0 0
    %2602 = vmatpush1.bf16.msra.mxu0 %v2581
    %2603 = vmatprep.subr.bf16.mxu0 0
    %2604 = vmatpush1.bf16.msra.mxu0 %v2582
    %2605 = vmatprep.subr.bf16.mxu0 0
    %2606 = vmatpush1.bf16.msra.mxu0 %v2583
    %2607 = vmatprep.subr.bf16.mxu0 0
    %2608 = vmatpush1.bf16.msra.mxu0 %v2584
    %2609 = vmatprep.subr.bf16.mxu0 0
    %2610 = vmatpush1.bf16.msra.mxu0 0
    %2611 = vmatprep.subr.bf16.mxu0 0
    %2612 = vmatpush1.bf16.msra.mxu0 0
    %2613 = vmatprep.subr.bf16.mxu0 0
    %2614 = vmatpush1.bf16.msra.mxu0 0
    %2615 = vmatprep.subr.bf16.mxu0 0
    %2616 = vmatpush1.bf16.msra.mxu0 0
    %2617 = vmatprep.subr.bf16.mxu0 0
    %2618 = vmatpush1.bf16.msra.mxu0 0
    %2619 = vmatprep.subr.bf16.mxu0 0
    %2620 = vmatpush1.bf16.msra.mxu0 0
    %2621 = vmatprep.subr.bf16.mxu0 0
    %2622 = vmatpush1.bf16.msra.mxu0 0
    %2623 = vmatprep.subr.bf16.mxu0 0
    %2624 = vmatpush1.bf16.msra.mxu0 0
    %2625 = vmatprep.mubr.bf16.mxu0 0
    %2626 = vmatmul.mubr.bf16.gmra.mrb[0].mxu0 %v2521
    %v2627 = vpop.f32.mrb[0].mxu0
    %v2628 = vadd.f32 %v2543, %v2627
    %v2629 = vpop.f32.mrb[0].mxu0
    %v2630 = vpop.f32.mrb[0].mxu0
    %v2631 = vpop.f32.mrb[0].mxu0
    %2632 = vdwg.mxu0
    %v2633 = vxor.u32 %v2628, 2147483648
    %v2634 = vmul.f32 %v2633, 1.442695
    %v2635 = vpow.pop %v2634
    %v2636 = vadd.f32 %v2635, 1.0
    %v2637 = vrcp.pop %v2636
    %v2638 = vmul.f32 1.0, %v2637
    %v2639 = vmul.f32 %v2628, %v2638
    %v2640 = vadd.f32 %v2639, %v2512
    %v2641 = vpack.c.bf16 %v2640, %v2640
    %v2642 = vld [vmem:[#allocation2 + $0x6c] sm:$0xff]
    %v2643 = vld [vmem:[#allocation2 + $0x10c] sm:$0xff]
    %v2644 = vld [vmem:[#allocation2 + $0x1ac] sm:$0xff]
    %v2645 = vld [vmem:[#allocation2 + $0x24c] sm:$0xff]
    %v2646 = vld [vmem:[#allocation2 + $0x2ec] sm:$0xff]
    %v2647 = vld [vmem:[#allocation2 + $0x38c] sm:$0xff]
    %v2648 = vld [vmem:[#allocation2 + $0x42c] sm:$0xff]
    %v2649 = vld [vmem:[#allocation2 + $0x4cc] sm:$0xff]
    %v2650 = vld [vmem:[#allocation2 + $0x56c] sm:$0xff]
    %v2651 = vld [vmem:[#allocation2 + $0x60c] sm:$0xff]
    %v2652 = vld [vmem:[#allocation2 + $0x6ac] sm:$0xff]
    %v2653 = vld [vmem:[#allocation2 + $0x74c] sm:$0xff]
    %v2654 = vld [vmem:[#allocation2 + $0x7ec] sm:$0xff]
    %v2655 = vld [vmem:[#allocation2 + $0x88c] sm:$0xff]
    %v2656 = vld [vmem:[#allocation2 + $0x92c] sm:$0xff]
    %v2657 = vld [vmem:[#allocation2 + $0x9cc] sm:$0xff]
    %v2658 = vld [vmem:[#allocation2 + $0x74] sm:$0xff]
    %v2659 = vld [vmem:[#allocation2 + $0x114] sm:$0xff]
    %v2660 = vld [vmem:[#allocation2 + $0x1b4] sm:$0xff]
    %v2661 = vld [vmem:[#allocation2 + $0x254] sm:$0xff]
    %v2662 = vld [vmem:[#allocation2 + $0x2f4] sm:$0xff]
    %v2663 = vld [vmem:[#allocation2 + $0x394] sm:$0xff]
    %v2664 = vld [vmem:[#allocation2 + $0x434] sm:$0xff]
    %v2665 = vld [vmem:[#allocation2 + $0x4d4] sm:$0xff]
    %v2666 = vld [vmem:[#allocation2 + $0x574] sm:$0xff]
    %v2667 = vld [vmem:[#allocation2 + $0x614] sm:$0xff]
    %v2668 = vld [vmem:[#allocation2 + $0x6b4] sm:$0xff]
    %v2669 = vld [vmem:[#allocation2 + $0x754] sm:$0xff]
    %v2670 = vld [vmem:[#allocation2 + $0x7f4] sm:$0xff]
    %v2671 = vld [vmem:[#allocation2 + $0x894] sm:$0xff]
    %v2672 = vld [vmem:[#allocation2 + $0x934] sm:$0xff]
    %v2673 = vld [vmem:[#allocation2 + $0x9d4] sm:$0xff]
    %v2690 = vunpack.c.l.b16 %v2658
    %v2691 = vunpack.c.h.b16 %v2658
    %v2692 = vunpack.c.l.b16 %v2659
    %v2693 = vunpack.c.h.b16 %v2659
    %v2694 = vunpack.c.l.b16 %v2660
    %v2695 = vunpack.c.h.b16 %v2660
    %v2696 = vunpack.c.l.b16 %v2661
    %v2697 = vunpack.c.h.b16 %v2661
    %v2698 = vunpack.c.l.b16 %v2662
    %v2699 = vunpack.c.h.b16 %v2662
    %v2700 = vunpack.c.l.b16 %v2663
    %v2701 = vunpack.c.h.b16 %v2663
    %v2702 = vunpack.c.l.b16 %v2664
    %v2703 = vunpack.c.h.b16 %v2664
    %v2704 = vunpack.c.l.b16 %v2665
    %v2705 = vunpack.c.h.b16 %v2665
    %v2706 = vunpack.c.l.b16 %v2666
    %v2707 = vunpack.c.h.b16 %v2666
    %v2708 = vunpack.c.l.b16 %v2667
    %v2709 = vunpack.c.h.b16 %v2667
    %v2710 = vunpack.c.l.b16 %v2668
    %v2711 = vunpack.c.h.b16 %v2668
    %v2712 = vunpack.c.l.b16 %v2669
    %v2713 = vunpack.c.h.b16 %v2669
    %v2714 = vunpack.c.l.b16 %v2670
    %v2715 = vunpack.c.h.b16 %v2670
    %v2716 = vunpack.c.l.b16 %v2671
    %v2717 = vunpack.c.h.b16 %v2671
    %v2718 = vunpack.c.l.b16 %v2672
    %v2719 = vunpack.c.h.b16 %v2672
    %v2720 = vunpack.c.l.b16 %v2673
    %v2721 = vunpack.c.h.b16 %v2673
    %v2722 = vpack.c.b16 %v2692, %v2690
    %v2723 = vpack.c.b16 %v2693, %v2691
    %v2724 = vpack.c.b16 %v2696, %v2694
    %v2725 = vpack.c.b16 %v2697, %v2695
    %v2726 = vpack.c.b16 %v2700, %v2698
    %v2727 = vpack.c.b16 %v2701, %v2699
    %v2728 = vpack.c.b16 %v2704, %v2702
    %v2729 = vpack.c.b16 %v2705, %v2703
    %v2730 = vpack.c.b16 %v2708, %v2706
    %v2731 = vpack.c.b16 %v2709, %v2707
    %v2732 = vpack.c.b16 %v2712, %v2710
    %v2733 = vpack.c.b16 %v2713, %v2711
    %v2734 = vpack.c.b16 %v2716, %v2714
    %v2735 = vpack.c.b16 %v2717, %v2715
    %v2736 = vpack.c.b16 %v2720, %v2718
    %v2737 = vpack.c.b16 %v2721, %v2719
    %2754 = vmatprep.subr.bf16.mxu0 %v2723
    %2755 = vmatpush1.bf16.msra.mxu0 %v2722
    %2756 = vmatprep.subr.bf16.mxu0 %v2725
    %2757 = vmatpush1.bf16.msra.mxu0 %v2724
    %2758 = vmatprep.subr.bf16.mxu0 %v2727
    %2759 = vmatpush1.bf16.msra.mxu0 %v2726
    %2760 = vmatprep.subr.bf16.mxu0 %v2729
    %2761 = vmatpush1.bf16.msra.mxu0 %v2728
    %2762 = vmatprep.subr.bf16.mxu0 %v2731
    %2763 = vmatpush1.bf16.msra.mxu0 %v2730
    %2764 = vmatprep.subr.bf16.mxu0 %v2733
    %2765 = vmatpush1.bf16.msra.mxu0 %v2732
    %2766 = vmatprep.subr.bf16.mxu0 %v2735
    %2767 = vmatpush1.bf16.msra.mxu0 %v2734
    %2768 = vmatprep.subr.bf16.mxu0 %v2737
    %2769 = vmatpush1.bf16.msra.mxu0 %v2736
    %2770 = vmatprep.subr.bf16.mxu0 0
    %2771 = vmatpush1.bf16.msra.mxu0 0
    %2772 = vmatprep.subr.bf16.mxu0 0
    %2773 = vmatpush1.bf16.msra.mxu0 0
    %2774 = vmatprep.subr.bf16.mxu0 0
    %2775 = vmatpush1.bf16.msra.mxu0 0
    %2776 = vmatprep.subr.bf16.mxu0 0
    %2777 = vmatpush1.bf16.msra.mxu0 0
    %2778 = vmatprep.subr.bf16.mxu0 0
    %2779 = vmatpush1.bf16.msra.mxu0 0
    %2780 = vmatprep.subr.bf16.mxu0 0
    %2781 = vmatpush1.bf16.msra.mxu0 0
    %2782 = vmatprep.subr.bf16.mxu0 0
    %2783 = vmatpush1.bf16.msra.mxu0 0
    %2784 = vmatprep.subr.bf16.mxu0 0
    %2785 = vmatpush1.bf16.msra.mxu0 0
    %2786 = vmatprep.mubr.bf16.mxu0 0
    %2787 = vmatmul.mubr.bf16.gmra.mrb[0].mxu0 %v1706
    %v2788 = vpop.f32.mrb[0].mxu0
    %v2789 = vadd.f32 0.0, %v2788
    %v2790 = vpop.f32.mrb[0].mxu0
    %v2791 = vadd.f32 0.0, %v2790
    %v2792 = vpop.f32.mrb[0].mxu0
    %v2793 = vpop.f32.mrb[0].mxu0
    %2794 = vdwg.mxu0
    %v2811 = vunpack.c.l.b16 %v2642
    %v2812 = vunpack.c.h.b16 %v2642
    %v2813 = vunpack.c.l.b16 %v2643
    %v2814 = vunpack.c.h.b16 %v2643
    %v2815 = vunpack.c.l.b16 %v2644
    %v2816 = vunpack.c.h.b16 %v2644
    %v2817 = vunpack.c.l.b16 %v2645
    %v2818 = vunpack.c.h.b16 %v2645
    %v2819 = vunpack.c.l.b16 %v2646
    %v2820 = vunpack.c.h.b16 %v2646
    %v2821 = vunpack.c.l.b16 %v2647
    %v2822 = vunpack.c.h.b16 %v2647
    %v2823 = vunpack.c.l.b16 %v2648
    %v2824 = vunpack.c.h.b16 %v2648
    %v2825 = vunpack.c.l.b16 %v2649
    %v2826 = vunpack.c.h.b16 %v2649
    %v2827 = vunpack.c.l.b16 %v2650
    %v2828 = vunpack.c.h.b16 %v2650
    %v2829 = vunpack.c.l.b16 %v2651
    %v2830 = vunpack.c.h.b16 %v2651
    %v2831 = vunpack.c.l.b16 %v2652
    %v2832 = vunpack.c.h.b16 %v2652
    %v2833 = vunpack.c.l.b16 %v2653
    %v2834 = vunpack.c.h.b16 %v2653
    %v2835 = vunpack.c.l.b16 %v2654
    %v2836 = vunpack.c.h.b16 %v2654
    %v2837 = vunpack.c.l.b16 %v2655
    %v2838 = vunpack.c.h.b16 %v2655
    %v2839 = vunpack.c.l.b16 %v2656
    %v2840 = vunpack.c.h.b16 %v2656
    %v2841 = vunpack.c.l.b16 %v2657
    %v2842 = vunpack.c.h.b16 %v2657
    %v2843 = vpack.c.b16 %v2813, %v2811
    %v2844 = vpack.c.b16 %v2814, %v2812
    %v2845 = vpack.c.b16 %v2817, %v2815
    %v2846 = vpack.c.b16 %v2818, %v2816
    %v2847 = vpack.c.b16 %v2821, %v2819
    %v2848 = vpack.c.b16 %v2822, %v2820
    %v2849 = vpack.c.b16 %v2825, %v2823
    %v2850 = vpack.c.b16 %v2826, %v2824
    %v2851 = vpack.c.b16 %v2829, %v2827
    %v2852 = vpack.c.b16 %v2830, %v2828
    %v2853 = vpack.c.b16 %v2833, %v2831
    %v2854 = vpack.c.b16 %v2834, %v2832
    %v2855 = vpack.c.b16 %v2837, %v2835
    %v2856 = vpack.c.b16 %v2838, %v2836
    %v2857 = vpack.c.b16 %v2841, %v2839
    %v2858 = vpack.c.b16 %v2842, %v2840
    %2875 = vmatprep.subr.bf16.mxu0 %v2844
    %2876 = vmatpush1.bf16.msra.mxu0 %v2843
    %2877 = vmatprep.subr.bf16.mxu0 %v2846
    %2878 = vmatpush1.bf16.msra.mxu0 %v2845
    %2879 = vmatprep.subr.bf16.mxu0 %v2848
    %2880 = vmatpush1.bf16.msra.mxu0 %v2847
    %2881 = vmatprep.subr.bf16.mxu0 %v2850
    %2882 = vmatpush1.bf16.msra.mxu0 %v2849
    %2883 = vmatprep.subr.bf16.mxu0 %v2852
    %2884 = vmatpush1.bf16.msra.mxu0 %v2851
    %2885 = vmatprep.subr.bf16.mxu0 %v2854
    %2886 = vmatpush1.bf16.msra.mxu0 %v2853
    %2887 = vmatprep.subr.bf16.mxu0 %v2856
    %2888 = vmatpush1.bf16.msra.mxu0 %v2855
    %2889 = vmatprep.subr.bf16.mxu0 %v2858
    %2890 = vmatpush1.bf16.msra.mxu0 %v2857
    %2891 = vmatprep.subr.bf16.mxu0 0
    %2892 = vmatpush1.bf16.msra.mxu0 0
    %2893 = vmatprep.subr.bf16.mxu0 0
    %2894 = vmatpush1.bf16.msra.mxu0 0
    %2895 = vmatprep.subr.bf16.mxu0 0
    %2896 = vmatpush1.bf16.msra.mxu0 0
    %2897 = vmatprep.subr.bf16.mxu0 0
    %2898 = vmatpush1.bf16.msra.mxu0 0
    %2899 = vmatprep.subr.bf16.mxu0 0
    %2900 = vmatpush1.bf16.msra.mxu0 0
    %2901 = vmatprep.subr.bf16.mxu0 0
    %2902 = vmatpush1.bf16.msra.mxu0 0
    %2903 = vmatprep.subr.bf16.mxu0 0
    %2904 = vmatpush1.bf16.msra.mxu0 0
    %2905 = vmatprep.subr.bf16.mxu0 0
    %2906 = vmatpush1.bf16.msra.mxu0 0
    %2907 = vmatprep.mubr.bf16.mxu0 0
    %2908 = vmatmul.mubr.bf16.gmra.mrb[0].mxu0 %v2641
    %v2909 = vpop.f32.mrb[0].mxu0
    %v2910 = vadd.f32 %v2789, %v2909
    %v2911 = vpop.f32.mrb[0].mxu0
    %v2912 = vadd.f32 %v2791, %v2911
    %v2913 = vpop.f32.mrb[0].mxu0
    %v2914 = vpop.f32.mrb[0].mxu0
    %2915 = vdwg.mxu0
    %v2916 = vld [vmem:[#allocation5 + $0x1b] sm:$0x3]
    %v2918 = vlaneseq
    %v2919 = vshrl.u32 %v2918, 7
    %v2920 = vsub.s32 0, %v2919
    %v2921 = vrot.slane %v2916, %v2920
    %v2922 = vlaneseq
    %v2923 = vshrl.u32 %v2922, 7
    %v2924 = vsub.s32 1, %v2923
    %v2925 = vrot.slane %v2916, %v2924
    %v2928 = vadd.f32 %v2910, %v2921
    %v2929 = vadd.f32 %v2912, %v2925
    %v2930 = vxor.u32 %v2928, 2147483648
    %v2931 = vmul.f32 %v2930, 1.442695
    %v2932 = vpow.pop %v2931
    %v2933 = vadd.f32 %v2932, 1.0
    %v2934 = vrcp.pop %v2933
    %v2935 = vmul.f32 1.0, %v2934
    %v2936 = vmul.f32 %v2928, %v2935
    %v2937 = vadd.f32 %v2936, %v794
    %v2938 = vpack.c.bf16 %v2937, %v2937
    %v2939 = vld [vmem:[#allocation2 + $0x7c] sm:$0xf]
    %v2940 = vld [vmem:[#allocation2 + $0x11c] sm:$0xf]
    %v2941 = vld [vmem:[#allocation2 + $0x1bc] sm:$0xf]
    %v2942 = vld [vmem:[#allocation2 + $0x25c] sm:$0xf]
    %v2943 = vld [vmem:[#allocation2 + $0x2fc] sm:$0xf]
    %v2944 = vld [vmem:[#allocation2 + $0x39c] sm:$0xf]
    %v2945 = vld [vmem:[#allocation2 + $0x43c] sm:$0xf]
    %v2946 = vld [vmem:[#allocation2 + $0x4dc] sm:$0xf]
    %v2947 = vld [vmem:[#allocation2 + $0x57c] sm:$0xf]
    %v2948 = vld [vmem:[#allocation2 + $0x61c] sm:$0xf]
    %v2949 = vld [vmem:[#allocation2 + $0x6bc] sm:$0xf]
    %v2950 = vld [vmem:[#allocation2 + $0x75c] sm:$0xf]
    %v2951 = vld [vmem:[#allocation2 + $0x7fc] sm:$0xf]
    %v2952 = vld [vmem:[#allocation2 + $0x89c] sm:$0xf]
    %v2953 = vld [vmem:[#allocation2 + $0x93c] sm:$0xf]
    %v2954 = vld [vmem:[#allocation2 + $0x9dc] sm:$0xf]
    %v2955 = vld [vmem:[#allocation5 + $0x1f] sm:$0x1]
    %v2957 = vlaneseq
    %v2958 = vshrl.u32 %v2957, 7
    %v2959 = vsub.s32 0, %v2958
    %v2960 = vrot.slane %v2955, %v2959
    %v2978 = vunpack.c.l.b16 %v2939
    %v2979 = vunpack.c.l.b16 %v2940
    %v2980 = vunpack.c.l.b16 %v2941
    %v2981 = vunpack.c.l.b16 %v2942
    %v2982 = vunpack.c.l.b16 %v2943
    %v2983 = vunpack.c.l.b16 %v2944
    %v2984 = vunpack.c.l.b16 %v2945
    %v2985 = vunpack.c.l.b16 %v2946
    %v2986 = vunpack.c.l.b16 %v2947
    %v2987 = vunpack.c.l.b16 %v2948
    %v2988 = vunpack.c.l.b16 %v2949
    %v2989 = vunpack.c.l.b16 %v2950
    %v2990 = vunpack.c.l.b16 %v2951
    %v2991 = vunpack.c.l.b16 %v2952
    %v2992 = vunpack.c.l.b16 %v2953
    %v2993 = vunpack.c.l.b16 %v2954
    %v2994 = vpack.c.b16 %v2979, %v2978
    %v2995 = vpack.c.b16 %v2981, %v2980
    %v2996 = vpack.c.b16 %v2983, %v2982
    %v2997 = vpack.c.b16 %v2985, %v2984
    %v2998 = vpack.c.b16 %v2987, %v2986
    %v2999 = vpack.c.b16 %v2989, %v2988
    %v3000 = vpack.c.b16 %v2991, %v2990
    %v3001 = vpack.c.b16 %v2993, %v2992
    %3010 = vmatprep.subr.bf16.mxu0 0
    %3011 = vmatpush1.bf16.msra.mxu0 %v2994
    %3012 = vmatprep.subr.bf16.mxu0 0
    %3013 = vmatpush1.bf16.msra.mxu0 %v2995
    %3014 = vmatprep.subr.bf16.mxu0 0
    %3015 = vmatpush1.bf16.msra.mxu0 %v2996
    %3016 = vmatprep.subr.bf16.mxu0 0
    %3017 = vmatpush1.bf16.msra.mxu0 %v2997
    %3018 = vmatprep.subr.bf16.mxu0 0
    %3019 = vmatpush1.bf16.msra.mxu0 %v2998
    %3020 = vmatprep.subr.bf16.mxu0 0
    %3021 = vmatpush1.bf16.msra.mxu0 %v2999
    %3022 = vmatprep.subr.bf16.mxu0 0
    %3023 = vmatpush1.bf16.msra.mxu0 %v3000
    %3024 = vmatprep.subr.bf16.mxu0 0
    %3025 = vmatpush1.bf16.msra.mxu0 %v3001
    %3026 = vmatprep.subr.bf16.mxu0 0
    %3027 = vmatpush1.bf16.msra.mxu0 0
    %3028 = vmatprep.subr.bf16.mxu0 0
    %3029 = vmatpush1.bf16.msra.mxu0 0
    %3030 = vmatprep.subr.bf16.mxu0 0
    %3031 = vmatpush1.bf16.msra.mxu0 0
    %3032 = vmatprep.subr.bf16.mxu0 0
    %3033 = vmatpush1.bf16.msra.mxu0 0
    %3034 = vmatprep.subr.bf16.mxu0 0
    %3035 = vmatpush1.bf16.msra.mxu0 0
    %3036 = vmatprep.subr.bf16.mxu0 0
    %3037 = vmatpush1.bf16.msra.mxu0 0
    %3038 = vmatprep.subr.bf16.mxu0 0
    %3039 = vmatpush1.bf16.msra.mxu0 0
    %3040 = vmatprep.subr.bf16.mxu0 0
    %3041 = vmatpush1.bf16.msra.mxu0 0
    %3042 = vmatprep.mubr.bf16.mxu0 0
    %3043 = vmatmul.mubr.bf16.gmra.mrb[0].mxu0 %v2938
    %v3044 = vpop.f32.mrb[0].mxu0
    %v3045 = vadd.f32 %v2960, %v3044
    %v3046 = vpop.f32.mrb[0].mxu0
    %v3047 = vpop.f32.mrb[0].mxu0
    %v3048 = vpop.f32.mrb[0].mxu0
    %3049 = vdwg.mxu0
    %v3050 = vxor.u32 %v3045, 2147483648
    %v3051 = vmul.f32 %v3050, 1.442695
    %v3052 = vpow.pop %v3051
    %v3053 = vadd.f32 %v3052, 1.0
    %v3054 = vrcp.pop %v3053
    %v3055 = vmul.f32 1.0, %v3054
    %v3056 = vmul.f32 %v3045, %v3055
    %v3057 = vadd.f32 %v3056, %v2929
    %v3058 = vpack.c.bf16 %v3057, %v3057
    %v3059 = vld [vmem:[#allocation2 + $0x80] sm:$0xff]
    %v3060 = vld [vmem:[#allocation2 + $0x120] sm:$0xff]
    %v3061 = vld [vmem:[#allocation2 + $0x1c0] sm:$0xff]
    %v3062 = vld [vmem:[#allocation2 + $0x260] sm:$0xff]
    %v3063 = vld [vmem:[#allocation2 + $0x300] sm:$0xff]
    %v3064 = vld [vmem:[#allocation2 + $0x3a0] sm:$0xff]
    %v3065 = vld [vmem:[#allocation2 + $0x440] sm:$0xff]
    %v3066 = vld [vmem:[#allocation2 + $0x4e0] sm:$0xff]
    %v3067 = vld [vmem:[#allocation2 + $0x580] sm:$0xff]
    %v3068 = vld [vmem:[#allocation2 + $0x620] sm:$0xff]
    %v3069 = vld [vmem:[#allocation2 + $0x6c0] sm:$0xff]
    %v3070 = vld [vmem:[#allocation2 + $0x760] sm:$0xff]
    %v3071 = vld [vmem:[#allocation2 + $0x800] sm:$0xff]
    %v3072 = vld [vmem:[#allocation2 + $0x8a0] sm:$0xff]
    %v3073 = vld [vmem:[#allocation2 + $0x940] sm:$0xff]
    %v3074 = vld [vmem:[#allocation2 + $0x9e0] sm:$0xff]
    %v3075 = vld [vmem:[#allocation2 + $0x88] sm:$0xff]
    %v3076 = vld [vmem:[#allocation2 + $0x128] sm:$0xff]
    %v3077 = vld [vmem:[#allocation2 + $0x1c8] sm:$0xff]
    %v3078 = vld [vmem:[#allocation2 + $0x268] sm:$0xff]
    %v3079 = vld [vmem:[#allocation2 + $0x308] sm:$0xff]
    %v3080 = vld [vmem:[#allocation2 + $0x3a8] sm:$0xff]
    %v3081 = vld [vmem:[#allocation2 + $0x448] sm:$0xff]
    %v3082 = vld [vmem:[#allocation2 + $0x4e8] sm:$0xff]
    %v3083 = vld [vmem:[#allocation2 + $0x588] sm:$0xff]
    %v3084 = vld [vmem:[#allocation2 + $0x628] sm:$0xff]
    %v3085 = vld [vmem:[#allocation2 + $0x6c8] sm:$0xff]
    %v3086 = vld [vmem:[#allocation2 + $0x768] sm:$0xff]
    %v3087 = vld [vmem:[#allocation2 + $0x808] sm:$0xff]
    %v3088 = vld [vmem:[#allocation2 + $0x8a8] sm:$0xff]
    %v3089 = vld [vmem:[#allocation2 + $0x948] sm:$0xff]
    %v3090 = vld [vmem:[#allocation2 + $0x9e8] sm:$0xff]
    %v3107 = vunpack.c.l.b16 %v3075
    %v3108 = vunpack.c.h.b16 %v3075
    %v3109 = vunpack.c.l.b16 %v3076
    %v3110 = vunpack.c.h.b16 %v3076
    %v3111 = vunpack.c.l.b16 %v3077
    %v3112 = vunpack.c.h.b16 %v3077
    %v3113 = vunpack.c.l.b16 %v3078
    %v3114 = vunpack.c.h.b16 %v3078
    %v3115 = vunpack.c.l.b16 %v3079
    %v3116 = vunpack.c.h.b16 %v3079
    %v3117 = vunpack.c.l.b16 %v3080
    %v3118 = vunpack.c.h.b16 %v3080
    %v3119 = vunpack.c.l.b16 %v3081
    %v3120 = vunpack.c.h.b16 %v3081
    %v3121 = vunpack.c.l.b16 %v3082
    %v3122 = vunpack.c.h.b16 %v3082
    %v3123 = vunpack.c.l.b16 %v3083
    %v3124 = vunpack.c.h.b16 %v3083
    %v3125 = vunpack.c.l.b16 %v3084
    %v3126 = vunpack.c.h.b16 %v3084
    %v3127 = vunpack.c.l.b16 %v3085
    %v3128 = vunpack.c.h.b16 %v3085
    %v3129 = vunpack.c.l.b16 %v3086
    %v3130 = vunpack.c.h.b16 %v3086
    %v3131 = vunpack.c.l.b16 %v3087
    %v3132 = vunpack.c.h.b16 %v3087
    %v3133 = vunpack.c.l.b16 %v3088
    %v3134 = vunpack.c.h.b16 %v3088
    %v3135 = vunpack.c.l.b16 %v3089
    %v3136 = vunpack.c.h.b16 %v3089
    %v3137 = vunpack.c.l.b16 %v3090
    %v3138 = vunpack.c.h.b16 %v3090
    %v3139 = vpack.c.b16 %v3109, %v3107
    %v3140 = vpack.c.b16 %v3110, %v3108
    %v3141 = vpack.c.b16 %v3113, %v3111
    %v3142 = vpack.c.b16 %v3114, %v3112
    %v3143 = vpack.c.b16 %v3117, %v3115
    %v3144 = vpack.c.b16 %v3118, %v3116
    %v3145 = vpack.c.b16 %v3121, %v3119
    %v3146 = vpack.c.b16 %v3122, %v3120
    %v3147 = vpack.c.b16 %v3125, %v3123
    %v3148 = vpack.c.b16 %v3126, %v3124
    %v3149 = vpack.c.b16 %v3129, %v3127
    %v3150 = vpack.c.b16 %v3130, %v3128
    %v3151 = vpack.c.b16 %v3133, %v3131
    %v3152 = vpack.c.b16 %v3134, %v3132
    %v3153 = vpack.c.b16 %v3137, %v3135
    %v3154 = vpack.c.b16 %v3138, %v3136
    %3171 = vmatprep.subr.bf16.mxu0 %v3140
    %3172 = vmatpush1.bf16.msra.mxu0 %v3139
    %3173 = vmatprep.subr.bf16.mxu0 %v3142
    %3174 = vmatpush1.bf16.msra.mxu0 %v3141
    %3175 = vmatprep.subr.bf16.mxu0 %v3144
    %3176 = vmatpush1.bf16.msra.mxu0 %v3143
    %3177 = vmatprep.subr.bf16.mxu0 %v3146
    %3178 = vmatpush1.bf16.msra.mxu0 %v3145
    %3179 = vmatprep.subr.bf16.mxu0 %v3148
    %3180 = vmatpush1.bf16.msra.mxu0 %v3147
    %3181 = vmatprep.subr.bf16.mxu0 %v3150
    %3182 = vmatpush1.bf16.msra.mxu0 %v3149
    %3183 = vmatprep.subr.bf16.mxu0 %v3152
    %3184 = vmatpush1.bf16.msra.mxu0 %v3151
    %3185 = vmatprep.subr.bf16.mxu0 %v3154
    %3186 = vmatpush1.bf16.msra.mxu0 %v3153
    %3187 = vmatprep.subr.bf16.mxu0 0
    %3188 = vmatpush1.bf16.msra.mxu0 0
    %3189 = vmatprep.subr.bf16.mxu0 0
    %3190 = vmatpush1.bf16.msra.mxu0 0
    %3191 = vmatprep.subr.bf16.mxu0 0
    %3192 = vmatpush1.bf16.msra.mxu0 0
    %3193 = vmatprep.subr.bf16.mxu0 0
    %3194 = vmatpush1.bf16.msra.mxu0 0
    %3195 = vmatprep.subr.bf16.mxu0 0
    %3196 = vmatpush1.bf16.msra.mxu0 0
    %3197 = vmatprep.subr.bf16.mxu0 0
    %3198 = vmatpush1.bf16.msra.mxu0 0
    %3199 = vmatprep.subr.bf16.mxu0 0
    %3200 = vmatpush1.bf16.msra.mxu0 0
    %3201 = vmatprep.subr.bf16.mxu0 0
    %3202 = vmatpush1.bf16.msra.mxu0 0
    %3203 = vmatprep.mubr.bf16.mxu0 0
    %3204 = vmatmul.mubr.bf16.gmra.mrb[0].mxu0 %v1428
    %v3205 = vpop.f32.mrb[0].mxu0
    %v3206 = vadd.f32 0.0, %v3205
    %v3207 = vpop.f32.mrb[0].mxu0
    %v3208 = vadd.f32 0.0, %v3207
    %v3209 = vpop.f32.mrb[0].mxu0
    %v3210 = vpop.f32.mrb[0].mxu0
    %3211 = vdwg.mxu0
    %v3228 = vunpack.c.l.b16 %v3059
    %v3229 = vunpack.c.h.b16 %v3059
    %v3230 = vunpack.c.l.b16 %v3060
    %v3231 = vunpack.c.h.b16 %v3060
    %v3232 = vunpack.c.l.b16 %v3061
    %v3233 = vunpack.c.h.b16 %v3061
    %v3234 = vunpack.c.l.b16 %v3062
    %v3235 = vunpack.c.h.b16 %v3062
    %v3236 = vunpack.c.l.b16 %v3063
    %v3237 = vunpack.c.h.b16 %v3063
    %v3238 = vunpack.c.l.b16 %v3064
    %v3239 = vunpack.c.h.b16 %v3064
    %v3240 = vunpack.c.l.b16 %v3065
    %v3241 = vunpack.c.h.b16 %v3065
    %v3242 = vunpack.c.l.b16 %v3066
    %v3243 = vunpack.c.h.b16 %v3066
    %v3244 = vunpack.c.l.b16 %v3067
    %v3245 = vunpack.c.h.b16 %v3067
    %v3246 = vunpack.c.l.b16 %v3068
    %v3247 = vunpack.c.h.b16 %v3068
    %v3248 = vunpack.c.l.b16 %v3069
    %v3249 = vunpack.c.h.b16 %v3069
    %v3250 = vunpack.c.l.b16 %v3070
    %v3251 = vunpack.c.h.b16 %v3070
    %v3252 = vunpack.c.l.b16 %v3071
    %v3253 = vunpack.c.h.b16 %v3071
    %v3254 = vunpack.c.l.b16 %v3072
    %v3255 = vunpack.c.h.b16 %v3072
    %v3256 = vunpack.c.l.b16 %v3073
    %v3257 = vunpack.c.h.b16 %v3073
    %v3258 = vunpack.c.l.b16 %v3074
    %v3259 = vunpack.c.h.b16 %v3074
    %v3260 = vpack.c.b16 %v3230, %v3228
    %v3261 = vpack.c.b16 %v3231, %v3229
    %v3262 = vpack.c.b16 %v3234, %v3232
    %v3263 = vpack.c.b16 %v3235, %v3233
    %v3264 = vpack.c.b16 %v3238, %v3236
    %v3265 = vpack.c.b16 %v3239, %v3237
    %v3266 = vpack.c.b16 %v3242, %v3240
    %v3267 = vpack.c.b16 %v3243, %v3241
    %v3268 = vpack.c.b16 %v3246, %v3244
    %v3269 = vpack.c.b16 %v3247, %v3245
    %v3270 = vpack.c.b16 %v3250, %v3248
    %v3271 = vpack.c.b16 %v3251, %v3249
    %v3272 = vpack.c.b16 %v3254, %v3252
    %v3273 = vpack.c.b16 %v3255, %v3253
    %v3274 = vpack.c.b16 %v3258, %v3256
    %v3275 = vpack.c.b16 %v3259, %v3257
    %3292 = vmatprep.subr.bf16.mxu0 %v3261
    %3293 = vmatpush1.bf16.msra.mxu0 %v3260
    %3294 = vmatprep.subr.bf16.mxu0 %v3263
    %3295 = vmatpush1.bf16.msra.mxu0 %v3262
    %3296 = vmatprep.subr.bf16.mxu0 %v3265
    %3297 = vmatpush1.bf16.msra.mxu0 %v3264
    %3298 = vmatprep.subr.bf16.mxu0 %v3267
    %3299 = vmatpush1.bf16.msra.mxu0 %v3266
    %3300 = vmatprep.subr.bf16.mxu0 %v3269
    %3301 = vmatpush1.bf16.msra.mxu0 %v3268
    %3302 = vmatprep.subr.bf16.mxu0 %v3271
    %3303 = vmatpush1.bf16.msra.mxu0 %v3270
    %3304 = vmatprep.subr.bf16.mxu0 %v3273
    %3305 = vmatpush1.bf16.msra.mxu0 %v3272
    %3306 = vmatprep.subr.bf16.mxu0 %v3275
    %3307 = vmatpush1.bf16.msra.mxu0 %v3274
    %3308 = vmatprep.subr.bf16.mxu0 0
    %3309 = vmatpush1.bf16.msra.mxu0 0
    %3310 = vmatprep.subr.bf16.mxu0 0
    %3311 = vmatpush1.bf16.msra.mxu0 0
    %3312 = vmatprep.subr.bf16.mxu0 0
    %3313 = vmatpush1.bf16.msra.mxu0 0
    %3314 = vmatprep.subr.bf16.mxu0 0
    %3315 = vmatpush1.bf16.msra.mxu0 0
    %3316 = vmatprep.subr.bf16.mxu0 0
    %3317 = vmatpush1.bf16.msra.mxu0 0
    %3318 = vmatprep.subr.bf16.mxu0 0
    %3319 = vmatpush1.bf16.msra.mxu0 0
    %3320 = vmatprep.subr.bf16.mxu0 0
    %3321 = vmatpush1.bf16.msra.mxu0 0
    %3322 = vmatprep.subr.bf16.mxu0 0
    %3323 = vmatpush1.bf16.msra.mxu0 0
    %3324 = vmatprep.mubr.bf16.mxu0 0
    %3325 = vmatmul.mubr.bf16.gmra.mrb[0].mxu0 %v3058
    %v3326 = vpop.f32.mrb[0].mxu0
    %v3327 = vadd.f32 %v3206, %v3326
    %v3328 = vpop.f32.mrb[0].mxu0
    %v3329 = vadd.f32 %v3208, %v3328
    %v3330 = vpop.f32.mrb[0].mxu0
    %v3331 = vpop.f32.mrb[0].mxu0
    %3332 = vdwg.mxu0
    %v3333 = vld [vmem:[#allocation5 + $0x20] sm:$0x3]
    %v3335 = vlaneseq
    %v3336 = vshrl.u32 %v3335, 7
    %v3337 = vsub.s32 0, %v3336
    %v3338 = vrot.slane %v3333, %v3337
    %v3339 = vlaneseq
    %v3340 = vshrl.u32 %v3339, 7
    %v3341 = vsub.s32 1, %v3340
    %v3342 = vrot.slane %v3333, %v3341
    %v3345 = vadd.f32 %v3327, %v3338
    %v3346 = vadd.f32 %v3329, %v3342
    %v3347 = vxor.u32 %v3345, 2147483648
    %v3348 = vmul.f32 %v3347, 1.442695
    %v3349 = vpow.pop %v3348
    %v3350 = vadd.f32 %v3349, 1.0
    %v3351 = vrcp.pop %v3350
    %v3352 = vmul.f32 1.0, %v3351
    %v3353 = vmul.f32 %v3345, %v3352
    %v3354 = vadd.f32 %v3353, %v833
    %v3355 = vpack.c.bf16 %v3354, %v3354
    %v3356 = vld [vmem:[#allocation2 + $0x90] sm:$0xf]
    %v3357 = vld [vmem:[#allocation2 + $0x130] sm:$0xf]
    %v3358 = vld [vmem:[#allocation2 + $0x1d0] sm:$0xf]
    %v3359 = vld [vmem:[#allocation2 + $0x270] sm:$0xf]
    %v3360 = vld [vmem:[#allocation2 + $0x310] sm:$0xf]
    %v3361 = vld [vmem:[#allocation2 + $0x3b0] sm:$0xf]
    %v3362 = vld [vmem:[#allocation2 + $0x450] sm:$0xf]
    %v3363 = vld [vmem:[#allocation2 + $0x4f0] sm:$0xf]
    %v3364 = vld [vmem:[#allocation2 + $0x590] sm:$0xf]
    %v3365 = vld [vmem:[#allocation2 + $0x630] sm:$0xf]
    %v3366 = vld [vmem:[#allocation2 + $0x6d0] sm:$0xf]
    %v3367 = vld [vmem:[#allocation2 + $0x770] sm:$0xf]
    %v3368 = vld [vmem:[#allocation2 + $0x810] sm:$0xf]
    %v3369 = vld [vmem:[#allocation2 + $0x8b0] sm:$0xf]
    %v3370 = vld [vmem:[#allocation2 + $0x950] sm:$0xf]
    %v3371 = vld [vmem:[#allocation2 + $0x9f0] sm:$0xf]
    %v3372 = vld [vmem:[#allocation5 + $0x24] sm:$0x1]
    %v3374 = vlaneseq
    %v3375 = vshrl.u32 %v3374, 7
    %v3376 = vsub.s32 0, %v3375
    %v3377 = vrot.slane %v3372, %v3376
    %v3395 = vunpack.c.l.b16 %v3356
    %v3396 = vunpack.c.l.b16 %v3357
    %v3397 = vunpack.c.l.b16 %v3358
    %v3398 = vunpack.c.l.b16 %v3359
    %v3399 = vunpack.c.l.b16 %v3360
    %v3400 = vunpack.c.l.b16 %v3361
    %v3401 = vunpack.c.l.b16 %v3362
    %v3402 = vunpack.c.l.b16 %v3363
    %v3403 = vunpack.c.l.b16 %v3364
    %v3404 = vunpack.c.l.b16 %v3365
    %v3405 = vunpack.c.l.b16 %v3366
    %v3406 = vunpack.c.l.b16 %v3367
    %v3407 = vunpack.c.l.b16 %v3368
    %v3408 = vunpack.c.l.b16 %v3369
    %v3409 = vunpack.c.l.b16 %v3370
    %v3410 = vunpack.c.l.b16 %v3371
    %v3411 = vpack.c.b16 %v3396, %v3395
    %v3412 = vpack.c.b16 %v3398, %v3397
    %v3413 = vpack.c.b16 %v3400, %v3399
    %v3414 = vpack.c.b16 %v3402, %v3401
    %v3415 = vpack.c.b16 %v3404, %v3403
    %v3416 = vpack.c.b16 %v3406, %v3405
    %v3417 = vpack.c.b16 %v3408, %v3407
    %v3418 = vpack.c.b16 %v3410, %v3409
    %3427 = vmatprep.subr.bf16.mxu0 0
    %3428 = vmatpush1.bf16.msra.mxu0 %v3411
    %3429 = vmatprep.subr.bf16.mxu0 0
    %3430 = vmatpush1.bf16.msra.mxu0 %v3412
    %3431 = vmatprep.subr.bf16.mxu0 0
    %3432 = vmatpush1.bf16.msra.mxu0 %v3413
    %3433 = vmatprep.subr.bf16.mxu0 0
    %3434 = vmatpush1.bf16.msra.mxu0 %v3414
    %3435 = vmatprep.subr.bf16.mxu0 0
    %3436 = vmatpush1.bf16.msra.mxu0 %v3415
    %3437 = vmatprep.subr.bf16.mxu0 0
    %3438 = vmatpush1.bf16.msra.mxu0 %v3416
    %3439 = vmatprep.subr.bf16.mxu0 0
    %3440 = vmatpush1.bf16.msra.mxu0 %v3417
    %3441 = vmatprep.subr.bf16.mxu0 0
    %3442 = vmatpush1.bf16.msra.mxu0 %v3418
    %3443 = vmatprep.subr.bf16.mxu0 0
    %3444 = vmatpush1.bf16.msra.mxu0 0
    %3445 = vmatprep.subr.bf16.mxu0 0
    %3446 = vmatpush1.bf16.msra.mxu0 0
    %3447 = vmatprep.subr.bf16.mxu0 0
    %3448 = vmatpush1.bf16.msra.mxu0 0
    %3449 = vmatprep.subr.bf16.mxu0 0
    %3450 = vmatpush1.bf16.msra.mxu0 0
    %3451 = vmatprep.subr.bf16.mxu0 0
    %3452 = vmatpush1.bf16.msra.mxu0 0
    %3453 = vmatprep.subr.bf16.mxu0 0
    %3454 = vmatpush1.bf16.msra.mxu0 0
    %3455 = vmatprep.subr.bf16.mxu0 0
    %3456 = vmatpush1.bf16.msra.mxu0 0
    %3457 = vmatprep.subr.bf16.mxu0 0
    %3458 = vmatpush1.bf16.msra.mxu0 0
    %3459 = vmatprep.mubr.bf16.mxu0 0
    %3460 = vmatmul.mubr.bf16.gmra.mrb[0].mxu0 %v3355
    %v3461 = vpop.f32.mrb[0].mxu0
    %v3462 = vadd.f32 %v3377, %v3461
    %v3463 = vpop.f32.mrb[0].mxu0
    %v3464 = vpop.f32.mrb[0].mxu0
    %v3465 = vpop.f32.mrb[0].mxu0
    %3466 = vdwg.mxu0
    %v3467 = vxor.u32 %v3462, 2147483648
    %v3468 = vmul.f32 %v3467, 1.442695
    %v3469 = vpow.pop %v3468
    %v3470 = vadd.f32 %v3469, 1.0
    %v3471 = vrcp.pop %v3470
    %v3472 = vmul.f32 1.0, %v3471
    %v3473 = vmul.f32 %v3462, %v3472
    %v3474 = vadd.f32 %v3473, %v3346
    %v3475 = vpack.c.bf16 %v3474, %v3474
    %v3476 = vld [vmem:[#allocation2 + $0x94] sm:$0xf]
    %v3477 = vld [vmem:[#allocation2 + $0x134] sm:$0xf]
    %v3478 = vld [vmem:[#allocation2 + $0x1d4] sm:$0xf]
    %v3479 = vld [vmem:[#allocation2 + $0x274] sm:$0xf]
    %v3480 = vld [vmem:[#allocation2 + $0x314] sm:$0xf]
    %v3481 = vld [vmem:[#allocation2 + $0x3b4] sm:$0xf]
    %v3482 = vld [vmem:[#allocation2 + $0x454] sm:$0xf]
    %v3483 = vld [vmem:[#allocation2 + $0x4f4] sm:$0xf]
    %v3484 = vld [vmem:[#allocation2 + $0x594] sm:$0xf]
    %v3485 = vld [vmem:[#allocation2 + $0x634] sm:$0xf]
    %v3486 = vld [vmem:[#allocation2 + $0x6d4] sm:$0xf]
    %v3487 = vld [vmem:[#allocation2 + $0x774] sm:$0xf]
    %v3488 = vld [vmem:[#allocation2 + $0x814] sm:$0xf]
    %v3489 = vld [vmem:[#allocation2 + $0x8b4] sm:$0xf]
    %v3490 = vld [vmem:[#allocation2 + $0x954] sm:$0xf]
    %v3491 = vld [vmem:[#allocation2 + $0x9f4] sm:$0xf]
    %v3492 = vpack.c.bf16 %v1075, %v1075
    %v3493 = vld [vmem:[#allocation2 + $0x98] sm:$0xf]
    %v3494 = vld [vmem:[#allocation2 + $0x138] sm:$0xf]
    %v3495 = vld [vmem:[#allocation2 + $0x1d8] sm:$0xf]
    %v3496 = vld [vmem:[#allocation2 + $0x278] sm:$0xf]
    %v3497 = vld [vmem:[#allocation2 + $0x318] sm:$0xf]
    %v3498 = vld [vmem:[#allocation2 + $0x3b8] sm:$0xf]
    %v3499 = vld [vmem:[#allocation2 + $0x458] sm:$0xf]
    %v3500 = vld [vmem:[#allocation2 + $0x4f8] sm:$0xf]
    %v3501 = vld [vmem:[#allocation2 + $0x598] sm:$0xf]
    %v3502 = vld [vmem:[#allocation2 + $0x638] sm:$0xf]
    %v3503 = vld [vmem:[#allocation2 + $0x6d8] sm:$0xf]
    %v3504 = vld [vmem:[#allocation2 + $0x778] sm:$0xf]
    %v3505 = vld [vmem:[#allocation2 + $0x818] sm:$0xf]
    %v3506 = vld [vmem:[#allocation2 + $0x8b8] sm:$0xf]
    %v3507 = vld [vmem:[#allocation2 + $0x958] sm:$0xf]
    %v3508 = vld [vmem:[#allocation2 + $0x9f8] sm:$0xf]
    %v3525 = vunpack.c.l.b16 %v3493
    %v3526 = vunpack.c.l.b16 %v3494
    %v3527 = vunpack.c.l.b16 %v3495
    %v3528 = vunpack.c.l.b16 %v3496
    %v3529 = vunpack.c.l.b16 %v3497
    %v3530 = vunpack.c.l.b16 %v3498
    %v3531 = vunpack.c.l.b16 %v3499
    %v3532 = vunpack.c.l.b16 %v3500
    %v3533 = vunpack.c.l.b16 %v3501
    %v3534 = vunpack.c.l.b16 %v3502
    %v3535 = vunpack.c.l.b16 %v3503
    %v3536 = vunpack.c.l.b16 %v3504
    %v3537 = vunpack.c.l.b16 %v3505
    %v3538 = vunpack.c.l.b16 %v3506
    %v3539 = vunpack.c.l.b16 %v3507
    %v3540 = vunpack.c.l.b16 %v3508
    %v3541 = vpack.c.b16 %v3526, %v3525
    %v3542 = vpack.c.b16 %v3528, %v3527
    %v3543 = vpack.c.b16 %v3530, %v3529
    %v3544 = vpack.c.b16 %v3532, %v3531
    %v3545 = vpack.c.b16 %v3534, %v3533
    %v3546 = vpack.c.b16 %v3536, %v3535
    %v3547 = vpack.c.b16 %v3538, %v3537
    %v3548 = vpack.c.b16 %v3540, %v3539
    %3557 = vmatprep.subr.bf16.mxu0 0
    %3558 = vmatpush1.bf16.msra.mxu0 %v3541
    %3559 = vmatprep.subr.bf16.mxu0 0
    %3560 = vmatpush1.bf16.msra.mxu0 %v3542
    %3561 = vmatprep.subr.bf16.mxu0 0
    %3562 = vmatpush1.bf16.msra.mxu0 %v3543
    %3563 = vmatprep.subr.bf16.mxu0 0
    %3564 = vmatpush1.bf16.msra.mxu0 %v3544
    %3565 = vmatprep.subr.bf16.mxu0 0
    %3566 = vmatpush1.bf16.msra.mxu0 %v3545
    %3567 = vmatprep.subr.bf16.mxu0 0
    %3568 = vmatpush1.bf16.msra.mxu0 %v3546
    %3569 = vmatprep.subr.bf16.mxu0 0
    %3570 = vmatpush1.bf16.msra.mxu0 %v3547
    %3571 = vmatprep.subr.bf16.mxu0 0
    %3572 = vmatpush1.bf16.msra.mxu0 %v3548
    %3573 = vmatprep.subr.bf16.mxu0 0
    %3574 = vmatpush1.bf16.msra.mxu0 0
    %3575 = vmatprep.subr.bf16.mxu0 0
    %3576 = vmatpush1.bf16.msra.mxu0 0
    %3577 = vmatprep.subr.bf16.mxu0 0
    %3578 = vmatpush1.bf16.msra.mxu0 0
    %3579 = vmatprep.subr.bf16.mxu0 0
    %3580 = vmatpush1.bf16.msra.mxu0 0
    %3581 = vmatprep.subr.bf16.mxu0 0
    %3582 = vmatpush1.bf16.msra.mxu0 0
    %3583 = vmatprep.subr.bf16.mxu0 0
    %3584 = vmatpush1.bf16.msra.mxu0 0
    %3585 = vmatprep.subr.bf16.mxu0 0
    %3586 = vmatpush1.bf16.msra.mxu0 0
    %3587 = vmatprep.subr.bf16.mxu0 0
    %3588 = vmatpush1.bf16.msra.mxu0 0
    %3589 = vmatprep.mubr.bf16.mxu0 0
    %3590 = vmatmul.mubr.bf16.gmra.mrb[0].mxu0 %v3492
    %v3591 = vpop.f32.mrb[0].mxu0
    %v3592 = vadd.f32 0.0, %v3591
    %v3593 = vpop.f32.mrb[0].mxu0
    %v3594 = vpop.f32.mrb[0].mxu0
    %v3595 = vpop.f32.mrb[0].mxu0
    %3596 = vdwg.mxu0
    %v3613 = vunpack.c.l.b16 %v3476
    %v3614 = vunpack.c.l.b16 %v3477
    %v3615 = vunpack.c.l.b16 %v3478
    %v3616 = vunpack.c.l.b16 %v3479
    %v3617 = vunpack.c.l.b16 %v3480
    %v3618 = vunpack.c.l.b16 %v3481
    %v3619 = vunpack.c.l.b16 %v3482
    %v3620 = vunpack.c.l.b16 %v3483
    %v3621 = vunpack.c.l.b16 %v3484
    %v3622 = vunpack.c.l.b16 %v3485
    %v3623 = vunpack.c.l.b16 %v3486
    %v3624 = vunpack.c.l.b16 %v3487
    %v3625 = vunpack.c.l.b16 %v3488
    %v3626 = vunpack.c.l.b16 %v3489
    %v3627 = vunpack.c.l.b16 %v3490
    %v3628 = vunpack.c.l.b16 %v3491
    %v3629 = vpack.c.b16 %v3614, %v3613
    %v3630 = vpack.c.b16 %v3616, %v3615
    %v3631 = vpack.c.b16 %v3618, %v3617
    %v3632 = vpack.c.b16 %v3620, %v3619
    %v3633 = vpack.c.b16 %v3622, %v3621
    %v3634 = vpack.c.b16 %v3624, %v3623
    %v3635 = vpack.c.b16 %v3626, %v3625
    %v3636 = vpack.c.b16 %v3628, %v3627
    %3645 = vmatprep.subr.bf16.mxu0 0
    %3646 = vmatpush1.bf16.msra.mxu0 %v3629
    %3647 = vmatprep.subr.bf16.mxu0 0
    %3648 = vmatpush1.bf16.msra.mxu0 %v3630
    %3649 = vmatprep.subr.bf16.mxu0 0
    %3650 = vmatpush1.bf16.msra.mxu0 %v3631
    %3651 = vmatprep.subr.bf16.mxu0 0
    %3652 = vmatpush1.bf16.msra.mxu0 %v3632
    %3653 = vmatprep.subr.bf16.mxu0 0
    %3654 = vmatpush1.bf16.msra.mxu0 %v3633
    %3655 = vmatprep.subr.bf16.mxu0 0
    %3656 = vmatpush1.bf16.msra.mxu0 %v3634
    %3657 = vmatprep.subr.bf16.mxu0 0
    %3658 = vmatpush1.bf16.msra.mxu0 %v3635
    %3659 = vmatprep.subr.bf16.mxu0 0
    %3660 = vmatpush1.bf16.msra.mxu0 %v3636
    %3661 = vmatprep.subr.bf16.mxu0 0
    %3662 = vmatpush1.bf16.msra.mxu0 0
    %3663 = vmatprep.subr.bf16.mxu0 0
    %3664 = vmatpush1.bf16.msra.mxu0 0
    %3665 = vmatprep.subr.bf16.mxu0 0
    %3666 = vmatpush1.bf16.msra.mxu0 0
    %3667 = vmatprep.subr.bf16.mxu0 0
    %3668 = vmatpush1.bf16.msra.mxu0 0
    %3669 = vmatprep.subr.bf16.mxu0 0
    %3670 = vmatpush1.bf16.msra.mxu0 0
    %3671 = vmatprep.subr.bf16.mxu0 0
    %3672 = vmatpush1.bf16.msra.mxu0 0
    %3673 = vmatprep.subr.bf16.mxu0 0
    %3674 = vmatpush1.bf16.msra.mxu0 0
    %3675 = vmatprep.subr.bf16.mxu0 0
    %3676 = vmatpush1.bf16.msra.mxu0 0
    %3677 = vmatprep.mubr.bf16.mxu0 0
    %3678 = vmatmul.mubr.bf16.gmra.mrb[0].mxu0 %v3475
    %v3679 = vpop.f32.mrb[0].mxu0
    %v3680 = vadd.f32 %v3592, %v3679
    %v3681 = vpop.f32.mrb[0].mxu0
    %v3682 = vpop.f32.mrb[0].mxu0
    %v3683 = vpop.f32.mrb[0].mxu0
    %3684 = vdwg.mxu0
    %v3685 = vld [vmem:[#allocation5 + $0x25] sm:$0x1]
    %v3687 = vlaneseq
    %v3688 = vshrl.u32 %v3687, 7
    %v3689 = vsub.s32 0, %v3688
    %v3690 = vrot.slane %v3685, %v3689
    %v3692 = vadd.f32 %v3680, %v3690
    %v3693 = vxor.u32 %v3692, 2147483648
    %v3694 = vmul.f32 %v3693, 1.442695
    %v3695 = vpow.pop %v3694
    %v3696 = vadd.f32 %v3695, 1.0
    %v3697 = vrcp.pop %v3696
    %v3698 = vmul.f32 1.0, %v3697
    %v3699 = vmul.f32 %v3692, %v3698
    %v3700 = vpack.c.bf16 %v3699, %v3699
    %v3701 = vld [vmem:[#allocation2 + $0x9c] sm:$0xf]
    %v3702 = vld [vmem:[#allocation2 + $0x13c] sm:$0xf]
    %v3703 = vld [vmem:[#allocation2 + $0x1dc] sm:$0xf]
    %v3704 = vld [vmem:[#allocation2 + $0x27c] sm:$0xf]
    %v3705 = vld [vmem:[#allocation2 + $0x31c] sm:$0xf]
    %v3706 = vld [vmem:[#allocation2 + $0x3bc] sm:$0xf]
    %v3707 = vld [vmem:[#allocation2 + $0x45c] sm:$0xf]
    %v3708 = vld [vmem:[#allocation2 + $0x4fc] sm:$0xf]
    %v3709 = vld [vmem:[#allocation2 + $0x59c] sm:$0xf]
    %v3710 = vld [vmem:[#allocation2 + $0x63c] sm:$0xf]
    %v3711 = vld [vmem:[#allocation2 + $0x6dc] sm:$0xf]
    %v3712 = vld [vmem:[#allocation2 + $0x77c] sm:$0xf]
    %v3713 = vld [vmem:[#allocation2 + $0x81c] sm:$0xf]
    %v3714 = vld [vmem:[#allocation2 + $0x8bc] sm:$0xf]
    %v3715 = vld [vmem:[#allocation2 + $0x95c] sm:$0xf]
    %v3716 = vld [vmem:[#allocation2 + $0x9fc] sm:$0xf]
    %v3717 = vld [vmem:[#allocation5 + $0x27] sm:$0x1]
    %v3719 = vlaneseq
    %v3720 = vshrl.u32 %v3719, 7
    %v3721 = vsub.s32 0, %v3720
    %v3722 = vrot.slane %v3717, %v3721
    %v3740 = vunpack.c.l.b16 %v3701
    %v3741 = vunpack.c.l.b16 %v3702
    %v3742 = vunpack.c.l.b16 %v3703
    %v3743 = vunpack.c.l.b16 %v3704
    %v3744 = vunpack.c.l.b16 %v3705
    %v3745 = vunpack.c.l.b16 %v3706
    %v3746 = vunpack.c.l.b16 %v3707
    %v3747 = vunpack.c.l.b16 %v3708
    %v3748 = vunpack.c.l.b16 %v3709
    %v3749 = vunpack.c.l.b16 %v3710
    %v3750 = vunpack.c.l.b16 %v3711
    %v3751 = vunpack.c.l.b16 %v3712
    %v3752 = vunpack.c.l.b16 %v3713
    %v3753 = vunpack.c.l.b16 %v3714
    %v3754 = vunpack.c.l.b16 %v3715
    %v3755 = vunpack.c.l.b16 %v3716
    %v3756 = vpack.c.b16 %v3741, %v3740
    %v3757 = vpack.c.b16 %v3743, %v3742
    %v3758 = vpack.c.b16 %v3745, %v3744
    %v3759 = vpack.c.b16 %v3747, %v3746
    %v3760 = vpack.c.b16 %v3749, %v3748
    %v3761 = vpack.c.b16 %v3751, %v3750
    %v3762 = vpack.c.b16 %v3753, %v3752
    %v3763 = vpack.c.b16 %v3755, %v3754
    %3772 = vmatprep.subr.bf16.mxu0 0
    %3773 = vmatpush1.bf16.msra.mxu0 %v3756
    %3774 = vmatprep.subr.bf16.mxu0 0
    %3775 = vmatpush1.bf16.msra.mxu0 %v3757
    %3776 = vmatprep.subr.bf16.mxu0 0
    %3777 = vmatpush1.bf16.msra.mxu0 %v3758
    %3778 = vmatprep.subr.bf16.mxu0 0
    %3779 = vmatpush1.bf16.msra.mxu0 %v3759
    %3780 = vmatprep.subr.bf16.mxu0 0
    %3781 = vmatpush1.bf16.msra.mxu0 %v3760
    %3782 = vmatprep.subr.bf16.mxu0 0
    %3783 = vmatpush1.bf16.msra.mxu0 %v3761
    %3784 = vmatprep.subr.bf16.mxu0 0
    %3785 = vmatpush1.bf16.msra.mxu0 %v3762
    %3786 = vmatprep.subr.bf16.mxu0 0
    %3787 = vmatpush1.bf16.msra.mxu0 %v3763
    %3788 = vmatprep.subr.bf16.mxu0 0
    %3789 = vmatpush1.bf16.msra.mxu0 0
    %3790 = vmatprep.subr.bf16.mxu0 0
    %3791 = vmatpush1.bf16.msra.mxu0 0
    %3792 = vmatprep.subr.bf16.mxu0 0
    %3793 = vmatpush1.bf16.msra.mxu0 0
    %3794 = vmatprep.subr.bf16.mxu0 0
    %3795 = vmatpush1.bf16.msra.mxu0 0
    %3796 = vmatprep.subr.bf16.mxu0 0
    %3797 = vmatpush1.bf16.msra.mxu0 0
    %3798 = vmatprep.subr.bf16.mxu0 0
    %3799 = vmatpush1.bf16.msra.mxu0 0
    %3800 = vmatprep.subr.bf16.mxu0 0
    %3801 = vmatpush1.bf16.msra.mxu0 0
    %3802 = vmatprep.subr.bf16.mxu0 0
    %3803 = vmatpush1.bf16.msra.mxu0 0
    %3804 = vmatprep.mubr.bf16.mxu0 0
    %3805 = vmatmul.mubr.bf16.gmra.mrb[0].mxu0 %v3700
    %v3806 = vpop.f32.mrb[0].mxu0
    %v3807 = vadd.f32 %v3722, %v3806
    %v3808 = vpop.f32.mrb[0].mxu0
    %v3809 = vpop.f32.mrb[0].mxu0
    %v3810 = vpop.f32.mrb[0].mxu0
    %3811 = vdwg.mxu0
    %3812 = vst [vmem:[#allocation7] sm:$0xff] %v3807
    // Predicated region
    $region22: #{forward.1} parent=1 // pred_check
      _
    $region23: #{forward.1} parent=1 // pred_check_branch
      %3814 = sbr.rel (0) target = $region25
    $region24: #{forward.1} parent=1 // pred_region
      %s3816 = ssub.s32 128, 128
      %3817 = vsyncadd [#allocation4], %s3816
      %s3819 = sshll.u32 [#allocation7], 4
      %s3820 = int_to_ptr.vmem [resolvable:$true] %s3819
      %3822 = dma.vmem_to_hbm [thread:$0]  %s3820, 128, %s3, [#allocation4]
    $region25: #{forward.1} parent=1 // pred_fallthru
      _
    // Predicated region
    $region26: #{forward.1} parent=1 // pred_check
      _
    $region27: #{forward.1} parent=1 // pred_check_branch
      %3824 = sbr.rel (0) target = $region29
    $region28: #{forward.1} parent=1 // pred_region
      %3825 = dma.done [#allocation4], 128
    $region29: #{forward.1} parent=1 // pred_fallthru
      _
    %3826 = vsyncpa [#allocation3], 1
    %3827 = vsyncpa [#allocation6], 1
    %3828 = vsyncpa [#allocation4], 1

</llo_original>
